<compile_context>
chip_gen: v6e
topology: v6e:2x2x1
jax: 0.10.0
libtpu: 0.0.40
codegen_flags: <defaults>
</compile_context>

<pallas_src>
import functools

import jax
import jax.numpy as jnp
from jax.experimental import pallas as pl
from jax.experimental.pallas import tpu as pltpu

DECODE_CH = 32      # decode_channels
NUM_CLASSES = 8     # num_classes
BN_EPS = 1e-5

# bf16 MXU operands on all generations; accumulation stays f32.
MATMUL_DTYPE = jnp.bfloat16

# Batch elements per grid step.  1 keeps grid=(N,) so v7x megacore gets one
# element per TensorCore even at tiny N; on single-TC v5e/v6e with larger N
# raise to 2-4 to amortize the ~0.35us per-grid-step pipeline overhead.
BATCH_BLOCK = 1


def _mxdot(a, b):
    return jnp.dot(a.astype(MATMUL_DTYPE), b.astype(MATMUL_DTYPE),
                   preferred_element_type=jnp.float32)


# --------------------------- Pallas kernel ----------------------------------

def _dfa_decoder_kernel(x0_ref, x1_ref, x2_ref, x3_ref, x45_ref,
                        w012_ref, sc012_ref, sh012_ref,
                        w35_ref, sc35_ref, sh35_ref,
                        m1t_ref, m2t_ref, m3t_ref, m45t_ref,
                        wadd_ref, scadd_ref, shadd_ref,
                        wcls_ref, mask_ref, k4t_ref,
                        out_ref, *, H, W):
    """BATCH_BLOCK batch elements per grid step; channels-first (C, H*W)."""
    P = H * W

    # constants loaded once per grid step
    masks = mask_ref[...]                      # (9, P) f32
    m1t, m2t, m3t = m1t_ref[...], m2t_ref[...], m3t_ref[...]
    m45t = m45t_ref[...]
    wadd, wcls, k4t = wadd_ref[...], wcls_ref[...], k4t_ref[...]
    scadd, shadd = scadd_ref[...], shadd_ref[...]

    def conv1x1(x, w, sc, sh):
        # (Cout, Cin) @ (Cin, Pk) -> per-channel BN affine -> ReLU (all f32)
        y = _mxdot(w, x)
        return jnp.maximum(y * sc + sh, 0.0)

    def conv3x3(s, w_packed, cout_unused=None):
        # 3x3 / pad=1 conv as ONE matmul: concatenate the 9 shifted+masked tap
        # copies along the contraction axis -> (9*Cin, P), weights (Cout, 9*Cin).
        pieces = []
        for k in range(9):
            oy, ox = k // 3 - 1, k % 3 - 1
            d = oy * W + ox                    # flat spatial offset
            if d == 0:
                pieces.append(s)               # center tap: always valid
            else:
                # out[:, p] uses s[:, p + d]; boundary mask kills the wrap.
                pieces.append(pltpu.roll(s, shift=(-d) % P, axis=1)
                              * masks[k:k + 1, :])
        s9 = jnp.concatenate(pieces, axis=0)   # (9*Cin, P)
        return _mxdot(w_packed, s9)            # (Cout, P) f32

    for b in range(x0_ref.shape[0]):           # BATCH_BLOCK, unrolled
        # ---- shallow branches (48 -> 32), resized to x0 resolution ----
        y0 = conv1x1(x0_ref[b], w012_ref[0], sc012_ref[0], sh012_ref[0])
        y1 = _mxdot(conv1x1(x1_ref[b], w012_ref[1], sc012_ref[1], sh012_ref[1]),
                    m1t)
        y2 = _mxdot(conv1x1(x2_ref[b], w012_ref[2], sc012_ref[2], sh012_ref[2]),
                    m2t)

        # conv_add1: 3x3 conv (bias folded into shift) + BN + ReLU
        x_shallow = conv3x3(y0 + y1 + y2, wadd)
        x_shallow = jnp.maximum(x_shallow * scadd + shadd, 0.0)

        # ---- deep branches (192 -> 32) ----
        y3 = _mxdot(conv1x1(x3_ref[b], w35_ref[0], sc35_ref[0], sh35_ref[0]),
                    m3t)
        # x4|x5 concatenated along lanes share conv5 (one matmul); the stacked
        # interp matrix [m4t; m4t] upsamples AND sums both branches at once.
        t45 = conv1x1(x45_ref[b], w35_ref[1], sc35_ref[1], sh35_ref[1])
        y45 = _mxdot(t45, m45t)

        # conv_cls: 3x3 conv, no bias / BN / ReLU -> (NC, P)
        logits = conv3x3(x_shallow + y3 + y45, wcls)

        # fused final 4x bilinear upsample: one lane-dense (NC, 16*P) matmul
        out_ref[b] = _mxdot(logits, k4t).astype(out_ref.dtype)


# --------------------------- JAX glue helpers --------------------------------

def interp_matrix(out_size, in_size):
    """1-D bilinear interpolation matrix, align_corners=True (as in the spec)."""
    if in_size == 1:
        return jnp.ones((out_size, 1), jnp.float32)
    o = jnp.arange(out_size, dtype=jnp.float32)
    src = o * (in_size - 1) / max(out_size - 1, 1)
    i0 = jnp.clip(jnp.floor(src).astype(jnp.int32), 0, in_size - 2)
    w1 = src - i0.astype(jnp.float32)
    w0 = 1.0 - w1
    rows = jnp.arange(out_size)
    A = jnp.zeros((out_size, in_size), jnp.float32)
    A = A.at[rows, i0].add(w0)
    A = A.at[rows, i0 + 1].add(w1)
    return A


def shift_masks(H, W):
    """(9, H*W) validity masks for the 3x3 pad=1 taps in flattened h*W+w order."""
    p = jnp.arange(H * W)
    h, w = p // W, p % W
    rows = []
    for ky in range(3):
        for kx in range(3):
            oy, ox = ky - 1, kx - 1
            ok = (h + oy >= 0) & (h + oy < H) & (w + ox >= 0) & (w + ox < W)
            rows.append(ok.astype(jnp.float32))
    return jnp.stack(rows)


# --------------------------- parameters --------------------------------------

def init_params(key):
    keys = iter(jax.random.split(key, 64))
    D, NC = DECODE_CH, NUM_CLASSES

    def bn_fold(c, bias=None):
        gamma = 1.0 + 0.1 * jax.random.normal(next(keys), (c,), jnp.float32)
        beta = 0.1 * jax.random.normal(next(keys), (c,), jnp.float32)
        mean = 0.1 * jax.random.normal(next(keys), (c,), jnp.float32)
        var = jax.random.uniform(next(keys), (c,), jnp.float32,
                                 minval=0.5, maxval=1.5)
        scale = gamma / jnp.sqrt(var + BN_EPS)
        b = jnp.zeros((c,), jnp.float32) if bias is None else bias
        shift = (b - mean) * scale + beta
        # channels-first: per-channel column vectors broadcasting over lanes
        return scale.reshape(c, 1), shift.reshape(c, 1)

    def conv1x1_block(cin):
        w = 0.1 * jax.random.normal(next(keys), (D, cin, 1, 1), jnp.float32)
        scale, shift = bn_fold(D)
        return w[:, :, 0, 0], scale, shift

    def pack3x3(w, cout):
        # PyTorch (Cout, Cin, 3, 3) -> (Cout, 9*Cin), tap-major columns
        # matching the in-kernel concat order k = ky*3 + kx.
        w9 = jnp.transpose(w, (2, 3, 0, 1)).reshape(9, cout, w.shape[1])
        return jnp.transpose(w9, (1, 0, 2)).reshape(cout, 9 * w.shape[1])

    c0, c1, c2 = conv1x1_block(48), conv1x1_block(48), conv1x1_block(48)
    c3 = conv1x1_block(192)
    _c4 = conv1x1_block(192)   # created in __init__ but unused in forward (as in PyTorch)
    c5 = conv1x1_block(192)

    # conv_add1: 3x3, D->D, bias=True, + BN + ReLU
    w = 0.1 * jax.random.normal(next(keys), (D, D, 3, 3), jnp.float32)
    bias = 0.1 * jax.random.normal(next(keys), (D,), jnp.float32)
    scadd, shadd = bn_fold(D, bias)
    wadd = pack3x3(w, D)

    # conv_cls: 3x3, D->NC, bias=False, no BN / ReLU
    w = 0.1 * jax.random.normal(next(keys), (NC, D, 3, 3), jnp.float32)
    wcls = pack3x3(w, NC)

    return {
        "w012": jnp.stack([c0[0], c1[0], c2[0]]),
        "sc012": jnp.stack([c0[1], c1[1], c2[1]]),
        "sh012": jnp.stack([c0[2], c1[2], c2[2]]),
        "w35": jnp.stack([c3[0], c5[0]]),
        "sc35": jnp.stack([c3[1], c5[1]]),
        "sh35": jnp.stack([c3[2], c5[2]]),
        "wadd": wadd, "scadd": scadd, "shadd": shadd,
        "wcls": wcls,
    }


# --------------------------- forward ------------------------------------------

def dfa_decoder_forward(params, x0, x1, x2, x3, x4, x5):
    N, _, H0, W0 = x0.shape
    NC = NUM_CLASSES
    P0 = H0 * W0
    cdt = MATMUL_DTYPE

    def flat(x):
        n, c, h, w = x.shape
        return x.reshape(n, c, h * w), h, w

    x0r, _, _ = flat(x0)
    x1r, H1, W1 = flat(x1)
    x2r, H2, W2 = flat(x2)
    x3r, H3, W3 = flat(x3)
    x4r, H4, W4 = flat(x4)
    x5r, H5, W5 = flat(x5)
    assert (H4, W4) == (H5, W5)        # x4/x5 share conv5 and the interp matrix
    # x4|x5 concatenated along the lane axis -> one shared-conv5 matmul in-kernel
    x45r = jnp.concatenate([x4r, x5r], axis=-1)

    def up_t(hk, wk):
        # transposed (P_in, P0) interp matrix: right-multiply in channels-first
        return jnp.kron(interp_matrix(H0, hk), interp_matrix(W0, wk)).T.astype(cdt)

    m1t, m2t, m3t = up_t(H1, W1), up_t(H2, W2), up_t(H3, W3)
    m4t = up_t(H4, W4)
    m45t = jnp.concatenate([m4t, m4t], axis=0)     # upsample + sum x4/x5 branches
    masks = shift_masks(H0, W0)                    # (9, P0) f32, VPU mask mults
    # final 4x bilinear upsample folded into the same kernel as one lane-dense
    # (P0, 16*P0) matmul (4 MiB-class only at tiny test resolution; see TODO).
    k4t = jnp.kron(interp_matrix(4 * H0, H0),
                   interp_matrix(4 * W0, W0)).T.astype(cdt)

    # constants pre-cast to the MXU dtype once (no per-step VPU casts in-kernel)
    consts = (params["w012"].astype(cdt), params["sc012"], params["sh012"],
              params["w35"].astype(cdt), params["sc35"], params["sh35"],
              m1t, m2t, m3t, m45t,
              params["wadd"].astype(cdt), params["scadd"], params["shadd"],
              params["wcls"].astype(cdt), masks, k4t)

    xs = (x0r, x1r, x2r, x3r, x45r)

    BB = BATCH_BLOCK
    assert N % BB == 0, "batch must be divisible by BATCH_BLOCK"

    def batch_spec(a):
        return pl.BlockSpec((BB,) + tuple(a.shape[1:]), lambda n: (n, 0, 0))

    def const_spec(a):
        # constant index_map -> single-buffer (no point double-buffering)
        return pl.BlockSpec(tuple(a.shape), lambda n, nd=a.ndim: (0,) * nd,
                            pipeline_mode=pl.Buffered(1))

    kern = functools.partial(_dfa_decoder_kernel, H=H0, W=W0)
    out = pl.pallas_call(
        kern,
        out_shape=jax.ShapeDtypeStruct((N, NC, 16 * P0), jnp.float32),
        grid=(N // BB,),
        in_specs=[batch_spec(a) for a in xs] + [const_spec(a) for a in consts],
        out_specs=pl.BlockSpec((BB, NC, 16 * P0), lambda n: (n, 0, 0)),
        compiler_params=pltpu.CompilerParams(dimension_semantics=("parallel",)),
    )(*xs, *consts)

    # lane-flat (N, NC, 16*P0) -> NCHW; contiguous reshape, free.
    return out.reshape(N, NC, 4 * H0, 4 * W0)


# --------------------------- main ---------------------------------------------

if __name__ == "__main__":
    key = jax.random.PRNGKey(0)
    pkey, k0, k1, k2, k3, k4, k5 = jax.random.split(key, 7)
    params = init_params(pkey)

    N = 2
    x0 = jax.random.normal(k0, (N, 48, 16, 16), jnp.float32)
    x1 = jax.random.normal(k1, (N, 48, 8, 8), jnp.float32)
    x2 = jax.random.normal(k2, (N, 48, 4, 4), jnp.float32)
    x3 = jax.random.normal(k3, (N, 192, 4, 4), jnp.float32)
    x4 = jax.random.normal(k4, (N, 192, 2, 2), jnp.float32)
    x5 = jax.random.normal(k5, (N, 192, 2, 2), jnp.float32)

    out = jax.jit(dfa_decoder_forward)(params, x0, x1, x2, x3, x4, x5)
    out = jax.block_until_ready(out)

    assert out.shape == (N, NUM_CLASSES, 64, 64), out.shape
    assert bool(jnp.all(jnp.isfinite(out)))
    print("KERNEL_OK")
</pallas_src>

<mosaic_0001>
module attributes {stable_mosaic.version = 11 : i64} {
  func.func private @main(%arg0: i32) attributes {dimension_semantics = [#tpu.dimension_semantics<core_parallel>], iteration_bounds = array<i64: 2>, tpu.core_type = #tpu.core_type<sc_scalar_subcore>, window_params = []} {
    return
  }
}

module attributes {stable_mosaic.version = 11 : i64} {
  func.func private @main(%arg0: i32) attributes {dimension_semantics = [#tpu.dimension_semantics<core_parallel>], iteration_bounds = array<i64: 2>, tpu.core_type = #tpu.core_type<sc_scalar_subcore>, window_params = []} {
    return
  }
}

module attributes {stable_mosaic.version = 11 : i64} {
  func.func @_dfa_decoder_kernel(%arg0: i32, %arg1: memref<1x48x256xf32, #tpu.memory_space<vmem>>, %arg2: memref<1x48x64xf32, #tpu.memory_space<vmem>>, %arg3: memref<1x48x16xf32, #tpu.memory_space<vmem>>, %arg4: memref<1x192x16xf32, #tpu.memory_space<vmem>>, %arg5: memref<1x192x8xf32, #tpu.memory_space<vmem>>, %arg6: memref<3x32x48xbf16, #tpu.memory_space<vmem>>, %arg7: memref<3x32x1xf32, #tpu.memory_space<vmem>>, %arg8: memref<3x32x1xf32, #tpu.memory_space<vmem>>, %arg9: memref<2x32x192xbf16, #tpu.memory_space<vmem>>, %arg10: memref<2x32x1xf32, #tpu.memory_space<vmem>>, %arg11: memref<2x32x1xf32, #tpu.memory_space<vmem>>, %arg12: memref<64x256xbf16, #tpu.memory_space<vmem>>, %arg13: memref<16x256xbf16, #tpu.memory_space<vmem>>, %arg14: memref<16x256xbf16, #tpu.memory_space<vmem>>, %arg15: memref<8x256xbf16, #tpu.memory_space<vmem>>, %arg16: memref<32x288xbf16, #tpu.memory_space<vmem>>, %arg17: memref<32x1xf32, #tpu.memory_space<vmem>>, %arg18: memref<32x1xf32, #tpu.memory_space<vmem>>, %arg19: memref<8x288xbf16, #tpu.memory_space<vmem>>, %arg20: memref<9x256xf32, #tpu.memory_space<vmem>>, %arg21: memref<256x4096xbf16, #tpu.memory_space<vmem>>, %arg22: memref<1x8x4096xf32, #tpu.memory_space<vmem>>) attributes {dimension_semantics = [#tpu.dimension_semantics<parallel>], iteration_bounds = array<i64: 2>, scalar_prefetch = 0 : i64, scratch_operands = 0 : i64, tpu.core_type = #tpu.core_type<tc>, window_params = [{transform_indices = @transform_0, window_bounds = array<i64: 1, 48, 256>}, {transform_indices = @transform_1, window_bounds = array<i64: 1, 48, 64>}, {transform_indices = @transform_2, window_bounds = array<i64: 1, 48, 16>}, {transform_indices = @transform_3, window_bounds = array<i64: 1, 192, 16>}, {transform_indices = @transform_4, window_bounds = array<i64: 1, 192, 8>}, {pipeline_mode = #tpu.pipeline_mode<synchronous>, transform_indices = @transform_5, window_bounds = array<i64: 3, 32, 48>}, {pipeline_mode = #tpu.pipeline_mode<synchronous>, transform_indices = @transform_6, window_bounds = array<i64: 3, 32, 1>}, {pipeline_mode = #tpu.pipeline_mode<synchronous>, transform_indices = @transform_7, window_bounds = array<i64: 3, 32, 1>}, {pipeline_mode = #tpu.pipeline_mode<synchronous>, transform_indices = @transform_8, window_bounds = array<i64: 2, 32, 192>}, {pipeline_mode = #tpu.pipeline_mode<synchronous>, transform_indices = @transform_9, window_bounds = array<i64: 2, 32, 1>}, {pipeline_mode = #tpu.pipeline_mode<synchronous>, transform_indices = @transform_10, window_bounds = array<i64: 2, 32, 1>}, {pipeline_mode = #tpu.pipeline_mode<synchronous>, transform_indices = @transform_11, window_bounds = array<i64: 64, 256>}, {pipeline_mode = #tpu.pipeline_mode<synchronous>, transform_indices = @transform_12, window_bounds = array<i64: 16, 256>}, {pipeline_mode = #tpu.pipeline_mode<synchronous>, transform_indices = @transform_13, window_bounds = array<i64: 16, 256>}, {pipeline_mode = #tpu.pipeline_mode<synchronous>, transform_indices = @transform_14, window_bounds = array<i64: 8, 256>}, {pipeline_mode = #tpu.pipeline_mode<synchronous>, transform_indices = @transform_15, window_bounds = array<i64: 32, 288>}, {pipeline_mode = #tpu.pipeline_mode<synchronous>, transform_indices = @transform_16, window_bounds = array<i64: 32, 1>}, {pipeline_mode = #tpu.pipeline_mode<synchronous>, transform_indices = @transform_17, window_bounds = array<i64: 32, 1>}, {pipeline_mode = #tpu.pipeline_mode<synchronous>, transform_indices = @transform_18, window_bounds = array<i64: 8, 288>}, {pipeline_mode = #tpu.pipeline_mode<synchronous>, transform_indices = @transform_19, window_bounds = array<i64: 9, 256>}, {pipeline_mode = #tpu.pipeline_mode<synchronous>, transform_indices = @transform_20, window_bounds = array<i64: 256, 4096>}, {transform_indices = @transform_21, window_bounds = array<i64: 1, 8, 4096>}]} {
    %c0 = arith.constant 0 : index
    %c0_0 = arith.constant 0 : index
    %0 = vector.load %arg20[%c0, %c0_0] : memref<9x256xf32, #tpu.memory_space<vmem>>, vector<9x256xf32>
    %c0_1 = arith.constant 0 : index
    %c0_2 = arith.constant 0 : index
    %1 = vector.load %arg12[%c0_1, %c0_2] : memref<64x256xbf16, #tpu.memory_space<vmem>>, vector<64x256xbf16>
    %c0_3 = arith.constant 0 : index
    %c0_4 = arith.constant 0 : index
    %2 = vector.load %arg13[%c0_3, %c0_4] : memref<16x256xbf16, #tpu.memory_space<vmem>>, vector<16x256xbf16>
    %c0_5 = arith.constant 0 : index
    %c0_6 = arith.constant 0 : index
    %3 = vector.load %arg14[%c0_5, %c0_6] : memref<16x256xbf16, #tpu.memory_space<vmem>>, vector<16x256xbf16>
    %c0_7 = arith.constant 0 : index
    %c0_8 = arith.constant 0 : index
    %4 = vector.load %arg15[%c0_7, %c0_8] : memref<8x256xbf16, #tpu.memory_space<vmem>>, vector<8x256xbf16>
    %c0_9 = arith.constant 0 : index
    %c0_10 = arith.constant 0 : index
    %5 = vector.load %arg16[%c0_9, %c0_10] : memref<32x288xbf16, #tpu.memory_space<vmem>>, vector<32x288xbf16>
    %c0_11 = arith.constant 0 : index
    %c0_12 = arith.constant 0 : index
    %6 = vector.load %arg19[%c0_11, %c0_12] : memref<8x288xbf16, #tpu.memory_space<vmem>>, vector<8x288xbf16>
    %c0_13 = arith.constant 0 : index
    %c0_14 = arith.constant 0 : index
    %7 = vector.load %arg21[%c0_13, %c0_14] : memref<256x4096xbf16, #tpu.memory_space<vmem>>, vector<256x4096xbf16>
    %c0_15 = arith.constant 0 : index
    %c0_16 = arith.constant 0 : index
    %8 = vector.load %arg17[%c0_15, %c0_16] : memref<32x1xf32, #tpu.memory_space<vmem>>, vector<32x1xf32>
    %c0_17 = arith.constant 0 : index
    %c0_18 = arith.constant 0 : index
    %9 = vector.load %arg18[%c0_17, %c0_18] : memref<32x1xf32, #tpu.memory_space<vmem>>, vector<32x1xf32>
    %c0_19 = arith.constant 0 : index
    %c0_20 = arith.constant 0 : index
    %c0_21 = arith.constant 0 : index
    %10 = vector.load %arg1[%c0_19, %c0_20, %c0_21] : memref<1x48x256xf32, #tpu.memory_space<vmem>>, vector<1x48x256xf32>
    %11 = vector.shape_cast %10 : vector<1x48x256xf32> to vector<48x256xf32>
    %c0_22 = arith.constant 0 : index
    %c0_23 = arith.constant 0 : index
    %c0_24 = arith.constant 0 : index
    %12 = vector.load %arg6[%c0_22, %c0_23, %c0_24] : memref<3x32x48xbf16, #tpu.memory_space<vmem>>, vector<1x32x48xbf16>
    %13 = vector.shape_cast %12 : vector<1x32x48xbf16> to vector<32x48xbf16>
    %c0_25 = arith.constant 0 : index
    %c0_26 = arith.constant 0 : index
    %c0_27 = arith.constant 0 : index
    %14 = vector.load %arg7[%c0_25, %c0_26, %c0_27] : memref<3x32x1xf32, #tpu.memory_space<vmem>>, vector<1x32x1xf32>
    %15 = vector.shape_cast %14 : vector<1x32x1xf32> to vector<32x1xf32>
    %c0_28 = arith.constant 0 : index
    %c0_29 = arith.constant 0 : index
    %c0_30 = arith.constant 0 : index
    %16 = vector.load %arg8[%c0_28, %c0_29, %c0_30] : memref<3x32x1xf32, #tpu.memory_space<vmem>>, vector<1x32x1xf32>
    %17 = vector.shape_cast %16 : vector<1x32x1xf32> to vector<32x1xf32>
    %18 = arith.truncf %11 : vector<48x256xf32> to vector<48x256xbf16>
    %cst = arith.constant dense<0.000000e+00> : vector<32x256xf32>
    %19 = tpu.matmul %13, %18, %cst {dimension_numbers = #tpu.dot_dimension_numbers<[1], [0], [0], [1], [0, 0, 1, 1], [], []>} : vector<32x48xbf16>, vector<48x256xbf16>, vector<32x256xf32> -> vector<32x256xf32>
    %20 = vector.broadcast %15 : vector<32x1xf32> to vector<32x256xf32>
    %21 = arith.mulf %19, %20 : vector<32x256xf32>
    %22 = vector.broadcast %17 : vector<32x1xf32> to vector<32x256xf32>
    %23 = arith.addf %21, %22 : vector<32x256xf32>
    %cst_31 = arith.constant 0.000000e+00 : f32
    %24 = vector.broadcast %cst_31 : f32 to vector<32x256xf32>
    %25 = arith.maximumf %23, %24 : vector<32x256xf32>
    %c0_32 = arith.constant 0 : index
    %c0_33 = arith.constant 0 : index
    %c0_34 = arith.constant 0 : index
    %26 = vector.load %arg2[%c0_32, %c0_33, %c0_34] : memref<1x48x64xf32, #tpu.memory_space<vmem>>, vector<1x48x64xf32>
    %27 = vector.shape_cast %26 : vector<1x48x64xf32> to vector<48x64xf32>
    %c1 = arith.constant 1 : index
    %c0_35 = arith.constant 0 : index
    %c0_36 = arith.constant 0 : index
    %28 = vector.load %arg6[%c1, %c0_35, %c0_36] : memref<3x32x48xbf16, #tpu.memory_space<vmem>>, vector<1x32x48xbf16>
    %29 = vector.shape_cast %28 : vector<1x32x48xbf16> to vector<32x48xbf16>
    %c1_37 = arith.constant 1 : index
    %c0_38 = arith.constant 0 : index
    %c0_39 = arith.constant 0 : index
    %30 = vector.load %arg7[%c1_37, %c0_38, %c0_39] : memref<3x32x1xf32, #tpu.memory_space<vmem>>, vector<1x32x1xf32>
    %31 = vector.shape_cast %30 : vector<1x32x1xf32> to vector<32x1xf32>
    %c1_40 = arith.constant 1 : index
    %c0_41 = arith.constant 0 : index
    %c0_42 = arith.constant 0 : index
    %32 = vector.load %arg8[%c1_40, %c0_41, %c0_42] : memref<3x32x1xf32, #tpu.memory_space<vmem>>, vector<1x32x1xf32>
    %33 = vector.shape_cast %32 : vector<1x32x1xf32> to vector<32x1xf32>
    %34 = arith.truncf %27 : vector<48x64xf32> to vector<48x64xbf16>
    %cst_43 = arith.constant dense<0.000000e+00> : vector<32x64xf32>
    %35 = tpu.matmul %29, %34, %cst_43 {dimension_numbers = #tpu.dot_dimension_numbers<[1], [0], [0], [1], [0, 0, 1, 1], [], []>} : vector<32x48xbf16>, vector<48x64xbf16>, vector<32x64xf32> -> vector<32x64xf32>
    %36 = vector.broadcast %31 : vector<32x1xf32> to vector<32x64xf32>
    %37 = arith.mulf %35, %36 : vector<32x64xf32>
    %38 = vector.broadcast %33 : vector<32x1xf32> to vector<32x64xf32>
    %39 = arith.addf %37, %38 : vector<32x64xf32>
    %cst_44 = arith.constant 0.000000e+00 : f32
    %40 = vector.broadcast %cst_44 : f32 to vector<32x64xf32>
    %41 = arith.maximumf %39, %40 : vector<32x64xf32>
    %42 = arith.truncf %41 : vector<32x64xf32> to vector<32x64xbf16>
    %cst_45 = arith.constant dense<0.000000e+00> : vector<32x256xf32>
    %43 = tpu.matmul %42, %1, %cst_45 {dimension_numbers = #tpu.dot_dimension_numbers<[1], [0], [0], [1], [0, 0, 1, 1], [], []>} : vector<32x64xbf16>, vector<64x256xbf16>, vector<32x256xf32> -> vector<32x256xf32>
    %c0_46 = arith.constant 0 : index
    %c0_47 = arith.constant 0 : index
    %c0_48 = arith.constant 0 : index
    %44 = vector.load %arg3[%c0_46, %c0_47, %c0_48] : memref<1x48x16xf32, #tpu.memory_space<vmem>>, vector<1x48x16xf32>
    %45 = vector.shape_cast %44 : vector<1x48x16xf32> to vector<48x16xf32>
    %c2 = arith.constant 2 : index
    %c0_49 = arith.constant 0 : index
    %c0_50 = arith.constant 0 : index
    %46 = vector.load %arg6[%c2, %c0_49, %c0_50] : memref<3x32x48xbf16, #tpu.memory_space<vmem>>, vector<1x32x48xbf16>
    %47 = vector.shape_cast %46 : vector<1x32x48xbf16> to vector<32x48xbf16>
    %c2_51 = arith.constant 2 : index
    %c0_52 = arith.constant 0 : index
    %c0_53 = arith.constant 0 : index
    %48 = vector.load %arg7[%c2_51, %c0_52, %c0_53] : memref<3x32x1xf32, #tpu.memory_space<vmem>>, vector<1x32x1xf32>
    %49 = vector.shape_cast %48 : vector<1x32x1xf32> to vector<32x1xf32>
    %c2_54 = arith.constant 2 : index
    %c0_55 = arith.constant 0 : index
    %c0_56 = arith.constant 0 : index
    %50 = vector.load %arg8[%c2_54, %c0_55, %c0_56] : memref<3x32x1xf32, #tpu.memory_space<vmem>>, vector<1x32x1xf32>
    %51 = vector.shape_cast %50 : vector<1x32x1xf32> to vector<32x1xf32>
    %52 = arith.truncf %45 : vector<48x16xf32> to vector<48x16xbf16>
    %cst_57 = arith.constant dense<0.000000e+00> : vector<32x16xf32>
    %53 = tpu.matmul %47, %52, %cst_57 {dimension_numbers = #tpu.dot_dimension_numbers<[1], [0], [0], [1], [0, 0, 1, 1], [], []>} : vector<32x48xbf16>, vector<48x16xbf16>, vector<32x16xf32> -> vector<32x16xf32>
    %54 = vector.broadcast %49 : vector<32x1xf32> to vector<32x16xf32>
    %55 = arith.mulf %53, %54 : vector<32x16xf32>
    %56 = vector.broadcast %51 : vector<32x1xf32> to vector<32x16xf32>
    %57 = arith.addf %55, %56 : vector<32x16xf32>
    %cst_58 = arith.constant 0.000000e+00 : f32
    %58 = vector.broadcast %cst_58 : f32 to vector<32x16xf32>
    %59 = arith.maximumf %57, %58 : vector<32x16xf32>
    %60 = arith.truncf %59 : vector<32x16xf32> to vector<32x16xbf16>
    %cst_59 = arith.constant dense<0.000000e+00> : vector<32x256xf32>
    %61 = tpu.matmul %60, %2, %cst_59 {dimension_numbers = #tpu.dot_dimension_numbers<[1], [0], [0], [1], [0, 0, 1, 1], [], []>} : vector<32x16xbf16>, vector<16x256xbf16>, vector<32x256xf32> -> vector<32x256xf32>
    %62 = arith.addf %25, %43 : vector<32x256xf32>
    %63 = arith.addf %62, %61 : vector<32x256xf32>
    %c17_i32 = arith.constant 17 : i32
    %64 = tpu.dynamic_rotate %63 by %c17_i32 dim 1 : vector<32x256xf32>, i32 -> vector<32x256xf32>
    %65 = vector.extract_strided_slice %0 {offsets = [0, 0], sizes = [1, 256], strides = [1, 1]} : vector<9x256xf32> to vector<1x256xf32>
    %66 = vector.broadcast %65 : vector<1x256xf32> to vector<32x256xf32>
    %67 = arith.mulf %64, %66 : vector<32x256xf32>
    %c16_i32 = arith.constant 16 : i32
    %68 = tpu.dynamic_rotate %63 by %c16_i32 dim 1 : vector<32x256xf32>, i32 -> vector<32x256xf32>
    %69 = vector.extract_strided_slice %0 {offsets = [1, 0], sizes = [1, 256], strides = [1, 1]} : vector<9x256xf32> to vector<1x256xf32>
    %70 = vector.broadcast %69 : vector<1x256xf32> to vector<32x256xf32>
    %71 = arith.mulf %68, %70 : vector<32x256xf32>
    %c15_i32 = arith.constant 15 : i32
    %72 = tpu.dynamic_rotate %63 by %c15_i32 dim 1 : vector<32x256xf32>, i32 -> vector<32x256xf32>
    %73 = vector.extract_strided_slice %0 {offsets = [2, 0], sizes = [1, 256], strides = [1, 1]} : vector<9x256xf32> to vector<1x256xf32>
    %74 = vector.broadcast %73 : vector<1x256xf32> to vector<32x256xf32>
    %75 = arith.mulf %72, %74 : vector<32x256xf32>
    %c1_i32 = arith.constant 1 : i32
    %76 = tpu.dynamic_rotate %63 by %c1_i32 dim 1 : vector<32x256xf32>, i32 -> vector<32x256xf32>
    %77 = vector.extract_strided_slice %0 {offsets = [3, 0], sizes = [1, 256], strides = [1, 1]} : vector<9x256xf32> to vector<1x256xf32>
    %78 = vector.broadcast %77 : vector<1x256xf32> to vector<32x256xf32>
    %79 = arith.mulf %76, %78 : vector<32x256xf32>
    %c255_i32 = arith.constant 255 : i32
    %80 = tpu.dynamic_rotate %63 by %c255_i32 dim 1 : vector<32x256xf32>, i32 -> vector<32x256xf32>
    %81 = vector.extract_strided_slice %0 {offsets = [5, 0], sizes = [1, 256], strides = [1, 1]} : vector<9x256xf32> to vector<1x256xf32>
    %82 = vector.broadcast %81 : vector<1x256xf32> to vector<32x256xf32>
    %83 = arith.mulf %80, %82 : vector<32x256xf32>
    %c241_i32 = arith.constant 241 : i32
    %84 = tpu.dynamic_rotate %63 by %c241_i32 dim 1 : vector<32x256xf32>, i32 -> vector<32x256xf32>
    %85 = vector.extract_strided_slice %0 {offsets = [6, 0], sizes = [1, 256], strides = [1, 1]} : vector<9x256xf32> to vector<1x256xf32>
    %86 = vector.broadcast %85 : vector<1x256xf32> to vector<32x256xf32>
    %87 = arith.mulf %84, %86 : vector<32x256xf32>
    %c240_i32 = arith.constant 240 : i32
    %88 = tpu.dynamic_rotate %63 by %c240_i32 dim 1 : vector<32x256xf32>, i32 -> vector<32x256xf32>
    %89 = vector.extract_strided_slice %0 {offsets = [7, 0], sizes = [1, 256], strides = [1, 1]} : vector<9x256xf32> to vector<1x256xf32>
    %90 = vector.broadcast %89 : vector<1x256xf32> to vector<32x256xf32>
    %91 = arith.mulf %88, %90 : vector<32x256xf32>
    %c239_i32 = arith.constant 239 : i32
    %92 = tpu.dynamic_rotate %63 by %c239_i32 dim 1 : vector<32x256xf32>, i32 -> vector<32x256xf32>
    %93 = vector.extract_strided_slice %0 {offsets = [8, 0], sizes = [1, 256], strides = [1, 1]} : vector<9x256xf32> to vector<1x256xf32>
    %94 = vector.broadcast %93 : vector<1x256xf32> to vector<32x256xf32>
    %95 = arith.mulf %92, %94 : vector<32x256xf32>
    %96 = tpu.concatenate %67, %71, %75, %79, %63, %83, %87, %91, %95 in 0 : vector<32x256xf32>, vector<32x256xf32>, vector<32x256xf32>, vector<32x256xf32>, vector<32x256xf32>, vector<32x256xf32>, vector<32x256xf32>, vector<32x256xf32>, vector<32x256xf32> -> vector<288x256xf32>
    %97 = arith.truncf %96 : vector<288x256xf32> to vector<288x256xbf16>
    %cst_60 = arith.constant dense<0.000000e+00> : vector<32x256xf32>
    %98 = tpu.matmul %5, %97, %cst_60 {dimension_numbers = #tpu.dot_dimension_numbers<[1], [0], [0], [1], [0, 0, 1, 1], [], []>} : vector<32x288xbf16>, vector<288x256xbf16>, vector<32x256xf32> -> vector<32x256xf32>
    %99 = vector.broadcast %8 : vector<32x1xf32> to vector<32x256xf32>
    %100 = arith.mulf %98, %99 : vector<32x256xf32>
    %101 = vector.broadcast %9 : vector<32x1xf32> to vector<32x256xf32>
    %102 = arith.addf %100, %101 : vector<32x256xf32>
    %cst_61 = arith.constant 0.000000e+00 : f32
    %103 = vector.broadcast %cst_61 : f32 to vector<32x256xf32>
    %104 = arith.maximumf %102, %103 : vector<32x256xf32>
    %c0_62 = arith.constant 0 : index
    %c0_63 = arith.constant 0 : index
    %c0_64 = arith.constant 0 : index
    %105 = vector.load %arg4[%c0_62, %c0_63, %c0_64] : memref<1x192x16xf32, #tpu.memory_space<vmem>>, vector<1x192x16xf32>
    %106 = vector.shape_cast %105 : vector<1x192x16xf32> to vector<192x16xf32>
    %c0_65 = arith.constant 0 : index
    %c0_66 = arith.constant 0 : index
    %c0_67 = arith.constant 0 : index
    %107 = vector.load %arg9[%c0_65, %c0_66, %c0_67] : memref<2x32x192xbf16, #tpu.memory_space<vmem>>, vector<1x32x192xbf16>
    %108 = vector.shape_cast %107 : vector<1x32x192xbf16> to vector<32x192xbf16>
    %c0_68 = arith.constant 0 : index
    %c0_69 = arith.constant 0 : index
    %c0_70 = arith.constant 0 : index
    %109 = vector.load %arg10[%c0_68, %c0_69, %c0_70] : memref<2x32x1xf32, #tpu.memory_space<vmem>>, vector<1x32x1xf32>
    %110 = vector.shape_cast %109 : vector<1x32x1xf32> to vector<32x1xf32>
    %c0_71 = arith.constant 0 : index
    %c0_72 = arith.constant 0 : index
    %c0_73 = arith.constant 0 : index
    %111 = vector.load %arg11[%c0_71, %c0_72, %c0_73] : memref<2x32x1xf32, #tpu.memory_space<vmem>>, vector<1x32x1xf32>
    %112 = vector.shape_cast %111 : vector<1x32x1xf32> to vector<32x1xf32>
    %113 = arith.truncf %106 : vector<192x16xf32> to vector<192x16xbf16>
    %cst_74 = arith.constant dense<0.000000e+00> : vector<32x16xf32>
    %114 = tpu.matmul %108, %113, %cst_74 {dimension_numbers = #tpu.dot_dimension_numbers<[1], [0], [0], [1], [0, 0, 1, 1], [], []>} : vector<32x192xbf16>, vector<192x16xbf16>, vector<32x16xf32> -> vector<32x16xf32>
    %115 = vector.broadcast %110 : vector<32x1xf32> to vector<32x16xf32>
    %116 = arith.mulf %114, %115 : vector<32x16xf32>
    %117 = vector.broadcast %112 : vector<32x1xf32> to vector<32x16xf32>
    %118 = arith.addf %116, %117 : vector<32x16xf32>
    %cst_75 = arith.constant 0.000000e+00 : f32
    %119 = vector.broadcast %cst_75 : f32 to vector<32x16xf32>
    %120 = arith.maximumf %118, %119 : vector<32x16xf32>
    %121 = arith.truncf %120 : vector<32x16xf32> to vector<32x16xbf16>
    %cst_76 = arith.constant dense<0.000000e+00> : vector<32x256xf32>
    %122 = tpu.matmul %121, %3, %cst_76 {dimension_numbers = #tpu.dot_dimension_numbers<[1], [0], [0], [1], [0, 0, 1, 1], [], []>} : vector<32x16xbf16>, vector<16x256xbf16>, vector<32x256xf32> -> vector<32x256xf32>
    %c0_77 = arith.constant 0 : index
    %c0_78 = arith.constant 0 : index
    %c0_79 = arith.constant 0 : index
    %123 = vector.load %arg5[%c0_77, %c0_78, %c0_79] : memref<1x192x8xf32, #tpu.memory_space<vmem>>, vector<1x192x8xf32>
    %124 = vector.shape_cast %123 : vector<1x192x8xf32> to vector<192x8xf32>
    %c1_80 = arith.constant 1 : index
    %c0_81 = arith.constant 0 : index
    %c0_82 = arith.constant 0 : index
    %125 = vector.load %arg9[%c1_80, %c0_81, %c0_82] : memref<2x32x192xbf16, #tpu.memory_space<vmem>>, vector<1x32x192xbf16>
    %126 = vector.shape_cast %125 : vector<1x32x192xbf16> to vector<32x192xbf16>
    %c1_83 = arith.constant 1 : index
    %c0_84 = arith.constant 0 : index
    %c0_85 = arith.constant 0 : index
    %127 = vector.load %arg10[%c1_83, %c0_84, %c0_85] : memref<2x32x1xf32, #tpu.memory_space<vmem>>, vector<1x32x1xf32>
    %128 = vector.shape_cast %127 : vector<1x32x1xf32> to vector<32x1xf32>
    %c1_86 = arith.constant 1 : index
    %c0_87 = arith.constant 0 : index
    %c0_88 = arith.constant 0 : index
    %129 = vector.load %arg11[%c1_86, %c0_87, %c0_88] : memref<2x32x1xf32, #tpu.memory_space<vmem>>, vector<1x32x1xf32>
    %130 = vector.shape_cast %129 : vector<1x32x1xf32> to vector<32x1xf32>
    %131 = arith.truncf %124 : vector<192x8xf32> to vector<192x8xbf16>
    %cst_89 = arith.constant dense<0.000000e+00> : vector<32x8xf32>
    %132 = tpu.matmul %126, %131, %cst_89 {dimension_numbers = #tpu.dot_dimension_numbers<[1], [0], [0], [1], [0, 0, 1, 1], [], []>} : vector<32x192xbf16>, vector<192x8xbf16>, vector<32x8xf32> -> vector<32x8xf32>
    %133 = vector.broadcast %128 : vector<32x1xf32> to vector<32x8xf32>
    %134 = arith.mulf %132, %133 : vector<32x8xf32>
    %135 = vector.broadcast %130 : vector<32x1xf32> to vector<32x8xf32>
    %136 = arith.addf %134, %135 : vector<32x8xf32>
    %cst_90 = arith.constant 0.000000e+00 : f32
    %137 = vector.broadcast %cst_90 : f32 to vector<32x8xf32>
    %138 = arith.maximumf %136, %137 : vector<32x8xf32>
    %139 = arith.truncf %138 : vector<32x8xf32> to vector<32x8xbf16>
    %cst_91 = arith.constant dense<0.000000e+00> : vector<32x256xf32>
    %140 = tpu.matmul %139, %4, %cst_91 {dimension_numbers = #tpu.dot_dimension_numbers<[1], [0], [0], [1], [0, 0, 1, 1], [], []>} : vector<32x8xbf16>, vector<8x256xbf16>, vector<32x256xf32> -> vector<32x256xf32>
    %141 = arith.addf %104, %122 : vector<32x256xf32>
    %142 = arith.addf %141, %140 : vector<32x256xf32>
    %c17_i32_92 = arith.constant 17 : i32
    %143 = tpu.dynamic_rotate %142 by %c17_i32_92 dim 1 : vector<32x256xf32>, i32 -> vector<32x256xf32>
    %144 = vector.extract_strided_slice %0 {offsets = [0, 0], sizes = [1, 256], strides = [1, 1]} : vector<9x256xf32> to vector<1x256xf32>
    %145 = vector.broadcast %144 : vector<1x256xf32> to vector<32x256xf32>
    %146 = arith.mulf %143, %145 : vector<32x256xf32>
    %c16_i32_93 = arith.constant 16 : i32
    %147 = tpu.dynamic_rotate %142 by %c16_i32_93 dim 1 : vector<32x256xf32>, i32 -> vector<32x256xf32>
    %148 = vector.extract_strided_slice %0 {offsets = [1, 0], sizes = [1, 256], strides = [1, 1]} : vector<9x256xf32> to vector<1x256xf32>
    %149 = vector.broadcast %148 : vector<1x256xf32> to vector<32x256xf32>
    %150 = arith.mulf %147, %149 : vector<32x256xf32>
    %c15_i32_94 = arith.constant 15 : i32
    %151 = tpu.dynamic_rotate %142 by %c15_i32_94 dim 1 : vector<32x256xf32>, i32 -> vector<32x256xf32>
    %152 = vector.extract_strided_slice %0 {offsets = [2, 0], sizes = [1, 256], strides = [1, 1]} : vector<9x256xf32> to vector<1x256xf32>
    %153 = vector.broadcast %152 : vector<1x256xf32> to vector<32x256xf32>
    %154 = arith.mulf %151, %153 : vector<32x256xf32>
    %c1_i32_95 = arith.constant 1 : i32
    %155 = tpu.dynamic_rotate %142 by %c1_i32_95 dim 1 : vector<32x256xf32>, i32 -> vector<32x256xf32>
    %156 = vector.extract_strided_slice %0 {offsets = [3, 0], sizes = [1, 256], strides = [1, 1]} : vector<9x256xf32> to vector<1x256xf32>
    %157 = vector.broadcast %156 : vector<1x256xf32> to vector<32x256xf32>
    %158 = arith.mulf %155, %157 : vector<32x256xf32>
    %c255_i32_96 = arith.constant 255 : i32
    %159 = tpu.dynamic_rotate %142 by %c255_i32_96 dim 1 : vector<32x256xf32>, i32 -> vector<32x256xf32>
    %160 = vector.extract_strided_slice %0 {offsets = [5, 0], sizes = [1, 256], strides = [1, 1]} : vector<9x256xf32> to vector<1x256xf32>
    %161 = vector.broadcast %160 : vector<1x256xf32> to vector<32x256xf32>
    %162 = arith.mulf %159, %161 : vector<32x256xf32>
    %c241_i32_97 = arith.constant 241 : i32
    %163 = tpu.dynamic_rotate %142 by %c241_i32_97 dim 1 : vector<32x256xf32>, i32 -> vector<32x256xf32>
    %164 = vector.extract_strided_slice %0 {offsets = [6, 0], sizes = [1, 256], strides = [1, 1]} : vector<9x256xf32> to vector<1x256xf32>
    %165 = vector.broadcast %164 : vector<1x256xf32> to vector<32x256xf32>
    %166 = arith.mulf %163, %165 : vector<32x256xf32>
    %c240_i32_98 = arith.constant 240 : i32
    %167 = tpu.dynamic_rotate %142 by %c240_i32_98 dim 1 : vector<32x256xf32>, i32 -> vector<32x256xf32>
    %168 = vector.extract_strided_slice %0 {offsets = [7, 0], sizes = [1, 256], strides = [1, 1]} : vector<9x256xf32> to vector<1x256xf32>
    %169 = vector.broadcast %168 : vector<1x256xf32> to vector<32x256xf32>
    %170 = arith.mulf %167, %169 : vector<32x256xf32>
    %c239_i32_99 = arith.constant 239 : i32
    %171 = tpu.dynamic_rotate %142 by %c239_i32_99 dim 1 : vector<32x256xf32>, i32 -> vector<32x256xf32>
    %172 = vector.extract_strided_slice %0 {offsets = [8, 0], sizes = [1, 256], strides = [1, 1]} : vector<9x256xf32> to vector<1x256xf32>
    %173 = vector.broadcast %172 : vector<1x256xf32> to vector<32x256xf32>
    %174 = arith.mulf %171, %173 : vector<32x256xf32>
    %175 = tpu.concatenate %146, %150, %154, %158, %142, %162, %166, %170, %174 in 0 : vector<32x256xf32>, vector<32x256xf32>, vector<32x256xf32>, vector<32x256xf32>, vector<32x256xf32>, vector<32x256xf32>, vector<32x256xf32>, vector<32x256xf32>, vector<32x256xf32> -> vector<288x256xf32>
    %176 = arith.truncf %175 : vector<288x256xf32> to vector<288x256xbf16>
    %cst_100 = arith.constant dense<0.000000e+00> : vector<8x256xf32>
    %177 = tpu.matmul %6, %176, %cst_100 {dimension_numbers = #tpu.dot_dimension_numbers<[1], [0], [0], [1], [0, 0, 1, 1], [], []>} : vector<8x288xbf16>, vector<288x256xbf16>, vector<8x256xf32> -> vector<8x256xf32>
    %178 = arith.truncf %177 : vector<8x256xf32> to vector<8x256xbf16>
    %cst_101 = arith.constant dense<0.000000e+00> : vector<8x4096xf32>
    %179 = tpu.matmul %178, %7, %cst_101 {dimension_numbers = #tpu.dot_dimension_numbers<[1], [0], [0], [1], [0, 0, 1, 1], [], []>} : vector<8x256xbf16>, vector<256x4096xbf16>, vector<8x4096xf32> -> vector<8x4096xf32>
    %c0_102 = arith.constant 0 : index
    %c0_103 = arith.constant 0 : index
    %c0_104 = arith.constant 0 : index
    %180 = vector.load %arg22[%c0_102, %c0_103, %c0_104] : memref<1x8x4096xf32, #tpu.memory_space<vmem>>, vector<1x8x4096xf32>
    %181 = vector.shape_cast %180 : vector<1x8x4096xf32> to vector<8x4096xf32>
    %182 = vector.shape_cast %179 : vector<8x4096xf32> to vector<1x8x4096xf32>
    tpu.vector_store %arg22[%c0_102, %c0_103, %c0_104], %182 {strides = array<i32>} : memref<1x8x4096xf32, #tpu.memory_space<vmem>>, vector<1x8x4096xf32>,
    return
  }
  func.func @transform_0(%arg0: i32) -> (i32, i32, i32) {
    %c0_i32 = arith.constant 0 : i32
    %c0_i32_0 = arith.constant 0 : i32
    %c0_i32_1 = arith.constant 0 : i32
    return %arg0, %c0_i32, %c0_i32_0 : i32, i32, i32
  }
  func.func @transform_1(%arg0: i32) -> (i32, i32, i32) {
    %c0_i32 = arith.constant 0 : i32
    %c0_i32_0 = arith.constant 0 : i32
    %c0_i32_1 = arith.constant 0 : i32
    return %arg0, %c0_i32, %c0_i32_0 : i32, i32, i32
  }
  func.func @transform_2(%arg0: i32) -> (i32, i32, i32) {
    %c0_i32 = arith.constant 0 : i32
    %c0_i32_0 = arith.constant 0 : i32
    %c0_i32_1 = arith.constant 0 : i32
    return %arg0, %c0_i32, %c0_i32_0 : i32, i32, i32
  }
  func.func @transform_3(%arg0: i32) -> (i32, i32, i32) {
    %c0_i32 = arith.constant 0 : i32
    %c0_i32_0 = arith.constant 0 : i32
    %c0_i32_1 = arith.constant 0 : i32
    return %arg0, %c0_i32, %c0_i32_0 : i32, i32, i32
  }
  func.func @transform_4(%arg0: i32) -> (i32, i32, i32) {
    %c0_i32 = arith.constant 0 : i32
    %c0_i32_0 = arith.constant 0 : i32
    %c0_i32_1 = arith.constant 0 : i32
    return %arg0, %c0_i32, %c0_i32_0 : i32, i32, i32
  }
  func.func @transform_5(%arg0: i32) -> (i32, i32, i32) {
    %c0_i32 = arith.constant 0 : i32
    %c0_i32_0 = arith.constant 0 : i32
    %c0_i32_1 = arith.constant 0 : i32
    %c0_i32_2 = arith.constant 0 : i32
    return %c0_i32, %c0_i32_0, %c0_i32_1 : i32, i32, i32
  }
  func.func @transform_6(%arg0: i32) -> (i32, i32, i32) {
    %c0_i32 = arith.constant 0 : i32
    %c0_i32_0 = arith.constant 0 : i32
    %c0_i32_1 = arith.constant 0 : i32
    %c0_i32_2 = arith.constant 0 : i32
    return %c0_i32, %c0_i32_0, %c0_i32_1 : i32, i32, i32
  }
  func.func @transform_7(%arg0: i32) -> (i32, i32, i32) {
    %c0_i32 = arith.constant 0 : i32
    %c0_i32_0 = arith.constant 0 : i32
    %c0_i32_1 = arith.constant 0 : i32
    %c0_i32_2 = arith.constant 0 : i32
    return %c0_i32, %c0_i32_0, %c0_i32_1 : i32, i32, i32
  }
  func.func @transform_8(%arg0: i32) -> (i32, i32, i32) {
    %c0_i32 = arith.constant 0 : i32
    %c0_i32_0 = arith.constant 0 : i32
    %c0_i32_1 = arith.constant 0 : i32
    %c0_i32_2 = arith.constant 0 : i32
    return %c0_i32, %c0_i32_0, %c0_i32_1 : i32, i32, i32
  }
  func.func @transform_9(%arg0: i32) -> (i32, i32, i32) {
    %c0_i32 = arith.constant 0 : i32
    %c0_i32_0 = arith.constant 0 : i32
    %c0_i32_1 = arith.constant 0 : i32
    %c0_i32_2 = arith.constant 0 : i32
    return %c0_i32, %c0_i32_0, %c0_i32_1 : i32, i32, i32
  }
  func.func @transform_10(%arg0: i32) -> (i32, i32, i32) {
    %c0_i32 = arith.constant 0 : i32
    %c0_i32_0 = arith.constant 0 : i32
    %c0_i32_1 = arith.constant 0 : i32
    %c0_i32_2 = arith.constant 0 : i32
    return %c0_i32, %c0_i32_0, %c0_i32_1 : i32, i32, i32
  }
  func.func @transform_11(%arg0: i32) -> (i32, i32) {
    %c0_i32 = arith.constant 0 : i32
    %c0_i32_0 = arith.constant 0 : i32
    %c0_i32_1 = arith.constant 0 : i32
    return %c0_i32, %c0_i32_0 : i32, i32
  }
  func.func @transform_12(%arg0: i32) -> (i32, i32) {
    %c0_i32 = arith.constant 0 : i32
    %c0_i32_0 = arith.constant 0 : i32
    %c0_i32_1 = arith.constant 0 : i32
    return %c0_i32, %c0_i32_0 : i32, i32
  }
  func.func @transform_13(%arg0: i32) -> (i32, i32) {
    %c0_i32 = arith.constant 0 : i32
    %c0_i32_0 = arith.constant 0 : i32
    %c0_i32_1 = arith.constant 0 : i32
    return %c0_i32, %c0_i32_0 : i32, i32
  }
  func.func @transform_14(%arg0: i32) -> (i32, i32) {
    %c0_i32 = arith.constant 0 : i32
    %c0_i32_0 = arith.constant 0 : i32
    %c0_i32_1 = arith.constant 0 : i32
    return %c0_i32, %c0_i32_0 : i32, i32
  }
  func.func @transform_15(%arg0: i32) -> (i32, i32) {
    %c0_i32 = arith.constant 0 : i32
    %c0_i32_0 = arith.constant 0 : i32
    %c0_i32_1 = arith.constant 0 : i32
    return %c0_i32, %c0_i32_0 : i32, i32
  }
  func.func @transform_16(%arg0: i32) -> (i32, i32) {
    %c0_i32 = arith.constant 0 : i32
    %c0_i32_0 = arith.constant 0 : i32
    %c0_i32_1 = arith.constant 0 : i32
    return %c0_i32, %c0_i32_0 : i32, i32
  }
  func.func @transform_17(%arg0: i32) -> (i32, i32) {
    %c0_i32 = arith.constant 0 : i32
    %c0_i32_0 = arith.constant 0 : i32
    %c0_i32_1 = arith.constant 0 : i32
    return %c0_i32, %c0_i32_0 : i32, i32
  }
  func.func @transform_18(%arg0: i32) -> (i32, i32) {
    %c0_i32 = arith.constant 0 : i32
    %c0_i32_0 = arith.constant 0 : i32
    %c0_i32_1 = arith.constant 0 : i32
    return %c0_i32, %c0_i32_0 : i32, i32
  }
  func.func @transform_19(%arg0: i32) -> (i32, i32) {
    %c0_i32 = arith.constant 0 : i32
    %c0_i32_0 = arith.constant 0 : i32
    %c0_i32_1 = arith.constant 0 : i32
    return %c0_i32, %c0_i32_0 : i32, i32
  }
  func.func @transform_20(%arg0: i32) -> (i32, i32) {
    %c0_i32 = arith.constant 0 : i32
    %c0_i32_0 = arith.constant 0 : i32
    %c0_i32_1 = arith.constant 0 : i32
    return %c0_i32, %c0_i32_0 : i32, i32
  }
  func.func @transform_21(%arg0: i32) -> (i32, i32, i32) {
    %c0_i32 = arith.constant 0 : i32
    %c0_i32_0 = arith.constant 0 : i32
    %c0_i32_1 = arith.constant 0 : i32
    return %arg0, %c0_i32, %c0_i32_0 : i32, i32, i32
  }
}

</mosaic_0001>

<llo_original>
// kernel: dfa_decoder_forward.1
$region0: #{dfa_decoder_forward.1}
  #allocation0 [shape = 'u32[]', space=smem, size = 0x4, offset = 0x4, fixed_abs, tag = 'smem constant byte address 0x4 - core index']
  #allocation1 [shape = 'u32[144,128]{1,0:T(1,128)}', space=vmem, size = 0x12000, scoped, tag = 'internal scratch']
  %s0 = inlined_call_operand.vmem [shape: f32[2,48,256], index: 0, kind: input, shape index: {}]
  %s1 = inlined_call_operand.vmem [shape: f32[2,48,64], index: 1, kind: input, shape index: {}]
  %s2 = inlined_call_operand.vmem [shape: f32[2,48,16], index: 2, kind: input, shape index: {}]
  %s3 = inlined_call_operand.vmem [shape: f32[2,192,16], index: 3, kind: input, shape index: {}]
  %s4 = inlined_call_operand.vmem [shape: f32[2,192,8], index: 4, kind: input, shape index: {}]
  %s5 = inlined_call_operand.vmem [shape: bf16[3,32,48], index: 5, kind: input, shape index: {}]
  %s6 = inlined_call_operand.vmem [shape: f32[3,32,1], index: 6, kind: input, shape index: {}]
  %s7 = inlined_call_operand.vmem [shape: f32[3,32,1], index: 7, kind: input, shape index: {}]
  %s8 = inlined_call_operand.vmem [shape: bf16[2,32,192], index: 8, kind: input, shape index: {}]
  %s9 = inlined_call_operand.vmem [shape: f32[2,32,1], index: 9, kind: input, shape index: {}]
  %s10 = inlined_call_operand.vmem [shape: f32[2,32,1], index: 10, kind: input, shape index: {}]
  %s11 = inlined_call_operand.vmem [shape: bf16[64,256], index: 11, kind: input, shape index: {}]
  %s12 = inlined_call_operand.vmem [shape: bf16[16,256], index: 12, kind: input, shape index: {}, may-alias: {12,13}]
  %s13 = inlined_call_operand.vmem [shape: bf16[16,256], index: 13, kind: input, shape index: {}, may-alias: {12,13}]
  %s14 = inlined_call_operand.vmem [shape: bf16[8,256], index: 14, kind: input, shape index: {}]
  %s15 = inlined_call_operand.vmem [shape: bf16[32,288], index: 15, kind: input, shape index: {}]
  %s16 = inlined_call_operand.vmem [shape: f32[32,1], index: 16, kind: input, shape index: {}]
  %s17 = inlined_call_operand.vmem [shape: f32[32,1], index: 17, kind: input, shape index: {}]
  %s18 = inlined_call_operand.vmem [shape: bf16[8,288], index: 18, kind: input, shape index: {}]
  %s19 = inlined_call_operand.vmem [shape: f32[9,256], index: 19, kind: input, shape index: {}]
  %s20 = inlined_call_operand.vmem [shape: bf16[256,4096], index: 20, kind: input, shape index: {}]
  %s21 = inlined_call_operand.vmem [shape: f32[2,8,4096], index: 21, kind: output, shape index: {}]
  %s22 = sld [smem:[#allocation0]]
  $region117: #{dfa_decoder_forward.1} parent=0
    _
  %s24 = ssub.s32 1, %s22
  %s25 = scalar_select 0, %s24, %s22
  loop: start=0, step=1, limit=4
  $region2: #{dfa_decoder_forward.1} parent=0 // loop_pre_header
    _
  $region3: #{dfa_decoder_forward.1} parent=0 // loop_header
    %s27 = sphi 0, %s31
    %p28 = scmp.ge.s32.totalorder %s27, 4
    %s37 = sphi 0, %s39
    %s40 = sphi 0, %s37
    %s41 = sphi 0, %s40
    %s57 = sphi 0, %s41
    %s63 = sphi 0, %s65
    %s66 = sphi 0, %s63
    %s67 = sphi 0, %s66
    %s83 = sphi 0, %s67
    %s89 = sphi 0, %s91
    %s92 = sphi 0, %s89
    %s93 = sphi 0, %s92
    %s109 = sphi 0, %s93
    %s115 = sphi 0, %s117
    %s118 = sphi 0, %s115
    %s119 = sphi 0, %s118
    %s135 = sphi 0, %s119
    %s141 = sphi 0, %s143
    %s144 = sphi 0, %s141
    %s145 = sphi 0, %s144
    %s161 = sphi 0, %s145
    %s165 = sphi 0, %s165
    %s167 = sphi 0, %s165
    %s168 = sphi 0, %s167
    %s182 = sphi 0, %s168
    %s186 = sphi 0, %s186
    %s188 = sphi 0, %s186
    %s189 = sphi 0, %s188
    %s203 = sphi 0, %s189
    %s207 = sphi 0, %s207
    %s209 = sphi 0, %s207
    %s210 = sphi 0, %s209
    %s224 = sphi 0, %s210
    %s228 = sphi 0, %s228
    %s230 = sphi 0, %s228
    %s231 = sphi 0, %s230
    %s245 = sphi 0, %s231
    %s249 = sphi 0, %s249
    %s251 = sphi 0, %s249
    %s252 = sphi 0, %s251
    %s266 = sphi 0, %s252
    %s270 = sphi 0, %s270
    %s272 = sphi 0, %s270
    %s273 = sphi 0, %s272
    %s287 = sphi 0, %s273
    %s291 = sphi 0, %s291
    %s293 = sphi 0, %s291
    %s294 = sphi 0, %s293
    %s308 = sphi 0, %s294
    %s312 = sphi 0, %s312
    %s314 = sphi 0, %s312
    %s315 = sphi 0, %s314
    %s329 = sphi 0, %s315
    %s333 = sphi 0, %s333
    %s335 = sphi 0, %s333
    %s336 = sphi 0, %s335
    %s350 = sphi 0, %s336
    %s354 = sphi 0, %s354
    %s356 = sphi 0, %s354
    %s357 = sphi 0, %s356
    %s371 = sphi 0, %s357
    %s375 = sphi 0, %s375
    %s377 = sphi 0, %s375
    %s378 = sphi 0, %s377
    %s392 = sphi 0, %s378
    %s396 = sphi 0, %s396
    %s398 = sphi 0, %s396
    %s399 = sphi 0, %s398
    %s413 = sphi 0, %s399
    %s417 = sphi 0, %s417
    %s419 = sphi 0, %s417
    %s420 = sphi 0, %s419
    %s434 = sphi 0, %s420
    %s438 = sphi 0, %s438
    %s440 = sphi 0, %s438
    %s441 = sphi 0, %s440
    %s455 = sphi 0, %s441
    %s459 = sphi 0, %s459
    %s461 = sphi 0, %s459
    %s462 = sphi 0, %s461
    %s476 = sphi 0, %s462
    %s480 = sphi 0, %s480
    %s482 = sphi 0, %s480
    %s483 = sphi 0, %s482
    %s497 = sphi 0, %s483
    %s503 = sphi 0, %s505
    %s506 = sphi 0, %s503
    %s507 = sphi 0, %s506
    %s523 = sphi 0, %s507
  $region4: #{dfa_decoder_forward.1} parent=0 // loop_header_branch
    %30 = sbr.rel (%p28) target = $region8
  $region5: #{dfa_decoder_forward.1} parent=0 // loop_body
    %s32 = ssub.s32 %s27, 1
    %s33 = ssub.s32 %s27, 2
    %s34 = sadd.s32 %s27, 1
    %s35 = ssub.s32 %s27, %s34
    %p36 = scmp.eq.s32.totalorder %s35, 0
    %s38 = sadd.s32 %s37, 1
    %s39 = scalar_select %p36, %s37, %s38
    %p42 = pneg %p36
    %p43 = scmp.eq.s32.totalorder %s27, 1
    %p44 = por %p42, %p43
    %p45 = scmp.ne.s32.totalorder %s37, %s40
    %p46 = scmp.eq.s32.totalorder %s27, 0
    %p47 = por %p45, %p46
    %p48 = scmp.ne.s32.totalorder %s37, %s40
    %p49 = scmp.eq.s32.totalorder %s32, 1
    %p50 = por %p48, %p49
    %p51 = scmp.ne.s32.totalorder %s40, %s41
    %p52 = scmp.eq.s32.totalorder %s32, 0
    %p53 = por %p51, %p52
    %p54 = scmp.ne.s32.totalorder %s40, %s41
    %p55 = scmp.eq.s32.totalorder %s33, 1
    %p56 = por %p54, %p55
    %p58 = scmp.ne.s32.totalorder %s41, %s57
    %p59 = scmp.eq.s32.totalorder %s33, 0
    %p60 = por %p58, %p59
    %s61 = ssub.s32 %s27, %s34
    %p62 = scmp.eq.s32.totalorder %s61, 0
    %s64 = sadd.s32 %s63, 1
    %s65 = scalar_select %p62, %s63, %s64
    %p68 = pneg %p62
    %p69 = scmp.eq.s32.totalorder %s27, 1
    %p70 = por %p68, %p69
    %p71 = scmp.ne.s32.totalorder %s63, %s66
    %p72 = scmp.eq.s32.totalorder %s27, 0
    %p73 = por %p71, %p72
    %p74 = scmp.ne.s32.totalorder %s63, %s66
    %p75 = scmp.eq.s32.totalorder %s32, 1
    %p76 = por %p74, %p75
    %p77 = scmp.ne.s32.totalorder %s66, %s67
    %p78 = scmp.eq.s32.totalorder %s32, 0
    %p79 = por %p77, %p78
    %p80 = scmp.ne.s32.totalorder %s66, %s67
    %p81 = scmp.eq.s32.totalorder %s33, 1
    %p82 = por %p80, %p81
    %p84 = scmp.ne.s32.totalorder %s67, %s83
    %p85 = scmp.eq.s32.totalorder %s33, 0
    %p86 = por %p84, %p85
    %s87 = ssub.s32 %s27, %s34
    %p88 = scmp.eq.s32.totalorder %s87, 0
    %s90 = sadd.s32 %s89, 1
    %s91 = scalar_select %p88, %s89, %s90
    %p94 = pneg %p88
    %p95 = scmp.eq.s32.totalorder %s27, 1
    %p96 = por %p94, %p95
    %p97 = scmp.ne.s32.totalorder %s89, %s92
    %p98 = scmp.eq.s32.totalorder %s27, 0
    %p99 = por %p97, %p98
    %p100 = scmp.ne.s32.totalorder %s89, %s92
    %p101 = scmp.eq.s32.totalorder %s32, 1
    %p102 = por %p100, %p101
    %p103 = scmp.ne.s32.totalorder %s92, %s93
    %p104 = scmp.eq.s32.totalorder %s32, 0
    %p105 = por %p103, %p104
    %p106 = scmp.ne.s32.totalorder %s92, %s93
    %p107 = scmp.eq.s32.totalorder %s33, 1
    %p108 = por %p106, %p107
    %p110 = scmp.ne.s32.totalorder %s93, %s109
    %p111 = scmp.eq.s32.totalorder %s33, 0
    %p112 = por %p110, %p111
    %s113 = ssub.s32 %s27, %s34
    %p114 = scmp.eq.s32.totalorder %s113, 0
    %s116 = sadd.s32 %s115, 1
    %s117 = scalar_select %p114, %s115, %s116
    %p120 = pneg %p114
    %p121 = scmp.eq.s32.totalorder %s27, 1
    %p122 = por %p120, %p121
    %p123 = scmp.ne.s32.totalorder %s115, %s118
    %p124 = scmp.eq.s32.totalorder %s27, 0
    %p125 = por %p123, %p124
    %p126 = scmp.ne.s32.totalorder %s115, %s118
    %p127 = scmp.eq.s32.totalorder %s32, 1
    %p128 = por %p126, %p127
    %p129 = scmp.ne.s32.totalorder %s118, %s119
    %p130 = scmp.eq.s32.totalorder %s32, 0
    %p131 = por %p129, %p130
    %p132 = scmp.ne.s32.totalorder %s118, %s119
    %p133 = scmp.eq.s32.totalorder %s33, 1
    %p134 = por %p132, %p133
    %p136 = scmp.ne.s32.totalorder %s119, %s135
    %p137 = scmp.eq.s32.totalorder %s33, 0
    %p138 = por %p136, %p137
    %s139 = ssub.s32 %s27, %s34
    %p140 = scmp.eq.s32.totalorder %s139, 0
    %s142 = sadd.s32 %s141, 1
    %s143 = scalar_select %p140, %s141, %s142
    %p146 = pneg %p140
    %p147 = scmp.eq.s32.totalorder %s27, 1
    %p148 = por %p146, %p147
    %p149 = scmp.ne.s32.totalorder %s141, %s144
    %p150 = scmp.eq.s32.totalorder %s27, 0
    %p151 = por %p149, %p150
    %p152 = scmp.ne.s32.totalorder %s141, %s144
    %p153 = scmp.eq.s32.totalorder %s32, 1
    %p154 = por %p152, %p153
    %p155 = scmp.ne.s32.totalorder %s144, %s145
    %p156 = scmp.eq.s32.totalorder %s32, 0
    %p157 = por %p155, %p156
    %p158 = scmp.ne.s32.totalorder %s144, %s145
    %p159 = scmp.eq.s32.totalorder %s33, 1
    %p160 = por %p158, %p159
    %p162 = scmp.ne.s32.totalorder %s145, %s161
    %p163 = scmp.eq.s32.totalorder %s33, 0
    %p164 = por %p162, %p163
    %s166 = sadd.s32 %s165, 1
    %p169 = scmp.eq.s32.totalorder %s27, 1
    %p170 = scmp.ne.s32.totalorder %s165, %s167
    %p171 = scmp.eq.s32.totalorder %s27, 0
    %p172 = por %p170, %p171
    %p173 = scmp.ne.s32.totalorder %s165, %s167
    %p174 = scmp.eq.s32.totalorder %s32, 1
    %p175 = por %p173, %p174
    %p176 = scmp.ne.s32.totalorder %s167, %s168
    %p177 = scmp.eq.s32.totalorder %s32, 0
    %p178 = por %p176, %p177
    %p179 = scmp.ne.s32.totalorder %s167, %s168
    %p180 = scmp.eq.s32.totalorder %s33, 1
    %p181 = por %p179, %p180
    %p183 = scmp.ne.s32.totalorder %s168, %s182
    %p184 = scmp.eq.s32.totalorder %s33, 0
    %p185 = por %p183, %p184
    %s187 = sadd.s32 %s186, 1
    %p190 = scmp.eq.s32.totalorder %s27, 1
    %p191 = scmp.ne.s32.totalorder %s186, %s188
    %p192 = scmp.eq.s32.totalorder %s27, 0
    %p193 = por %p191, %p192
    %p194 = scmp.ne.s32.totalorder %s186, %s188
    %p195 = scmp.eq.s32.totalorder %s32, 1
    %p196 = por %p194, %p195
    %p197 = scmp.ne.s32.totalorder %s188, %s189
    %p198 = scmp.eq.s32.totalorder %s32, 0
    %p199 = por %p197, %p198
    %p200 = scmp.ne.s32.totalorder %s188, %s189
    %p201 = scmp.eq.s32.totalorder %s33, 1
    %p202 = por %p200, %p201
    %p204 = scmp.ne.s32.totalorder %s189, %s203
    %p205 = scmp.eq.s32.totalorder %s33, 0
    %p206 = por %p204, %p205
    %s208 = sadd.s32 %s207, 1
    %p211 = scmp.eq.s32.totalorder %s27, 1
    %p212 = scmp.ne.s32.totalorder %s207, %s209
    %p213 = scmp.eq.s32.totalorder %s27, 0
    %p214 = por %p212, %p213
    %p215 = scmp.ne.s32.totalorder %s207, %s209
    %p216 = scmp.eq.s32.totalorder %s32, 1
    %p217 = por %p215, %p216
    %p218 = scmp.ne.s32.totalorder %s209, %s210
    %p219 = scmp.eq.s32.totalorder %s32, 0
    %p220 = por %p218, %p219
    %p221 = scmp.ne.s32.totalorder %s209, %s210
    %p222 = scmp.eq.s32.totalorder %s33, 1
    %p223 = por %p221, %p222
    %p225 = scmp.ne.s32.totalorder %s210, %s224
    %p226 = scmp.eq.s32.totalorder %s33, 0
    %p227 = por %p225, %p226
    %s229 = sadd.s32 %s228, 1
    %p232 = scmp.eq.s32.totalorder %s27, 1
    %p233 = scmp.ne.s32.totalorder %s228, %s230
    %p234 = scmp.eq.s32.totalorder %s27, 0
    %p235 = por %p233, %p234
    %p236 = scmp.ne.s32.totalorder %s228, %s230
    %p237 = scmp.eq.s32.totalorder %s32, 1
    %p238 = por %p236, %p237
    %p239 = scmp.ne.s32.totalorder %s230, %s231
    %p240 = scmp.eq.s32.totalorder %s32, 0
    %p241 = por %p239, %p240
    %p242 = scmp.ne.s32.totalorder %s230, %s231
    %p243 = scmp.eq.s32.totalorder %s33, 1
    %p244 = por %p242, %p243
    %p246 = scmp.ne.s32.totalorder %s231, %s245
    %p247 = scmp.eq.s32.totalorder %s33, 0
    %p248 = por %p246, %p247
    %s250 = sadd.s32 %s249, 1
    %p253 = scmp.eq.s32.totalorder %s27, 1
    %p254 = scmp.ne.s32.totalorder %s249, %s251
    %p255 = scmp.eq.s32.totalorder %s27, 0
    %p256 = por %p254, %p255
    %p257 = scmp.ne.s32.totalorder %s249, %s251
    %p258 = scmp.eq.s32.totalorder %s32, 1
    %p259 = por %p257, %p258
    %p260 = scmp.ne.s32.totalorder %s251, %s252
    %p261 = scmp.eq.s32.totalorder %s32, 0
    %p262 = por %p260, %p261
    %p263 = scmp.ne.s32.totalorder %s251, %s252
    %p264 = scmp.eq.s32.totalorder %s33, 1
    %p265 = por %p263, %p264
    %p267 = scmp.ne.s32.totalorder %s252, %s266
    %p268 = scmp.eq.s32.totalorder %s33, 0
    %p269 = por %p267, %p268
    %s271 = sadd.s32 %s270, 1
    %p274 = scmp.eq.s32.totalorder %s27, 1
    %p275 = scmp.ne.s32.totalorder %s270, %s272
    %p276 = scmp.eq.s32.totalorder %s27, 0
    %p277 = por %p275, %p276
    %p278 = scmp.ne.s32.totalorder %s270, %s272
    %p279 = scmp.eq.s32.totalorder %s32, 1
    %p280 = por %p278, %p279
    %p281 = scmp.ne.s32.totalorder %s272, %s273
    %p282 = scmp.eq.s32.totalorder %s32, 0
    %p283 = por %p281, %p282
    %p284 = scmp.ne.s32.totalorder %s272, %s273
    %p285 = scmp.eq.s32.totalorder %s33, 1
    %p286 = por %p284, %p285
    %p288 = scmp.ne.s32.totalorder %s273, %s287
    %p289 = scmp.eq.s32.totalorder %s33, 0
    %p290 = por %p288, %p289
    %s292 = sadd.s32 %s291, 1
    %p295 = scmp.eq.s32.totalorder %s27, 1
    %p296 = scmp.ne.s32.totalorder %s291, %s293
    %p297 = scmp.eq.s32.totalorder %s27, 0
    %p298 = por %p296, %p297
    %p299 = scmp.ne.s32.totalorder %s291, %s293
    %p300 = scmp.eq.s32.totalorder %s32, 1
    %p301 = por %p299, %p300
    %p302 = scmp.ne.s32.totalorder %s293, %s294
    %p303 = scmp.eq.s32.totalorder %s32, 0
    %p304 = por %p302, %p303
    %p305 = scmp.ne.s32.totalorder %s293, %s294
    %p306 = scmp.eq.s32.totalorder %s33, 1
    %p307 = por %p305, %p306
    %p309 = scmp.ne.s32.totalorder %s294, %s308
    %p310 = scmp.eq.s32.totalorder %s33, 0
    %p311 = por %p309, %p310
    %s313 = sadd.s32 %s312, 1
    %p316 = scmp.eq.s32.totalorder %s27, 1
    %p317 = scmp.ne.s32.totalorder %s312, %s314
    %p318 = scmp.eq.s32.totalorder %s27, 0
    %p319 = por %p317, %p318
    %p320 = scmp.ne.s32.totalorder %s312, %s314
    %p321 = scmp.eq.s32.totalorder %s32, 1
    %p322 = por %p320, %p321
    %p323 = scmp.ne.s32.totalorder %s314, %s315
    %p324 = scmp.eq.s32.totalorder %s32, 0
    %p325 = por %p323, %p324
    %p326 = scmp.ne.s32.totalorder %s314, %s315
    %p327 = scmp.eq.s32.totalorder %s33, 1
    %p328 = por %p326, %p327
    %p330 = scmp.ne.s32.totalorder %s315, %s329
    %p331 = scmp.eq.s32.totalorder %s33, 0
    %p332 = por %p330, %p331
    %s334 = sadd.s32 %s333, 1
    %p337 = scmp.eq.s32.totalorder %s27, 1
    %p338 = scmp.ne.s32.totalorder %s333, %s335
    %p339 = scmp.eq.s32.totalorder %s27, 0
    %p340 = por %p338, %p339
    %p341 = scmp.ne.s32.totalorder %s333, %s335
    %p342 = scmp.eq.s32.totalorder %s32, 1
    %p343 = por %p341, %p342
    %p344 = scmp.ne.s32.totalorder %s335, %s336
    %p345 = scmp.eq.s32.totalorder %s32, 0
    %p346 = por %p344, %p345
    %p347 = scmp.ne.s32.totalorder %s335, %s336
    %p348 = scmp.eq.s32.totalorder %s33, 1
    %p349 = por %p347, %p348
    %p351 = scmp.ne.s32.totalorder %s336, %s350
    %p352 = scmp.eq.s32.totalorder %s33, 0
    %p353 = por %p351, %p352
    %s355 = sadd.s32 %s354, 1
    %p358 = scmp.eq.s32.totalorder %s27, 1
    %p359 = scmp.ne.s32.totalorder %s354, %s356
    %p360 = scmp.eq.s32.totalorder %s27, 0
    %p361 = por %p359, %p360
    %p362 = scmp.ne.s32.totalorder %s354, %s356
    %p363 = scmp.eq.s32.totalorder %s32, 1
    %p364 = por %p362, %p363
    %p365 = scmp.ne.s32.totalorder %s356, %s357
    %p366 = scmp.eq.s32.totalorder %s32, 0
    %p367 = por %p365, %p366
    %p368 = scmp.ne.s32.totalorder %s356, %s357
    %p369 = scmp.eq.s32.totalorder %s33, 1
    %p370 = por %p368, %p369
    %p372 = scmp.ne.s32.totalorder %s357, %s371
    %p373 = scmp.eq.s32.totalorder %s33, 0
    %p374 = por %p372, %p373
    %s376 = sadd.s32 %s375, 1
    %p379 = scmp.eq.s32.totalorder %s27, 1
    %p380 = scmp.ne.s32.totalorder %s375, %s377
    %p381 = scmp.eq.s32.totalorder %s27, 0
    %p382 = por %p380, %p381
    %p383 = scmp.ne.s32.totalorder %s375, %s377
    %p384 = scmp.eq.s32.totalorder %s32, 1
    %p385 = por %p383, %p384
    %p386 = scmp.ne.s32.totalorder %s377, %s378
    %p387 = scmp.eq.s32.totalorder %s32, 0
    %p388 = por %p386, %p387
    %p389 = scmp.ne.s32.totalorder %s377, %s378
    %p390 = scmp.eq.s32.totalorder %s33, 1
    %p391 = por %p389, %p390
    %p393 = scmp.ne.s32.totalorder %s378, %s392
    %p394 = scmp.eq.s32.totalorder %s33, 0
    %p395 = por %p393, %p394
    %s397 = sadd.s32 %s396, 1
    %p400 = scmp.eq.s32.totalorder %s27, 1
    %p401 = scmp.ne.s32.totalorder %s396, %s398
    %p402 = scmp.eq.s32.totalorder %s27, 0
    %p403 = por %p401, %p402
    %p404 = scmp.ne.s32.totalorder %s396, %s398
    %p405 = scmp.eq.s32.totalorder %s32, 1
    %p406 = por %p404, %p405
    %p407 = scmp.ne.s32.totalorder %s398, %s399
    %p408 = scmp.eq.s32.totalorder %s32, 0
    %p409 = por %p407, %p408
    %p410 = scmp.ne.s32.totalorder %s398, %s399
    %p411 = scmp.eq.s32.totalorder %s33, 1
    %p412 = por %p410, %p411
    %p414 = scmp.ne.s32.totalorder %s399, %s413
    %p415 = scmp.eq.s32.totalorder %s33, 0
    %p416 = por %p414, %p415
    %s418 = sadd.s32 %s417, 1
    %p421 = scmp.eq.s32.totalorder %s27, 1
    %p422 = scmp.ne.s32.totalorder %s417, %s419
    %p423 = scmp.eq.s32.totalorder %s27, 0
    %p424 = por %p422, %p423
    %p425 = scmp.ne.s32.totalorder %s417, %s419
    %p426 = scmp.eq.s32.totalorder %s32, 1
    %p427 = por %p425, %p426
    %p428 = scmp.ne.s32.totalorder %s419, %s420
    %p429 = scmp.eq.s32.totalorder %s32, 0
    %p430 = por %p428, %p429
    %p431 = scmp.ne.s32.totalorder %s419, %s420
    %p432 = scmp.eq.s32.totalorder %s33, 1
    %p433 = por %p431, %p432
    %p435 = scmp.ne.s32.totalorder %s420, %s434
    %p436 = scmp.eq.s32.totalorder %s33, 0
    %p437 = por %p435, %p436
    %s439 = sadd.s32 %s438, 1
    %p442 = scmp.eq.s32.totalorder %s27, 1
    %p443 = scmp.ne.s32.totalorder %s438, %s440
    %p444 = scmp.eq.s32.totalorder %s27, 0
    %p445 = por %p443, %p444
    %p446 = scmp.ne.s32.totalorder %s438, %s440
    %p447 = scmp.eq.s32.totalorder %s32, 1
    %p448 = por %p446, %p447
    %p449 = scmp.ne.s32.totalorder %s440, %s441
    %p450 = scmp.eq.s32.totalorder %s32, 0
    %p451 = por %p449, %p450
    %p452 = scmp.ne.s32.totalorder %s440, %s441
    %p453 = scmp.eq.s32.totalorder %s33, 1
    %p454 = por %p452, %p453
    %p456 = scmp.ne.s32.totalorder %s441, %s455
    %p457 = scmp.eq.s32.totalorder %s33, 0
    %p458 = por %p456, %p457
    %s460 = sadd.s32 %s459, 1
    %p463 = scmp.eq.s32.totalorder %s27, 1
    %p464 = scmp.ne.s32.totalorder %s459, %s461
    %p465 = scmp.eq.s32.totalorder %s27, 0
    %p466 = por %p464, %p465
    %p467 = scmp.ne.s32.totalorder %s459, %s461
    %p468 = scmp.eq.s32.totalorder %s32, 1
    %p469 = por %p467, %p468
    %p470 = scmp.ne.s32.totalorder %s461, %s462
    %p471 = scmp.eq.s32.totalorder %s32, 0
    %p472 = por %p470, %p471
    %p473 = scmp.ne.s32.totalorder %s461, %s462
    %p474 = scmp.eq.s32.totalorder %s33, 1
    %p475 = por %p473, %p474
    %p477 = scmp.ne.s32.totalorder %s462, %s476
    %p478 = scmp.eq.s32.totalorder %s33, 0
    %p479 = por %p477, %p478
    %s481 = sadd.s32 %s480, 1
    %p484 = scmp.eq.s32.totalorder %s27, 1
    %p485 = scmp.ne.s32.totalorder %s480, %s482
    %p486 = scmp.eq.s32.totalorder %s27, 0
    %p487 = por %p485, %p486
    %p488 = scmp.ne.s32.totalorder %s480, %s482
    %p489 = scmp.eq.s32.totalorder %s32, 1
    %p490 = por %p488, %p489
    %p491 = scmp.ne.s32.totalorder %s482, %s483
    %p492 = scmp.eq.s32.totalorder %s32, 0
    %p493 = por %p491, %p492
    %p494 = scmp.ne.s32.totalorder %s482, %s483
    %p495 = scmp.eq.s32.totalorder %s33, 1
    %p496 = por %p494, %p495
    %p498 = scmp.ne.s32.totalorder %s483, %s497
    %p499 = scmp.eq.s32.totalorder %s33, 0
    %p500 = por %p498, %p499
    %s501 = ssub.s32 %s27, %s34
    %p502 = scmp.eq.s32.totalorder %s501, 0
    %s504 = sadd.s32 %s503, 1
    %s505 = scalar_select %p502, %s503, %s504
    %p508 = pneg %p502
    %p509 = scmp.eq.s32.totalorder %s27, 1
    %p510 = por %p508, %p509
    %p511 = scmp.ne.s32.totalorder %s503, %s506
    %p512 = scmp.eq.s32.totalorder %s27, 0
    %p513 = por %p511, %p512
    %p514 = scmp.ne.s32.totalorder %s503, %s506
    %p515 = scmp.eq.s32.totalorder %s32, 1
    %p516 = por %p514, %p515
    %p517 = scmp.ne.s32.totalorder %s506, %s507
    %p518 = scmp.eq.s32.totalorder %s32, 0
    %p519 = por %p517, %p518
    %p520 = scmp.ne.s32.totalorder %s506, %s507
    %p521 = scmp.eq.s32.totalorder %s33, 1
    %p522 = por %p520, %p521
    %p524 = scmp.ne.s32.totalorder %s507, %s523
    %p525 = scmp.eq.s32.totalorder %s33, 0
    %p526 = por %p524, %p525
    %p527 = scmp.le.s32.totalorder 1, %s27
    %p528 = scmp.lt.s32.totalorder %s27, 3
    %p529 = pnand %p527, %p528
    %p530 = pneg %p529
    // Predicated region
    $region9: #{dfa_decoder_forward.1} parent=5 // pred_check
      _
    $region10: #{dfa_decoder_forward.1} parent=5 // pred_check_branch
      %532 = sbr.rel (%p529) target = $region12
    $region11: #{dfa_decoder_forward.1} parent=5 // pred_region
      %s533 = ssub.s32 %s27, 1
      // Predicated region
      $region13: #{dfa_decoder_forward.1} parent=11 // pred_check
        %p534 = pneg %p178
      $region14: #{dfa_decoder_forward.1} parent=11 // pred_check_branch
        %536 = sbr.rel (%p534) target = $region16
      $region15: #{dfa_decoder_forward.1} parent=11 // pred_region
        _
      $region16: #{dfa_decoder_forward.1} parent=11 // pred_fallthru
        _
      // Predicated region
      $region17: #{dfa_decoder_forward.1} parent=11 // pred_check
        %p537 = pneg %p199
      $region18: #{dfa_decoder_forward.1} parent=11 // pred_check_branch
        %539 = sbr.rel (%p537) target = $region20
      $region19: #{dfa_decoder_forward.1} parent=11 // pred_region
        _
      $region20: #{dfa_decoder_forward.1} parent=11 // pred_fallthru
        _
      // Predicated region
      $region21: #{dfa_decoder_forward.1} parent=11 // pred_check
        %p540 = pneg %p220
      $region22: #{dfa_decoder_forward.1} parent=11 // pred_check_branch
        %542 = sbr.rel (%p540) target = $region24
      $region23: #{dfa_decoder_forward.1} parent=11 // pred_region
        _
      $region24: #{dfa_decoder_forward.1} parent=11 // pred_fallthru
        _
      // Predicated region
      $region25: #{dfa_decoder_forward.1} parent=11 // pred_check
        %p543 = pneg %p241
      $region26: #{dfa_decoder_forward.1} parent=11 // pred_check_branch
        %545 = sbr.rel (%p543) target = $region28
      $region27: #{dfa_decoder_forward.1} parent=11 // pred_region
        _
      $region28: #{dfa_decoder_forward.1} parent=11 // pred_fallthru
        _
      // Predicated region
      $region29: #{dfa_decoder_forward.1} parent=11 // pred_check
        %p546 = pneg %p262
      $region30: #{dfa_decoder_forward.1} parent=11 // pred_check_branch
        %548 = sbr.rel (%p546) target = $region32
      $region31: #{dfa_decoder_forward.1} parent=11 // pred_region
        _
      $region32: #{dfa_decoder_forward.1} parent=11 // pred_fallthru
        _
      // Predicated region
      $region33: #{dfa_decoder_forward.1} parent=11 // pred_check
        %p549 = pneg %p283
      $region34: #{dfa_decoder_forward.1} parent=11 // pred_check_branch
        %551 = sbr.rel (%p549) target = $region36
      $region35: #{dfa_decoder_forward.1} parent=11 // pred_region
        _
      $region36: #{dfa_decoder_forward.1} parent=11 // pred_fallthru
        _
      // Predicated region
      $region37: #{dfa_decoder_forward.1} parent=11 // pred_check
        %p552 = pneg %p304
      $region38: #{dfa_decoder_forward.1} parent=11 // pred_check_branch
        %554 = sbr.rel (%p552) target = $region40
      $region39: #{dfa_decoder_forward.1} parent=11 // pred_region
        _
      $region40: #{dfa_decoder_forward.1} parent=11 // pred_fallthru
        _
      // Predicated region
      $region41: #{dfa_decoder_forward.1} parent=11 // pred_check
        %p555 = pneg %p325
      $region42: #{dfa_decoder_forward.1} parent=11 // pred_check_branch
        %557 = sbr.rel (%p555) target = $region44
      $region43: #{dfa_decoder_forward.1} parent=11 // pred_region
        _
      $region44: #{dfa_decoder_forward.1} parent=11 // pred_fallthru
        _
      // Predicated region
      $region45: #{dfa_decoder_forward.1} parent=11 // pred_check
        %p558 = pneg %p346
      $region46: #{dfa_decoder_forward.1} parent=11 // pred_check_branch
        %560 = sbr.rel (%p558) target = $region48
      $region47: #{dfa_decoder_forward.1} parent=11 // pred_region
        _
      $region48: #{dfa_decoder_forward.1} parent=11 // pred_fallthru
        _
      // Predicated region
      $region49: #{dfa_decoder_forward.1} parent=11 // pred_check
        %p561 = pneg %p367
      $region50: #{dfa_decoder_forward.1} parent=11 // pred_check_branch
        %563 = sbr.rel (%p561) target = $region52
      $region51: #{dfa_decoder_forward.1} parent=11 // pred_region
        _
      $region52: #{dfa_decoder_forward.1} parent=11 // pred_fallthru
        _
      // Predicated region
      $region53: #{dfa_decoder_forward.1} parent=11 // pred_check
        %p564 = pneg %p388
      $region54: #{dfa_decoder_forward.1} parent=11 // pred_check_branch
        %566 = sbr.rel (%p564) target = $region56
      $region55: #{dfa_decoder_forward.1} parent=11 // pred_region
        _
      $region56: #{dfa_decoder_forward.1} parent=11 // pred_fallthru
        _
      // Predicated region
      $region57: #{dfa_decoder_forward.1} parent=11 // pred_check
        %p567 = pneg %p409
      $region58: #{dfa_decoder_forward.1} parent=11 // pred_check_branch
        %569 = sbr.rel (%p567) target = $region60
      $region59: #{dfa_decoder_forward.1} parent=11 // pred_region
        _
      $region60: #{dfa_decoder_forward.1} parent=11 // pred_fallthru
        _
      // Predicated region
      $region61: #{dfa_decoder_forward.1} parent=11 // pred_check
        %p570 = pneg %p430
      $region62: #{dfa_decoder_forward.1} parent=11 // pred_check_branch
        %572 = sbr.rel (%p570) target = $region64
      $region63: #{dfa_decoder_forward.1} parent=11 // pred_region
        _
      $region64: #{dfa_decoder_forward.1} parent=11 // pred_fallthru
        _
      // Predicated region
      $region65: #{dfa_decoder_forward.1} parent=11 // pred_check
        %p573 = pneg %p451
      $region66: #{dfa_decoder_forward.1} parent=11 // pred_check_branch
        %575 = sbr.rel (%p573) target = $region68
      $region67: #{dfa_decoder_forward.1} parent=11 // pred_region
        _
      $region68: #{dfa_decoder_forward.1} parent=11 // pred_fallthru
        _
      // Predicated region
      $region69: #{dfa_decoder_forward.1} parent=11 // pred_check
        %p576 = pneg %p472
      $region70: #{dfa_decoder_forward.1} parent=11 // pred_check_branch
        %578 = sbr.rel (%p576) target = $region72
      $region71: #{dfa_decoder_forward.1} parent=11 // pred_region
        _
      $region72: #{dfa_decoder_forward.1} parent=11 // pred_fallthru
        _
      // Predicated region
      $region73: #{dfa_decoder_forward.1} parent=11 // pred_check
        %p579 = pneg %p493
      $region74: #{dfa_decoder_forward.1} parent=11 // pred_check_branch
        %581 = sbr.rel (%p579) target = $region76
      $region75: #{dfa_decoder_forward.1} parent=11 // pred_region
        _
      $region76: #{dfa_decoder_forward.1} parent=11 // pred_fallthru
        _
    $region12: #{dfa_decoder_forward.1} parent=5 // pred_fallthru
      _
    %p582 = scmp.lt.s32.totalorder %s27, 2
    // Predicated region
    $region77: #{dfa_decoder_forward.1} parent=5 // pred_check
      %p583 = pneg %p582
    $region78: #{dfa_decoder_forward.1} parent=5 // pred_check_branch
      %585 = sbr.rel (%p583) target = $region80
    $region79: #{dfa_decoder_forward.1} parent=5 // pred_region
      // Predicated region
      $region81: #{dfa_decoder_forward.1} parent=79 // pred_check
        %p586 = pneg %p47
      $region82: #{dfa_decoder_forward.1} parent=79 // pred_check_branch
        %588 = sbr.rel (%p586) target = $region84
      $region83: #{dfa_decoder_forward.1} parent=79 // pred_region
        %p589 = scmp.lt.s32.totalorder %s27, 1
        %s590 = scalar_select %p589, %s27, 1
        %s591 = smul.addr %s590, 12
        %s592 = smul.addr %s591, 8
        %s593 = scalar_lea.vmem %s0, %s592
      $region84: #{dfa_decoder_forward.1} parent=79 // pred_fallthru
        _
      // Predicated region
      $region85: #{dfa_decoder_forward.1} parent=79 // pred_check
        %p594 = pneg %p73
      $region86: #{dfa_decoder_forward.1} parent=79 // pred_check_branch
        %596 = sbr.rel (%p594) target = $region88
      $region87: #{dfa_decoder_forward.1} parent=79 // pred_region
        %p597 = scmp.lt.s32.totalorder %s27, 1
        %s598 = scalar_select %p597, %s27, 1
        %s599 = smul.addr %s598, 6
        %s600 = smul.addr %s599, 8
        %s601 = scalar_lea.vmem %s1, %s600
      $region88: #{dfa_decoder_forward.1} parent=79 // pred_fallthru
        _
      // Predicated region
      $region89: #{dfa_decoder_forward.1} parent=79 // pred_check
        %p602 = pneg %p99
      $region90: #{dfa_decoder_forward.1} parent=79 // pred_check_branch
        %604 = sbr.rel (%p602) target = $region92
      $region91: #{dfa_decoder_forward.1} parent=79 // pred_region
        %p605 = scmp.lt.s32.totalorder %s27, 1
        %s606 = scalar_select %p605, %s27, 1
        %s607 = smul.addr %s606, 6
        %s608 = smul.addr %s607, 8
        %s609 = scalar_lea.vmem %s2, %s608
      $region92: #{dfa_decoder_forward.1} parent=79 // pred_fallthru
        _
      // Predicated region
      $region93: #{dfa_decoder_forward.1} parent=79 // pred_check
        %p610 = pneg %p125
      $region94: #{dfa_decoder_forward.1} parent=79 // pred_check_branch
        %612 = sbr.rel (%p610) target = $region96
      $region95: #{dfa_decoder_forward.1} parent=79 // pred_region
        %p613 = scmp.lt.s32.totalorder %s27, 1
        %s614 = scalar_select %p613, %s27, 1
        %s615 = smul.addr %s614, 24
        %s616 = smul.addr %s615, 8
        %s617 = scalar_lea.vmem %s3, %s616
      $region96: #{dfa_decoder_forward.1} parent=79 // pred_fallthru
        _
      // Predicated region
      $region97: #{dfa_decoder_forward.1} parent=79 // pred_check
        %p618 = pneg %p151
      $region98: #{dfa_decoder_forward.1} parent=79 // pred_check_branch
        %620 = sbr.rel (%p618) target = $region100
      $region99: #{dfa_decoder_forward.1} parent=79 // pred_region
        %p621 = scmp.lt.s32.totalorder %s27, 1
        %s622 = scalar_select %p621, %s27, 1
        %s623 = smul.addr %s622, 24
        %s624 = smul.addr %s623, 8
        %s625 = scalar_lea.vmem %s4, %s624
      $region100: #{dfa_decoder_forward.1} parent=79 // pred_fallthru
        _
    $region80: #{dfa_decoder_forward.1} parent=5 // pred_fallthru
      _
    %p626 = scmp.le.s32.totalorder 1, %s27
    %p627 = scmp.lt.s32.totalorder %s27, 3
    %p628 = pnand %p626, %p627
    %p629 = pneg %p628
    // Predicated region
    $region101: #{dfa_decoder_forward.1} parent=5 // pred_check
      _
    $region102: #{dfa_decoder_forward.1} parent=5 // pred_check_branch
      %631 = sbr.rel (%p628) target = $region104
    $region103: #{dfa_decoder_forward.1} parent=5 // pred_region
      %s632 = ssub.s32 %s27, 1
      %p633 = scmp.lt.s32.totalorder %s32, 1
      %s634 = scalar_select %p633, %s32, 1
      %s635 = smul.addr %s634, 12
      %s636 = smul.addr %s635, 8
      %s637 = scalar_lea.vmem %s0, %s636
      %p638 = pneg %p53
      %p639 = pneg %p50
      %p640 = scmp.lt.s32.totalorder %s32, 1
      %s641 = scalar_select %p640, %s32, 1
      %s642 = smul.addr %s641, 6
      %s643 = smul.addr %s642, 8
      %s644 = scalar_lea.vmem %s1, %s643
      %p645 = pneg %p79
      %p646 = pneg %p76
      %p647 = scmp.lt.s32.totalorder %s32, 1
      %s648 = scalar_select %p647, %s32, 1
      %s649 = smul.addr %s648, 6
      %s650 = smul.addr %s649, 8
      %s651 = scalar_lea.vmem %s2, %s650
      %p652 = pneg %p105
      %p653 = pneg %p102
      %p654 = scmp.lt.s32.totalorder %s32, 1
      %s655 = scalar_select %p654, %s32, 1
      %s656 = smul.addr %s655, 24
      %s657 = smul.addr %s656, 8
      %s658 = scalar_lea.vmem %s3, %s657
      %p659 = pneg %p131
      %p660 = pneg %p128
      %p661 = scmp.lt.s32.totalorder %s32, 1
      %s662 = scalar_select %p661, %s32, 1
      %s663 = smul.addr %s662, 24
      %s664 = smul.addr %s663, 8
      %s665 = scalar_lea.vmem %s4, %s664
      %p666 = pneg %p157
      %p667 = pneg %p154
      %p668 = pneg %p178
      %p669 = pneg %p175
      %p670 = pneg %p199
      %p671 = pneg %p196
      %p672 = pneg %p220
      %p673 = pneg %p217
      %p674 = pneg %p241
      %p675 = pneg %p238
      %p676 = pneg %p262
      %p677 = pneg %p259
      %p678 = pneg %p283
      %p679 = pneg %p280
      %p680 = pneg %p304
      %p681 = pneg %p301
      %p682 = pneg %p325
      %p683 = pneg %p322
      %p684 = pneg %p346
      %p685 = pneg %p343
      %p686 = pneg %p367
      %p687 = pneg %p364
      %p688 = pneg %p388
      %p689 = pneg %p385
      %p690 = pneg %p409
      %p691 = pneg %p406
      %p692 = pneg %p430
      %p693 = pneg %p427
      %p694 = pneg %p451
      %p695 = pneg %p448
      %p696 = pneg %p472
      %p697 = pneg %p469
      %p698 = pneg %p493
      %p699 = pneg %p490
      %p700 = pneg %p519
      %p701 = pneg %p516
      %p702 = scmp.lt.s32.totalorder %s32, 1
      %s703 = scalar_select %p702, %s32, 1
      %s704 = smul.addr %s703, 32
      %s705 = smul.addr %s704, 8
      %s706 = scalar_lea.vmem %s21, %s705
      %p707 = scmp.lt.s32.totalorder %s32, 1
      %s708 = scalar_select %p707, %s32, 1
      %s709 = smul.addr %s708, 12
      %s710 = smul.addr %s709, 8
      %s711 = scalar_lea.vmem %s0, %s710
      %p712 = scmp.lt.s32.totalorder %s32, 1
      %s713 = scalar_select %p712, %s32, 1
      %s714 = smul.addr %s713, 6
      %s715 = smul.addr %s714, 8
      %s716 = scalar_lea.vmem %s1, %s715
      %p717 = scmp.lt.s32.totalorder %s32, 1
      %s718 = scalar_select %p717, %s32, 1
      %s719 = smul.addr %s718, 6
      %s720 = smul.addr %s719, 8
      %s721 = scalar_lea.vmem %s2, %s720
      %p722 = scmp.lt.s32.totalorder %s32, 1
      %s723 = scalar_select %p722, %s32, 1
      %s724 = smul.addr %s723, 24
      %s725 = smul.addr %s724, 8
      %s726 = scalar_lea.vmem %s3, %s725
      %p727 = scmp.lt.s32.totalorder %s32, 1
      %s728 = scalar_select %p727, %s32, 1
      %s729 = smul.addr %s728, 24
      %s730 = smul.addr %s729, 8
      %s731 = scalar_lea.vmem %s4, %s730
      %p732 = scmp.lt.s32.totalorder %s32, 1
      %s733 = scalar_select %p732, %s32, 1
      %s734 = smul.addr %s733, 32
      %s735 = smul.addr %s734, 8
      %s736 = scalar_lea.vmem %s21, %s735
      %v738 = vld [vmem:[%s19] sm:$0xff]
      %v739 = vld [vmem:[%s19 + $0x8] sm:$0xff]
      %v740 = vld [vmem:[%s19 + $0x10] sm:$0x1]
      %v741 = vld [vmem:[%s19 + $0x18] sm:$0x1]
      %v742 = vld [vmem:[%s11] sm:$0xff]
      %v743 = vld [vmem:[%s11 + $0x8] sm:$0xff]
      %v744 = vld [vmem:[%s11 + $0x10] sm:$0xff]
      %v745 = vld [vmem:[%s11 + $0x18] sm:$0xff]
      %v746 = vld [vmem:[%s11 + $0x20] sm:$0xff]
      %v747 = vld [vmem:[%s11 + $0x28] sm:$0xff]
      %v748 = vld [vmem:[%s11 + $0x30] sm:$0xff]
      %v749 = vld [vmem:[%s11 + $0x38] sm:$0xff]
      %v750 = vld [vmem:[%s12] sm:$0xff]
      %v751 = vld [vmem:[%s12 + $0x8] sm:$0xff]
      %v752 = vld [vmem:[%s13] sm:$0xff]
      %v753 = vld [vmem:[%s13 + $0x8] sm:$0xff]
      %v754 = vld [vmem:[%s14] sm:$0xff]
      %v755 = vld [vmem:[%s15] sm:$0xff]
      %v756 = vld [vmem:[%s15 + $0x8] sm:$0xf]
      %v757 = vld [vmem:[%s15 + $0xc] sm:$0xff]
      %v758 = vld [vmem:[%s15 + $0x14] sm:$0xf]
      %v759 = vld [vmem:[%s15 + $0x18] sm:$0xff]
      %v760 = vld [vmem:[%s15 + $0x20] sm:$0xf]
      %v761 = vld [vmem:[%s15 + $0x24] sm:$0xff]
      %v762 = vld [vmem:[%s15 + $0x2c] sm:$0xf]
      %v763 = vld [vmem:[%s18] sm:$0xff]
      %v764 = vld [vmem:[%s18 + $0x8] sm:$0xf]
      %v765 = vld [vmem:[%s20] sm:$0xff]
      %v766 = vld [vmem:[%s20 + $0x8] sm:$0xff]
      %v767 = vld [vmem:[%s20 + $0x10] sm:$0xff]
      %v768 = vld [vmem:[%s20 + $0x18] sm:$0xff]
      %v769 = vld [vmem:[%s20 + $0x20] sm:$0xff]
      %v770 = vld [vmem:[%s20 + $0x28] sm:$0xff]
      %v771 = vld [vmem:[%s20 + $0x30] sm:$0xff]
      %v772 = vld [vmem:[%s20 + $0x38] sm:$0xff]
      %v773 = vld [vmem:[%s20 + $0x40] sm:$0xff]
      %v774 = vld [vmem:[%s20 + $0x48] sm:$0xff]
      %v775 = vld [vmem:[%s20 + $0x50] sm:$0xff]
      %v776 = vld [vmem:[%s20 + $0x58] sm:$0xff]
      %v777 = vld [vmem:[%s20 + $0x60] sm:$0xff]
      %v778 = vld [vmem:[%s20 + $0x68] sm:$0xff]
      %v779 = vld [vmem:[%s20 + $0x70] sm:$0xff]
      %v780 = vld [vmem:[%s20 + $0x78] sm:$0xff]
      %v781 = vld [vmem:[%s20 + $0x80] sm:$0xff]
      %v782 = vld [vmem:[%s20 + $0x88] sm:$0xff]
      %v783 = vld [vmem:[%s20 + $0x90] sm:$0xff]
      %v784 = vld [vmem:[%s20 + $0x98] sm:$0xff]
      %v785 = vld [vmem:[%s20 + $0xa0] sm:$0xff]
      %v786 = vld [vmem:[%s20 + $0xa8] sm:$0xff]
      %v787 = vld [vmem:[%s20 + $0xb0] sm:$0xff]
      %v788 = vld [vmem:[%s20 + $0xb8] sm:$0xff]
      %v789 = vld [vmem:[%s20 + $0xc0] sm:$0xff]
      %v790 = vld [vmem:[%s20 + $0xc8] sm:$0xff]
      %v791 = vld [vmem:[%s20 + $0xd0] sm:$0xff]
      %v792 = vld [vmem:[%s20 + $0xd8] sm:$0xff]
      %v793 = vld [vmem:[%s20 + $0xe0] sm:$0xff]
      %v794 = vld [vmem:[%s20 + $0xe8] sm:$0xff]
      %v795 = vld [vmem:[%s20 + $0xf0] sm:$0xff]
      %v796 = vld [vmem:[%s20 + $0xf8] sm:$0xff]
      %v797 = vld [vmem:[%s20 + $0x100] sm:$0xff]
      %v798 = vld [vmem:[%s20 + $0x108] sm:$0xff]
      %v799 = vld [vmem:[%s20 + $0x110] sm:$0xff]
      %v800 = vld [vmem:[%s20 + $0x118] sm:$0xff]
      %v801 = vld [vmem:[%s20 + $0x120] sm:$0xff]
      %v802 = vld [vmem:[%s20 + $0x128] sm:$0xff]
      %v803 = vld [vmem:[%s20 + $0x130] sm:$0xff]
      %v804 = vld [vmem:[%s20 + $0x138] sm:$0xff]
      %v805 = vld [vmem:[%s20 + $0x140] sm:$0xff]
      %v806 = vld [vmem:[%s20 + $0x148] sm:$0xff]
      %v807 = vld [vmem:[%s20 + $0x150] sm:$0xff]
      %v808 = vld [vmem:[%s20 + $0x158] sm:$0xff]
      %v809 = vld [vmem:[%s20 + $0x160] sm:$0xff]
      %v810 = vld [vmem:[%s20 + $0x168] sm:$0xff]
      %v811 = vld [vmem:[%s20 + $0x170] sm:$0xff]
      %v812 = vld [vmem:[%s20 + $0x178] sm:$0xff]
      %v813 = vld [vmem:[%s20 + $0x180] sm:$0xff]
      %v814 = vld [vmem:[%s20 + $0x188] sm:$0xff]
      %v815 = vld [vmem:[%s20 + $0x190] sm:$0xff]
      %v816 = vld [vmem:[%s20 + $0x198] sm:$0xff]
      %v817 = vld [vmem:[%s20 + $0x1a0] sm:$0xff]
      %v818 = vld [vmem:[%s20 + $0x1a8] sm:$0xff]
      %v819 = vld [vmem:[%s20 + $0x1b0] sm:$0xff]
      %v820 = vld [vmem:[%s20 + $0x1b8] sm:$0xff]
      %v821 = vld [vmem:[%s20 + $0x1c0] sm:$0xff]
      %v822 = vld [vmem:[%s20 + $0x1c8] sm:$0xff]
      %v823 = vld [vmem:[%s20 + $0x1d0] sm:$0xff]
      %v824 = vld [vmem:[%s20 + $0x1d8] sm:$0xff]
      %v825 = vld [vmem:[%s20 + $0x1e0] sm:$0xff]
      %v826 = vld [vmem:[%s20 + $0x1e8] sm:$0xff]
      %v827 = vld [vmem:[%s20 + $0x1f0] sm:$0xff]
      %v828 = vld [vmem:[%s20 + $0x1f8] sm:$0xff]
      %v829 = vld [vmem:[%s20 + $0x200] sm:$0xff]
      %v830 = vld [vmem:[%s20 + $0x208] sm:$0xff]
      %v831 = vld [vmem:[%s20 + $0x210] sm:$0xff]
      %v832 = vld [vmem:[%s20 + $0x218] sm:$0xff]
      %v833 = vld [vmem:[%s20 + $0x220] sm:$0xff]
      %v834 = vld [vmem:[%s20 + $0x228] sm:$0xff]
      %v835 = vld [vmem:[%s20 + $0x230] sm:$0xff]
      %v836 = vld [vmem:[%s20 + $0x238] sm:$0xff]
      %v837 = vld [vmem:[%s20 + $0x240] sm:$0xff]
      %v838 = vld [vmem:[%s20 + $0x248] sm:$0xff]
      %v839 = vld [vmem:[%s20 + $0x250] sm:$0xff]
      %v840 = vld [vmem:[%s20 + $0x258] sm:$0xff]
      %v841 = vld [vmem:[%s20 + $0x260] sm:$0xff]
      %v842 = vld [vmem:[%s20 + $0x268] sm:$0xff]
      %v843 = vld [vmem:[%s20 + $0x270] sm:$0xff]
      %v844 = vld [vmem:[%s20 + $0x278] sm:$0xff]
      %v845 = vld [vmem:[%s20 + $0x280] sm:$0xff]
      %v846 = vld [vmem:[%s20 + $0x288] sm:$0xff]
      %v847 = vld [vmem:[%s20 + $0x290] sm:$0xff]
      %v848 = vld [vmem:[%s20 + $0x298] sm:$0xff]
      %v849 = vld [vmem:[%s20 + $0x2a0] sm:$0xff]
      %v850 = vld [vmem:[%s20 + $0x2a8] sm:$0xff]
      %v851 = vld [vmem:[%s20 + $0x2b0] sm:$0xff]
      %v852 = vld [vmem:[%s20 + $0x2b8] sm:$0xff]
      %v853 = vld [vmem:[%s20 + $0x2c0] sm:$0xff]
      %v854 = vld [vmem:[%s20 + $0x2c8] sm:$0xff]
      %v855 = vld [vmem:[%s20 + $0x2d0] sm:$0xff]
      %v856 = vld [vmem:[%s20 + $0x2d8] sm:$0xff]
      %v857 = vld [vmem:[%s20 + $0x2e0] sm:$0xff]
      %v858 = vld [vmem:[%s20 + $0x2e8] sm:$0xff]
      %v859 = vld [vmem:[%s20 + $0x2f0] sm:$0xff]
      %v860 = vld [vmem:[%s20 + $0x2f8] sm:$0xff]
      %v861 = vld [vmem:[%s20 + $0x300] sm:$0xff]
      %v862 = vld [vmem:[%s20 + $0x308] sm:$0xff]
      %v863 = vld [vmem:[%s20 + $0x310] sm:$0xff]
      %v864 = vld [vmem:[%s20 + $0x318] sm:$0xff]
      %v865 = vld [vmem:[%s20 + $0x320] sm:$0xff]
      %v866 = vld [vmem:[%s20 + $0x328] sm:$0xff]
      %v867 = vld [vmem:[%s20 + $0x330] sm:$0xff]
      %v868 = vld [vmem:[%s20 + $0x338] sm:$0xff]
      %v869 = vld [vmem:[%s20 + $0x340] sm:$0xff]
      %v870 = vld [vmem:[%s20 + $0x348] sm:$0xff]
      %v871 = vld [vmem:[%s20 + $0x350] sm:$0xff]
      %v872 = vld [vmem:[%s20 + $0x358] sm:$0xff]
      %v873 = vld [vmem:[%s20 + $0x360] sm:$0xff]
      %v874 = vld [vmem:[%s20 + $0x368] sm:$0xff]
      %v875 = vld [vmem:[%s20 + $0x370] sm:$0xff]
      %v876 = vld [vmem:[%s20 + $0x378] sm:$0xff]
      %v877 = vld [vmem:[%s20 + $0x380] sm:$0xff]
      %v878 = vld [vmem:[%s20 + $0x388] sm:$0xff]
      %v879 = vld [vmem:[%s20 + $0x390] sm:$0xff]
      %v880 = vld [vmem:[%s20 + $0x398] sm:$0xff]
      %v881 = vld [vmem:[%s20 + $0x3a0] sm:$0xff]
      %v882 = vld [vmem:[%s20 + $0x3a8] sm:$0xff]
      %v883 = vld [vmem:[%s20 + $0x3b0] sm:$0xff]
      %v884 = vld [vmem:[%s20 + $0x3b8] sm:$0xff]
      %v885 = vld [vmem:[%s20 + $0x3c0] sm:$0xff]
      %v886 = vld [vmem:[%s20 + $0x3c8] sm:$0xff]
      %v887 = vld [vmem:[%s20 + $0x3d0] sm:$0xff]
      %v888 = vld [vmem:[%s20 + $0x3d8] sm:$0xff]
      %v889 = vld [vmem:[%s20 + $0x3e0] sm:$0xff]
      %v890 = vld [vmem:[%s20 + $0x3e8] sm:$0xff]
      %v891 = vld [vmem:[%s20 + $0x3f0] sm:$0xff]
      %v892 = vld [vmem:[%s20 + $0x3f8] sm:$0xff]
      %v893 = vld [vmem:[%s20 + $0x400] sm:$0xff]
      %v894 = vld [vmem:[%s20 + $0x408] sm:$0xff]
      %v895 = vld [vmem:[%s20 + $0x410] sm:$0xff]
      %v896 = vld [vmem:[%s20 + $0x418] sm:$0xff]
      %v897 = vld [vmem:[%s20 + $0x420] sm:$0xff]
      %v898 = vld [vmem:[%s20 + $0x428] sm:$0xff]
      %v899 = vld [vmem:[%s20 + $0x430] sm:$0xff]
      %v900 = vld [vmem:[%s20 + $0x438] sm:$0xff]
      %v901 = vld [vmem:[%s20 + $0x440] sm:$0xff]
      %v902 = vld [vmem:[%s20 + $0x448] sm:$0xff]
      %v903 = vld [vmem:[%s20 + $0x450] sm:$0xff]
      %v904 = vld [vmem:[%s20 + $0x458] sm:$0xff]
      %v905 = vld [vmem:[%s20 + $0x460] sm:$0xff]
      %v906 = vld [vmem:[%s20 + $0x468] sm:$0xff]
      %v907 = vld [vmem:[%s20 + $0x470] sm:$0xff]
      %v908 = vld [vmem:[%s20 + $0x478] sm:$0xff]
      %v909 = vld [vmem:[%s20 + $0x480] sm:$0xff]
      %v910 = vld [vmem:[%s20 + $0x488] sm:$0xff]
      %v911 = vld [vmem:[%s20 + $0x490] sm:$0xff]
      %v912 = vld [vmem:[%s20 + $0x498] sm:$0xff]
      %v913 = vld [vmem:[%s20 + $0x4a0] sm:$0xff]
      %v914 = vld [vmem:[%s20 + $0x4a8] sm:$0xff]
      %v915 = vld [vmem:[%s20 + $0x4b0] sm:$0xff]
      %v916 = vld [vmem:[%s20 + $0x4b8] sm:$0xff]
      %v917 = vld [vmem:[%s20 + $0x4c0] sm:$0xff]
      %v918 = vld [vmem:[%s20 + $0x4c8] sm:$0xff]
      %v919 = vld [vmem:[%s20 + $0x4d0] sm:$0xff]
      %v920 = vld [vmem:[%s20 + $0x4d8] sm:$0xff]
      %v921 = vld [vmem:[%s20 + $0x4e0] sm:$0xff]
      %v922 = vld [vmem:[%s20 + $0x4e8] sm:$0xff]
      %v923 = vld [vmem:[%s20 + $0x4f0] sm:$0xff]
      %v924 = vld [vmem:[%s20 + $0x4f8] sm:$0xff]
      %v925 = vld [vmem:[%s20 + $0x500] sm:$0xff]
      %v926 = vld [vmem:[%s20 + $0x508] sm:$0xff]
      %v927 = vld [vmem:[%s20 + $0x510] sm:$0xff]
      %v928 = vld [vmem:[%s20 + $0x518] sm:$0xff]
      %v929 = vld [vmem:[%s20 + $0x520] sm:$0xff]
      %v930 = vld [vmem:[%s20 + $0x528] sm:$0xff]
      %v931 = vld [vmem:[%s20 + $0x530] sm:$0xff]
      %v932 = vld [vmem:[%s20 + $0x538] sm:$0xff]
      %v933 = vld [vmem:[%s20 + $0x540] sm:$0xff]
      %v934 = vld [vmem:[%s20 + $0x548] sm:$0xff]
      %v935 = vld [vmem:[%s20 + $0x550] sm:$0xff]
      %v936 = vld [vmem:[%s20 + $0x558] sm:$0xff]
      %v937 = vld [vmem:[%s20 + $0x560] sm:$0xff]
      %v938 = vld [vmem:[%s20 + $0x568] sm:$0xff]
      %v939 = vld [vmem:[%s20 + $0x570] sm:$0xff]
      %v940 = vld [vmem:[%s20 + $0x578] sm:$0xff]
      %v941 = vld [vmem:[%s20 + $0x580] sm:$0xff]
      %v942 = vld [vmem:[%s20 + $0x588] sm:$0xff]
      %v943 = vld [vmem:[%s20 + $0x590] sm:$0xff]
      %v944 = vld [vmem:[%s20 + $0x598] sm:$0xff]
      %v945 = vld [vmem:[%s20 + $0x5a0] sm:$0xff]
      %v946 = vld [vmem:[%s20 + $0x5a8] sm:$0xff]
      %v947 = vld [vmem:[%s20 + $0x5b0] sm:$0xff]
      %v948 = vld [vmem:[%s20 + $0x5b8] sm:$0xff]
      %v949 = vld [vmem:[%s20 + $0x5c0] sm:$0xff]
      %v950 = vld [vmem:[%s20 + $0x5c8] sm:$0xff]
      %v951 = vld [vmem:[%s20 + $0x5d0] sm:$0xff]
      %v952 = vld [vmem:[%s20 + $0x5d8] sm:$0xff]
      %v953 = vld [vmem:[%s20 + $0x5e0] sm:$0xff]
      %v954 = vld [vmem:[%s20 + $0x5e8] sm:$0xff]
      %v955 = vld [vmem:[%s20 + $0x5f0] sm:$0xff]
      %v956 = vld [vmem:[%s20 + $0x5f8] sm:$0xff]
      %v957 = vld [vmem:[%s20 + $0x600] sm:$0xff]
      %v958 = vld [vmem:[%s20 + $0x608] sm:$0xff]
      %v959 = vld [vmem:[%s20 + $0x610] sm:$0xff]
      %v960 = vld [vmem:[%s20 + $0x618] sm:$0xff]
      %v961 = vld [vmem:[%s20 + $0x620] sm:$0xff]
      %v962 = vld [vmem:[%s20 + $0x628] sm:$0xff]
      %v963 = vld [vmem:[%s20 + $0x630] sm:$0xff]
      %v964 = vld [vmem:[%s20 + $0x638] sm:$0xff]
      %v965 = vld [vmem:[%s20 + $0x640] sm:$0xff]
      %v966 = vld [vmem:[%s20 + $0x648] sm:$0xff]
      %v967 = vld [vmem:[%s20 + $0x650] sm:$0xff]
      %v968 = vld [vmem:[%s20 + $0x658] sm:$0xff]
      %v969 = vld [vmem:[%s20 + $0x660] sm:$0xff]
      %v970 = vld [vmem:[%s20 + $0x668] sm:$0xff]
      %v971 = vld [vmem:[%s20 + $0x670] sm:$0xff]
      %v972 = vld [vmem:[%s20 + $0x678] sm:$0xff]
      %v973 = vld [vmem:[%s20 + $0x680] sm:$0xff]
      %v974 = vld [vmem:[%s20 + $0x688] sm:$0xff]
      %v975 = vld [vmem:[%s20 + $0x690] sm:$0xff]
      %v976 = vld [vmem:[%s20 + $0x698] sm:$0xff]
      %v977 = vld [vmem:[%s20 + $0x6a0] sm:$0xff]
      %v978 = vld [vmem:[%s20 + $0x6a8] sm:$0xff]
      %v979 = vld [vmem:[%s20 + $0x6b0] sm:$0xff]
      %v980 = vld [vmem:[%s20 + $0x6b8] sm:$0xff]
      %v981 = vld [vmem:[%s20 + $0x6c0] sm:$0xff]
      %v982 = vld [vmem:[%s20 + $0x6c8] sm:$0xff]
      %v983 = vld [vmem:[%s20 + $0x6d0] sm:$0xff]
      %v984 = vld [vmem:[%s20 + $0x6d8] sm:$0xff]
      %v985 = vld [vmem:[%s20 + $0x6e0] sm:$0xff]
      %v986 = vld [vmem:[%s20 + $0x6e8] sm:$0xff]
      %v987 = vld [vmem:[%s20 + $0x6f0] sm:$0xff]
      %v988 = vld [vmem:[%s20 + $0x6f8] sm:$0xff]
      %v989 = vld [vmem:[%s20 + $0x700] sm:$0xff]
      %v990 = vld [vmem:[%s20 + $0x708] sm:$0xff]
      %v991 = vld [vmem:[%s20 + $0x710] sm:$0xff]
      %v992 = vld [vmem:[%s20 + $0x718] sm:$0xff]
      %v993 = vld [vmem:[%s20 + $0x720] sm:$0xff]
      %v994 = vld [vmem:[%s20 + $0x728] sm:$0xff]
      %v995 = vld [vmem:[%s20 + $0x730] sm:$0xff]
      %v996 = vld [vmem:[%s20 + $0x738] sm:$0xff]
      %v997 = vld [vmem:[%s20 + $0x740] sm:$0xff]
      %v998 = vld [vmem:[%s20 + $0x748] sm:$0xff]
      %v999 = vld [vmem:[%s20 + $0x750] sm:$0xff]
      %v1000 = vld [vmem:[%s20 + $0x758] sm:$0xff]
      %v1001 = vld [vmem:[%s20 + $0x760] sm:$0xff]
      %v1002 = vld [vmem:[%s20 + $0x768] sm:$0xff]
      %v1003 = vld [vmem:[%s20 + $0x770] sm:$0xff]
      %v1004 = vld [vmem:[%s20 + $0x778] sm:$0xff]
      %v1005 = vld [vmem:[%s20 + $0x780] sm:$0xff]
      %v1006 = vld [vmem:[%s20 + $0x788] sm:$0xff]
      %v1007 = vld [vmem:[%s20 + $0x790] sm:$0xff]
      %v1008 = vld [vmem:[%s20 + $0x798] sm:$0xff]
      %v1009 = vld [vmem:[%s20 + $0x7a0] sm:$0xff]
      %v1010 = vld [vmem:[%s20 + $0x7a8] sm:$0xff]
      %v1011 = vld [vmem:[%s20 + $0x7b0] sm:$0xff]
      %v1012 = vld [vmem:[%s20 + $0x7b8] sm:$0xff]
      %v1013 = vld [vmem:[%s20 + $0x7c0] sm:$0xff]
      %v1014 = vld [vmem:[%s20 + $0x7c8] sm:$0xff]
      %v1015 = vld [vmem:[%s20 + $0x7d0] sm:$0xff]
      %v1016 = vld [vmem:[%s20 + $0x7d8] sm:$0xff]
      %v1017 = vld [vmem:[%s20 + $0x7e0] sm:$0xff]
      %v1018 = vld [vmem:[%s20 + $0x7e8] sm:$0xff]
      %v1019 = vld [vmem:[%s20 + $0x7f0] sm:$0xff]
      %v1020 = vld [vmem:[%s20 + $0x7f8] sm:$0xff]
      %v1021 = vld [vmem:[%s20 + $0x800] sm:$0xff]
      %v1022 = vld [vmem:[%s20 + $0x808] sm:$0xff]
      %v1023 = vld [vmem:[%s20 + $0x810] sm:$0xff]
      %v1024 = vld [vmem:[%s20 + $0x818] sm:$0xff]
      %v1025 = vld [vmem:[%s20 + $0x820] sm:$0xff]
      %v1026 = vld [vmem:[%s20 + $0x828] sm:$0xff]
      %v1027 = vld [vmem:[%s20 + $0x830] sm:$0xff]
      %v1028 = vld [vmem:[%s20 + $0x838] sm:$0xff]
      %v1029 = vld [vmem:[%s20 + $0x840] sm:$0xff]
      %v1030 = vld [vmem:[%s20 + $0x848] sm:$0xff]
      %v1031 = vld [vmem:[%s20 + $0x850] sm:$0xff]
      %v1032 = vld [vmem:[%s20 + $0x858] sm:$0xff]
      %v1033 = vld [vmem:[%s20 + $0x860] sm:$0xff]
      %v1034 = vld [vmem:[%s20 + $0x868] sm:$0xff]
      %v1035 = vld [vmem:[%s20 + $0x870] sm:$0xff]
      %v1036 = vld [vmem:[%s20 + $0x878] sm:$0xff]
      %v1037 = vld [vmem:[%s20 + $0x880] sm:$0xff]
      %v1038 = vld [vmem:[%s20 + $0x888] sm:$0xff]
      %v1039 = vld [vmem:[%s20 + $0x890] sm:$0xff]
      %v1040 = vld [vmem:[%s20 + $0x898] sm:$0xff]
      %v1041 = vld [vmem:[%s20 + $0x8a0] sm:$0xff]
      %v1042 = vld [vmem:[%s20 + $0x8a8] sm:$0xff]
      %v1043 = vld [vmem:[%s20 + $0x8b0] sm:$0xff]
      %v1044 = vld [vmem:[%s20 + $0x8b8] sm:$0xff]
      %v1045 = vld [vmem:[%s20 + $0x8c0] sm:$0xff]
      %v1046 = vld [vmem:[%s20 + $0x8c8] sm:$0xff]
      %v1047 = vld [vmem:[%s20 + $0x8d0] sm:$0xff]
      %v1048 = vld [vmem:[%s20 + $0x8d8] sm:$0xff]
      %v1049 = vld [vmem:[%s20 + $0x8e0] sm:$0xff]
      %v1050 = vld [vmem:[%s20 + $0x8e8] sm:$0xff]
      %v1051 = vld [vmem:[%s20 + $0x8f0] sm:$0xff]
      %v1052 = vld [vmem:[%s20 + $0x8f8] sm:$0xff]
      %v1053 = vld [vmem:[%s20 + $0x900] sm:$0xff]
      %v1054 = vld [vmem:[%s20 + $0x908] sm:$0xff]
      %v1055 = vld [vmem:[%s20 + $0x910] sm:$0xff]
      %v1056 = vld [vmem:[%s20 + $0x918] sm:$0xff]
      %v1057 = vld [vmem:[%s20 + $0x920] sm:$0xff]
      %v1058 = vld [vmem:[%s20 + $0x928] sm:$0xff]
      %v1059 = vld [vmem:[%s20 + $0x930] sm:$0xff]
      %v1060 = vld [vmem:[%s20 + $0x938] sm:$0xff]
      %v1061 = vld [vmem:[%s20 + $0x940] sm:$0xff]
      %v1062 = vld [vmem:[%s20 + $0x948] sm:$0xff]
      %v1063 = vld [vmem:[%s20 + $0x950] sm:$0xff]
      %v1064 = vld [vmem:[%s20 + $0x958] sm:$0xff]
      %v1065 = vld [vmem:[%s20 + $0x960] sm:$0xff]
      %v1066 = vld [vmem:[%s20 + $0x968] sm:$0xff]
      %v1067 = vld [vmem:[%s20 + $0x970] sm:$0xff]
      %v1068 = vld [vmem:[%s20 + $0x978] sm:$0xff]
      %v1069 = vld [vmem:[%s20 + $0x980] sm:$0xff]
      %v1070 = vld [vmem:[%s20 + $0x988] sm:$0xff]
      %v1071 = vld [vmem:[%s20 + $0x990] sm:$0xff]
      %v1072 = vld [vmem:[%s20 + $0x998] sm:$0xff]
      %v1073 = vld [vmem:[%s20 + $0x9a0] sm:$0xff]
      %v1074 = vld [vmem:[%s20 + $0x9a8] sm:$0xff]
      %v1075 = vld [vmem:[%s20 + $0x9b0] sm:$0xff]
      %v1076 = vld [vmem:[%s20 + $0x9b8] sm:$0xff]
      %v1077 = vld [vmem:[%s20 + $0x9c0] sm:$0xff]
      %v1078 = vld [vmem:[%s20 + $0x9c8] sm:$0xff]
      %v1079 = vld [vmem:[%s20 + $0x9d0] sm:$0xff]
      %v1080 = vld [vmem:[%s20 + $0x9d8] sm:$0xff]
      %v1081 = vld [vmem:[%s20 + $0x9e0] sm:$0xff]
      %v1082 = vld [vmem:[%s20 + $0x9e8] sm:$0xff]
      %v1083 = vld [vmem:[%s20 + $0x9f0] sm:$0xff]
      %v1084 = vld [vmem:[%s20 + $0x9f8] sm:$0xff]
      %v1085 = vld [vmem:[%s20 + $0xa00] sm:$0xff]
      %v1086 = vld [vmem:[%s20 + $0xa08] sm:$0xff]
      %v1087 = vld [vmem:[%s20 + $0xa10] sm:$0xff]
      %v1088 = vld [vmem:[%s20 + $0xa18] sm:$0xff]
      %v1089 = vld [vmem:[%s20 + $0xa20] sm:$0xff]
      %v1090 = vld [vmem:[%s20 + $0xa28] sm:$0xff]
      %v1091 = vld [vmem:[%s20 + $0xa30] sm:$0xff]
      %v1092 = vld [vmem:[%s20 + $0xa38] sm:$0xff]
      %v1093 = vld [vmem:[%s20 + $0xa40] sm:$0xff]
      %v1094 = vld [vmem:[%s20 + $0xa48] sm:$0xff]
      %v1095 = vld [vmem:[%s20 + $0xa50] sm:$0xff]
      %v1096 = vld [vmem:[%s20 + $0xa58] sm:$0xff]
      %v1097 = vld [vmem:[%s20 + $0xa60] sm:$0xff]
      %v1098 = vld [vmem:[%s20 + $0xa68] sm:$0xff]
      %v1099 = vld [vmem:[%s20 + $0xa70] sm:$0xff]
      %v1100 = vld [vmem:[%s20 + $0xa78] sm:$0xff]
      %v1101 = vld [vmem:[%s20 + $0xa80] sm:$0xff]
      %v1102 = vld [vmem:[%s20 + $0xa88] sm:$0xff]
      %v1103 = vld [vmem:[%s20 + $0xa90] sm:$0xff]
      %v1104 = vld [vmem:[%s20 + $0xa98] sm:$0xff]
      %v1105 = vld [vmem:[%s20 + $0xaa0] sm:$0xff]
      %v1106 = vld [vmem:[%s20 + $0xaa8] sm:$0xff]
      %v1107 = vld [vmem:[%s20 + $0xab0] sm:$0xff]
      %v1108 = vld [vmem:[%s20 + $0xab8] sm:$0xff]
      %v1109 = vld [vmem:[%s20 + $0xac0] sm:$0xff]
      %v1110 = vld [vmem:[%s20 + $0xac8] sm:$0xff]
      %v1111 = vld [vmem:[%s20 + $0xad0] sm:$0xff]
      %v1112 = vld [vmem:[%s20 + $0xad8] sm:$0xff]
      %v1113 = vld [vmem:[%s20 + $0xae0] sm:$0xff]
      %v1114 = vld [vmem:[%s20 + $0xae8] sm:$0xff]
      %v1115 = vld [vmem:[%s20 + $0xaf0] sm:$0xff]
      %v1116 = vld [vmem:[%s20 + $0xaf8] sm:$0xff]
      %v1117 = vld [vmem:[%s20 + $0xb00] sm:$0xff]
      %v1118 = vld [vmem:[%s20 + $0xb08] sm:$0xff]
      %v1119 = vld [vmem:[%s20 + $0xb10] sm:$0xff]
      %v1120 = vld [vmem:[%s20 + $0xb18] sm:$0xff]
      %v1121 = vld [vmem:[%s20 + $0xb20] sm:$0xff]
      %v1122 = vld [vmem:[%s20 + $0xb28] sm:$0xff]
      %v1123 = vld [vmem:[%s20 + $0xb30] sm:$0xff]
      %v1124 = vld [vmem:[%s20 + $0xb38] sm:$0xff]
      %v1125 = vld [vmem:[%s20 + $0xb40] sm:$0xff]
      %v1126 = vld [vmem:[%s20 + $0xb48] sm:$0xff]
      %v1127 = vld [vmem:[%s20 + $0xb50] sm:$0xff]
      %v1128 = vld [vmem:[%s20 + $0xb58] sm:$0xff]
      %v1129 = vld [vmem:[%s20 + $0xb60] sm:$0xff]
      %v1130 = vld [vmem:[%s20 + $0xb68] sm:$0xff]
      %v1131 = vld [vmem:[%s20 + $0xb70] sm:$0xff]
      %v1132 = vld [vmem:[%s20 + $0xb78] sm:$0xff]
      %v1133 = vld [vmem:[%s20 + $0xb80] sm:$0xff]
      %v1134 = vld [vmem:[%s20 + $0xb88] sm:$0xff]
      %v1135 = vld [vmem:[%s20 + $0xb90] sm:$0xff]
      %v1136 = vld [vmem:[%s20 + $0xb98] sm:$0xff]
      %v1137 = vld [vmem:[%s20 + $0xba0] sm:$0xff]
      %v1138 = vld [vmem:[%s20 + $0xba8] sm:$0xff]
      %v1139 = vld [vmem:[%s20 + $0xbb0] sm:$0xff]
      %v1140 = vld [vmem:[%s20 + $0xbb8] sm:$0xff]
      %v1141 = vld [vmem:[%s20 + $0xbc0] sm:$0xff]
      %v1142 = vld [vmem:[%s20 + $0xbc8] sm:$0xff]
      %v1143 = vld [vmem:[%s20 + $0xbd0] sm:$0xff]
      %v1144 = vld [vmem:[%s20 + $0xbd8] sm:$0xff]
      %v1145 = vld [vmem:[%s20 + $0xbe0] sm:$0xff]
      %v1146 = vld [vmem:[%s20 + $0xbe8] sm:$0xff]
      %v1147 = vld [vmem:[%s20 + $0xbf0] sm:$0xff]
      %v1148 = vld [vmem:[%s20 + $0xbf8] sm:$0xff]
      %v1149 = vld [vmem:[%s20 + $0xc00] sm:$0xff]
      %v1150 = vld [vmem:[%s20 + $0xc08] sm:$0xff]
      %v1151 = vld [vmem:[%s20 + $0xc10] sm:$0xff]
      %v1152 = vld [vmem:[%s20 + $0xc18] sm:$0xff]
      %v1153 = vld [vmem:[%s20 + $0xc20] sm:$0xff]
      %v1154 = vld [vmem:[%s20 + $0xc28] sm:$0xff]
      %v1155 = vld [vmem:[%s20 + $0xc30] sm:$0xff]
      %v1156 = vld [vmem:[%s20 + $0xc38] sm:$0xff]
      %v1157 = vld [vmem:[%s20 + $0xc40] sm:$0xff]
      %v1158 = vld [vmem:[%s20 + $0xc48] sm:$0xff]
      %v1159 = vld [vmem:[%s20 + $0xc50] sm:$0xff]
      %v1160 = vld [vmem:[%s20 + $0xc58] sm:$0xff]
      %v1161 = vld [vmem:[%s20 + $0xc60] sm:$0xff]
      %v1162 = vld [vmem:[%s20 + $0xc68] sm:$0xff]
      %v1163 = vld [vmem:[%s20 + $0xc70] sm:$0xff]
      %v1164 = vld [vmem:[%s20 + $0xc78] sm:$0xff]
      %v1165 = vld [vmem:[%s20 + $0xc80] sm:$0xff]
      %v1166 = vld [vmem:[%s20 + $0xc88] sm:$0xff]
      %v1167 = vld [vmem:[%s20 + $0xc90] sm:$0xff]
      %v1168 = vld [vmem:[%s20 + $0xc98] sm:$0xff]
      %v1169 = vld [vmem:[%s20 + $0xca0] sm:$0xff]
      %v1170 = vld [vmem:[%s20 + $0xca8] sm:$0xff]
      %v1171 = vld [vmem:[%s20 + $0xcb0] sm:$0xff]
      %v1172 = vld [vmem:[%s20 + $0xcb8] sm:$0xff]
      %v1173 = vld [vmem:[%s20 + $0xcc0] sm:$0xff]
      %v1174 = vld [vmem:[%s20 + $0xcc8] sm:$0xff]
      %v1175 = vld [vmem:[%s20 + $0xcd0] sm:$0xff]
      %v1176 = vld [vmem:[%s20 + $0xcd8] sm:$0xff]
      %v1177 = vld [vmem:[%s20 + $0xce0] sm:$0xff]
      %v1178 = vld [vmem:[%s20 + $0xce8] sm:$0xff]
      %v1179 = vld [vmem:[%s20 + $0xcf0] sm:$0xff]
      %v1180 = vld [vmem:[%s20 + $0xcf8] sm:$0xff]
      %v1181 = vld [vmem:[%s20 + $0xd00] sm:$0xff]
      %v1182 = vld [vmem:[%s20 + $0xd08] sm:$0xff]
      %v1183 = vld [vmem:[%s20 + $0xd10] sm:$0xff]
      %v1184 = vld [vmem:[%s20 + $0xd18] sm:$0xff]
      %v1185 = vld [vmem:[%s20 + $0xd20] sm:$0xff]
      %v1186 = vld [vmem:[%s20 + $0xd28] sm:$0xff]
      %v1187 = vld [vmem:[%s20 + $0xd30] sm:$0xff]
      %v1188 = vld [vmem:[%s20 + $0xd38] sm:$0xff]
      %v1189 = vld [vmem:[%s20 + $0xd40] sm:$0xff]
      %v1190 = vld [vmem:[%s20 + $0xd48] sm:$0xff]
      %v1191 = vld [vmem:[%s20 + $0xd50] sm:$0xff]
      %v1192 = vld [vmem:[%s20 + $0xd58] sm:$0xff]
      %v1193 = vld [vmem:[%s20 + $0xd60] sm:$0xff]
      %v1194 = vld [vmem:[%s20 + $0xd68] sm:$0xff]
      %v1195 = vld [vmem:[%s20 + $0xd70] sm:$0xff]
      %v1196 = vld [vmem:[%s20 + $0xd78] sm:$0xff]
      %v1197 = vld [vmem:[%s20 + $0xd80] sm:$0xff]
      %v1198 = vld [vmem:[%s20 + $0xd88] sm:$0xff]
      %v1199 = vld [vmem:[%s20 + $0xd90] sm:$0xff]
      %v1200 = vld [vmem:[%s20 + $0xd98] sm:$0xff]
      %v1201 = vld [vmem:[%s20 + $0xda0] sm:$0xff]
      %v1202 = vld [vmem:[%s20 + $0xda8] sm:$0xff]
      %v1203 = vld [vmem:[%s20 + $0xdb0] sm:$0xff]
      %v1204 = vld [vmem:[%s20 + $0xdb8] sm:$0xff]
      %v1205 = vld [vmem:[%s20 + $0xdc0] sm:$0xff]
      %v1206 = vld [vmem:[%s20 + $0xdc8] sm:$0xff]
      %v1207 = vld [vmem:[%s20 + $0xdd0] sm:$0xff]
      %v1208 = vld [vmem:[%s20 + $0xdd8] sm:$0xff]
      %v1209 = vld [vmem:[%s20 + $0xde0] sm:$0xff]
      %v1210 = vld [vmem:[%s20 + $0xde8] sm:$0xff]
      %v1211 = vld [vmem:[%s20 + $0xdf0] sm:$0xff]
      %v1212 = vld [vmem:[%s20 + $0xdf8] sm:$0xff]
      %v1213 = vld [vmem:[%s20 + $0xe00] sm:$0xff]
      %v1214 = vld [vmem:[%s20 + $0xe08] sm:$0xff]
      %v1215 = vld [vmem:[%s20 + $0xe10] sm:$0xff]
      %v1216 = vld [vmem:[%s20 + $0xe18] sm:$0xff]
      %v1217 = vld [vmem:[%s20 + $0xe20] sm:$0xff]
      %v1218 = vld [vmem:[%s20 + $0xe28] sm:$0xff]
      %v1219 = vld [vmem:[%s20 + $0xe30] sm:$0xff]
      %v1220 = vld [vmem:[%s20 + $0xe38] sm:$0xff]
      %v1221 = vld [vmem:[%s20 + $0xe40] sm:$0xff]
      %v1222 = vld [vmem:[%s20 + $0xe48] sm:$0xff]
      %v1223 = vld [vmem:[%s20 + $0xe50] sm:$0xff]
      %v1224 = vld [vmem:[%s20 + $0xe58] sm:$0xff]
      %v1225 = vld [vmem:[%s20 + $0xe60] sm:$0xff]
      %v1226 = vld [vmem:[%s20 + $0xe68] sm:$0xff]
      %v1227 = vld [vmem:[%s20 + $0xe70] sm:$0xff]
      %v1228 = vld [vmem:[%s20 + $0xe78] sm:$0xff]
      %v1229 = vld [vmem:[%s20 + $0xe80] sm:$0xff]
      %v1230 = vld [vmem:[%s20 + $0xe88] sm:$0xff]
      %v1231 = vld [vmem:[%s20 + $0xe90] sm:$0xff]
      %v1232 = vld [vmem:[%s20 + $0xe98] sm:$0xff]
      %v1233 = vld [vmem:[%s20 + $0xea0] sm:$0xff]
      %v1234 = vld [vmem:[%s20 + $0xea8] sm:$0xff]
      %v1235 = vld [vmem:[%s20 + $0xeb0] sm:$0xff]
      %v1236 = vld [vmem:[%s20 + $0xeb8] sm:$0xff]
      %v1237 = vld [vmem:[%s20 + $0xec0] sm:$0xff]
      %v1238 = vld [vmem:[%s20 + $0xec8] sm:$0xff]
      %v1239 = vld [vmem:[%s20 + $0xed0] sm:$0xff]
      %v1240 = vld [vmem:[%s20 + $0xed8] sm:$0xff]
      %v1241 = vld [vmem:[%s20 + $0xee0] sm:$0xff]
      %v1242 = vld [vmem:[%s20 + $0xee8] sm:$0xff]
      %v1243 = vld [vmem:[%s20 + $0xef0] sm:$0xff]
      %v1244 = vld [vmem:[%s20 + $0xef8] sm:$0xff]
      %v1245 = vld [vmem:[%s20 + $0xf00] sm:$0xff]
      %v1246 = vld [vmem:[%s20 + $0xf08] sm:$0xff]
      %v1247 = vld [vmem:[%s20 + $0xf10] sm:$0xff]
      %v1248 = vld [vmem:[%s20 + $0xf18] sm:$0xff]
      %v1249 = vld [vmem:[%s20 + $0xf20] sm:$0xff]
      %v1250 = vld [vmem:[%s20 + $0xf28] sm:$0xff]
      %v1251 = vld [vmem:[%s20 + $0xf30] sm:$0xff]
      %v1252 = vld [vmem:[%s20 + $0xf38] sm:$0xff]
      %v1253 = vld [vmem:[%s20 + $0xf40] sm:$0xff]
      %v1254 = vld [vmem:[%s20 + $0xf48] sm:$0xff]
      %v1255 = vld [vmem:[%s20 + $0xf50] sm:$0xff]
      %v1256 = vld [vmem:[%s20 + $0xf58] sm:$0xff]
      %v1257 = vld [vmem:[%s20 + $0xf60] sm:$0xff]
      %v1258 = vld [vmem:[%s20 + $0xf68] sm:$0xff]
      %v1259 = vld [vmem:[%s20 + $0xf70] sm:$0xff]
      %v1260 = vld [vmem:[%s20 + $0xf78] sm:$0xff]
      %v1261 = vld [vmem:[%s20 + $0xf80] sm:$0xff]
      %v1262 = vld [vmem:[%s20 + $0xf88] sm:$0xff]
      %v1263 = vld [vmem:[%s20 + $0xf90] sm:$0xff]
      %v1264 = vld [vmem:[%s20 + $0xf98] sm:$0xff]
      %v1265 = vld [vmem:[%s20 + $0xfa0] sm:$0xff]
      %v1266 = vld [vmem:[%s20 + $0xfa8] sm:$0xff]
      %v1267 = vld [vmem:[%s20 + $0xfb0] sm:$0xff]
      %v1268 = vld [vmem:[%s20 + $0xfb8] sm:$0xff]
      %v1269 = vld [vmem:[%s20 + $0xfc0] sm:$0xff]
      %v1270 = vld [vmem:[%s20 + $0xfc8] sm:$0xff]
      %v1271 = vld [vmem:[%s20 + $0xfd0] sm:$0xff]
      %v1272 = vld [vmem:[%s20 + $0xfd8] sm:$0xff]
      %v1273 = vld [vmem:[%s20 + $0xfe0] sm:$0xff]
      %v1274 = vld [vmem:[%s20 + $0xfe8] sm:$0xff]
      %v1275 = vld [vmem:[%s20 + $0xff0] sm:$0xff]
      %v1276 = vld [vmem:[%s20 + $0xff8] sm:$0xff]
      %v1277 = vld [vmem:[%s16] sm:$0xff]
      %v1278 = vld [vmem:[%s16 + $0x8] sm:$0xff]
      %v1279 = vld [vmem:[%s16 + $0x10] sm:$0xff]
      %v1280 = vld [vmem:[%s16 + $0x18] sm:$0xff]
      %v1281 = vld [vmem:[%s17] sm:$0xff]
      %v1282 = vld [vmem:[%s17 + $0x8] sm:$0xff]
      %v1283 = vld [vmem:[%s17 + $0x10] sm:$0xff]
      %v1284 = vld [vmem:[%s17 + $0x18] sm:$0xff]
      %v1285 = vld [vmem:[%s711] sm:$0xff]
      %v1286 = vld [vmem:[%s711 + $0x8] sm:$0xff]
      %v1287 = vld [vmem:[%s711 + $0x10] sm:$0xff]
      %v1288 = vld [vmem:[%s711 + $0x18] sm:$0xff]
      %v1289 = vld [vmem:[%s711 + $0x20] sm:$0xff]
      %v1290 = vld [vmem:[%s711 + $0x28] sm:$0xff]
      %v1291 = vld [vmem:[%s711 + $0x30] sm:$0xff]
      %v1292 = vld [vmem:[%s711 + $0x38] sm:$0xff]
      %v1293 = vld [vmem:[%s711 + $0x40] sm:$0xff]
      %v1294 = vld [vmem:[%s711 + $0x48] sm:$0xff]
      %v1295 = vld [vmem:[%s711 + $0x50] sm:$0xff]
      %v1296 = vld [vmem:[%s711 + $0x58] sm:$0xff]
      %v1297 = vld [vmem:[%s5] sm:$0xf]
      %v1298 = vld [vmem:[%s5 + $0x4] sm:$0xf]
      %v1299 = vld [vmem:[%s5 + $0x8] sm:$0xf]
      %v1300 = vld [vmem:[%s5 + $0xc] sm:$0xf]
      %v1301 = vld [vmem:[%s6] sm:$0xff]
      %v1302 = vld [vmem:[%s6 + $0x8] sm:$0xff]
      %v1303 = vld [vmem:[%s6 + $0x10] sm:$0xff]
      %v1304 = vld [vmem:[%s6 + $0x18] sm:$0xff]
      %v1305 = vld [vmem:[%s7] sm:$0xff]
      %v1306 = vld [vmem:[%s7 + $0x8] sm:$0xff]
      %v1307 = vld [vmem:[%s7 + $0x10] sm:$0xff]
      %v1308 = vld [vmem:[%s7 + $0x18] sm:$0xff]
      %v1309 = vpack.c.bf16 %v1287, %v1285
      %v1310 = vpack.c.bf16 %v1288, %v1286
      %v1311 = vpack.c.bf16 %v1291, %v1289
      %v1312 = vpack.c.bf16 %v1292, %v1290
      %v1313 = vpack.c.bf16 %v1295, %v1293
      %v1314 = vpack.c.bf16 %v1296, %v1294
      %v1319 = vunpack.c.l.b16 %v1297
      %v1320 = vunpack.c.l.b16 %v1298
      %v1321 = vunpack.c.l.b16 %v1299
      %v1322 = vunpack.c.l.b16 %v1300
      %v1323 = vpack.c.b16 %v1320, %v1319
      %v1324 = vpack.c.b16 %v1322, %v1321
      %vm1325 = vcmask 392192
      %v1327 = vsel %vm1325, %v1323, 0
      %v1330 = vsel %vm1325, %v1324, 0
      %1332 = vmatprep.subr.bf16.mxu0 0
      %1333 = vmatpush1.bf16.msra.mxu0 0
      %1334 = vmatprep.subr.bf16.mxu0 0
      %1335 = vmatpush1.bf16.msra.mxu0 0
      %1336 = vmatprep.subr.bf16.mxu0 0
      %1337 = vmatpush1.bf16.msra.mxu0 0
      %1338 = vmatprep.subr.bf16.mxu0 0
      %1339 = vmatpush1.bf16.msra.mxu0 0
      %1340 = vmatprep.subr.bf16.mxu0 0
      %1341 = vmatpush1.bf16.msra.mxu0 0
      %1342 = vmatprep.subr.bf16.mxu0 %v1314
      %1343 = vmatpush1.bf16.msra.mxu0 %v1313
      %1344 = vmatprep.subr.bf16.mxu0 %v1312
      %1345 = vmatpush1.bf16.msra.mxu0 %v1311
      %1346 = vmatprep.subr.bf16.mxu0 %v1310
      %1347 = vmatpush1.bf16.msra.mxu0 %v1309
      %1348 = vmatprep.subr.bf16.mxu0 0
      %1349 = vmatpush2.bf16.msra.mxu0 0
      %1350 = vmatprep.subr.bf16.mxu0 0
      %1351 = vmatpush2.bf16.msra.mxu0 0
      %1352 = vmatprep.subr.bf16.mxu0 0
      %1353 = vmatpush2.bf16.msra.mxu0 0
      %1354 = vmatprep.subr.bf16.mxu0 0
      %1355 = vmatpush2.bf16.msra.mxu0 0
      %1356 = vmatprep.subr.bf16.mxu0 0
      %1357 = vmatpush2.bf16.msra.mxu0 0
      %1358 = vmatprep.subr.bf16.mxu0 0
      %1359 = vmatpush2.bf16.msra.mxu0 0
      %1360 = vmatprep.subr.bf16.mxu0 0
      %1361 = vmatpush2.bf16.msra.mxu0 0
      %1362 = vmatprep.subr.bf16.mxu0 0
      %1363 = vmatpush2.bf16.msra.mxu0 0
      %1364 = vmatprep.mubr.bf16.mxu0 0
      %1365 = vmatmul.mubr.bf16.gmra.mxu0 %v1327
      %v1366 = vpop.f32.mrf.mxu0
      %v1367 = vadd.f32 0.0, %v1366
      %v1368 = vpop.f32.mrf.mxu0
      %v1369 = vadd.f32 0.0, %v1368
      %v1370 = vpop.f32.mrf.mxu0
      %v1371 = vadd.f32 0.0, %v1370
      %v1372 = vpop.f32.mrf.mxu0
      %v1373 = vadd.f32 0.0, %v1372
      %1374 = vmatprep.mubr.bf16.mxu0 0
      %1375 = vmatmul.mubr.bf16.gmra.mxu0 %v1330
      %v1376 = vpop.f32.mrf.mxu0
      %v1377 = vadd.f32 0.0, %v1376
      %v1378 = vpop.f32.mrf.mxu0
      %v1379 = vadd.f32 0.0, %v1378
      %v1380 = vpop.f32.mrf.mxu0
      %v1381 = vadd.f32 0.0, %v1380
      %v1382 = vpop.f32.mrf.mxu0
      %v1383 = vadd.f32 0.0, %v1382
      %1384 = vdwg.mxu0
      %1386 = vset.pattern.permute.xlu0 0
      %1387 = vperm.xlu0 %1386, %v1301
      %v1388 = vpop.permute.xlu0 %1387
      %1391 = vset.pattern.permute.xlu0 0
      %1392 = vperm.xlu0 %1391, %v1302
      %v1393 = vpop.permute.xlu0 %1392
      %1396 = vset.pattern.permute.xlu0 0
      %1397 = vperm.xlu0 %1396, %v1303
      %v1398 = vpop.permute.xlu0 %1397
      %1401 = vset.pattern.permute.xlu0 0
      %1402 = vperm.xlu0 %1401, %v1304
      %v1403 = vpop.permute.xlu0 %1402
      %v1405 = vmul.f32 %v1367, %v1388
      %v1406 = vmul.f32 %v1369, %v1388
      %v1407 = vmul.f32 %v1371, %v1393
      %v1408 = vmul.f32 %v1373, %v1393
      %v1409 = vmul.f32 %v1377, %v1398
      %v1410 = vmul.f32 %v1379, %v1398
      %v1411 = vmul.f32 %v1381, %v1403
      %v1412 = vmul.f32 %v1383, %v1403
      %1414 = vset.pattern.permute.xlu0 0
      %1415 = vperm.xlu0 %1414, %v1305
      %v1416 = vpop.permute.xlu0 %1415
      %1419 = vset.pattern.permute.xlu0 0
      %1420 = vperm.xlu0 %1419, %v1306
      %v1421 = vpop.permute.xlu0 %1420
      %1424 = vset.pattern.permute.xlu0 0
      %1425 = vperm.xlu0 %1424, %v1307
      %v1426 = vpop.permute.xlu0 %1425
      %1429 = vset.pattern.permute.xlu0 0
      %1430 = vperm.xlu0 %1429, %v1308
      %v1431 = vpop.permute.xlu0 %1430
      %v1433 = vadd.f32 %v1405, %v1416
      %v1434 = vadd.f32 %v1406, %v1416
      %v1435 = vadd.f32 %v1407, %v1421
      %v1436 = vadd.f32 %v1408, %v1421
      %v1437 = vadd.f32 %v1409, %v1426
      %v1438 = vadd.f32 %v1410, %v1426
      %v1439 = vadd.f32 %v1411, %v1431
      %v1440 = vadd.f32 %v1412, %v1431
      %v1441 = vmax.f32 %v1433, 0.0
      %v1442 = vmax.f32 %v1434, 0.0
      %v1443 = vmax.f32 %v1435, 0.0
      %v1444 = vmax.f32 %v1436, 0.0
      %v1445 = vmax.f32 %v1437, 0.0
      %v1446 = vmax.f32 %v1438, 0.0
      %v1447 = vmax.f32 %v1439, 0.0
      %v1448 = vmax.f32 %v1440, 0.0
      %v1449 = vld [vmem:[%s716] sm:$0xff]
      %v1450 = vld [vmem:[%s716 + $0x8] sm:$0xff]
      %v1451 = vld [vmem:[%s716 + $0x10] sm:$0xff]
      %v1452 = vld [vmem:[%s716 + $0x18] sm:$0xff]
      %v1453 = vld [vmem:[%s716 + $0x20] sm:$0xff]
      %v1454 = vld [vmem:[%s716 + $0x28] sm:$0xff]
      %s1455 = scalar_lea.vmem %s5, 16
      %v1456 = vld [vmem:[%s1455] sm:$0xf]
      %v1457 = vld [vmem:[%s1455 + $0x4] sm:$0xf]
      %v1458 = vld [vmem:[%s1455 + $0x8] sm:$0xf]
      %v1459 = vld [vmem:[%s1455 + $0xc] sm:$0xf]
      %s1460 = scalar_lea.vmem %s6, 32
      %v1461 = vld [vmem:[%s1460] sm:$0xff]
      %v1462 = vld [vmem:[%s1460 + $0x8] sm:$0xff]
      %v1463 = vld [vmem:[%s1460 + $0x10] sm:$0xff]
      %v1464 = vld [vmem:[%s1460 + $0x18] sm:$0xff]
      %s1465 = scalar_lea.vmem %s7, 32
      %v1466 = vld [vmem:[%s1465] sm:$0xff]
      %v1467 = vld [vmem:[%s1465 + $0x8] sm:$0xff]
      %v1468 = vld [vmem:[%s1465 + $0x10] sm:$0xff]
      %v1469 = vld [vmem:[%s1465 + $0x18] sm:$0xff]
      %v1470 = vpack.c.bf16 %v1450, %v1449
      %v1471 = vpack.c.bf16 %v1452, %v1451
      %v1472 = vpack.c.bf16 %v1454, %v1453
      %v1477 = vunpack.c.l.b16 %v1456
      %v1478 = vunpack.c.l.b16 %v1457
      %v1479 = vunpack.c.l.b16 %v1458
      %v1480 = vunpack.c.l.b16 %v1459
      %v1481 = vpack.c.b16 %v1478, %v1477
      %v1482 = vpack.c.b16 %v1480, %v1479
      %v1484 = vsel %vm1325, %v1481, 0
      %v1487 = vsel %vm1325, %v1482, 0
      %1489 = vmatprep.subr.bf16.mxu0 0
      %1490 = vmatpush1.bf16.msra.mxu0 0
      %1491 = vmatprep.subr.bf16.mxu0 0
      %1492 = vmatpush1.bf16.msra.mxu0 0
      %1493 = vmatprep.subr.bf16.mxu0 0
      %1494 = vmatpush1.bf16.msra.mxu0 0
      %1495 = vmatprep.subr.bf16.mxu0 0
      %1496 = vmatpush1.bf16.msra.mxu0 0
      %1497 = vmatprep.subr.bf16.mxu0 0
      %1498 = vmatpush1.bf16.msra.mxu0 0
      %1499 = vmatprep.subr.bf16.mxu0 0
      %1500 = vmatpush1.bf16.msra.mxu0 %v1472
      %1501 = vmatprep.subr.bf16.mxu0 0
      %1502 = vmatpush1.bf16.msra.mxu0 %v1471
      %1503 = vmatprep.subr.bf16.mxu0 0
      %1504 = vmatpush1.bf16.msra.mxu0 %v1470
      %1505 = vmatprep.subr.bf16.mxu0 0
      %1506 = vmatpush2.bf16.msra.mxu0 0
      %1507 = vmatprep.subr.bf16.mxu0 0
      %1508 = vmatpush2.bf16.msra.mxu0 0
      %1509 = vmatprep.subr.bf16.mxu0 0
      %1510 = vmatpush2.bf16.msra.mxu0 0
      %1511 = vmatprep.subr.bf16.mxu0 0
      %1512 = vmatpush2.bf16.msra.mxu0 0
      %1513 = vmatprep.subr.bf16.mxu0 0
      %1514 = vmatpush2.bf16.msra.mxu0 0
      %1515 = vmatprep.subr.bf16.mxu0 0
      %1516 = vmatpush2.bf16.msra.mxu0 0
      %1517 = vmatprep.subr.bf16.mxu0 0
      %1518 = vmatpush2.bf16.msra.mxu0 0
      %1519 = vmatprep.subr.bf16.mxu0 0
      %1520 = vmatpush2.bf16.msra.mxu0 0
      %1521 = vmatprep.mubr.bf16.mxu0 0
      %1522 = vmatmul.mubr.bf16.gmra.mxu0 %v1484
      %v1523 = vpop.f32.mrf.mxu0
      %v1524 = vadd.f32 0.0, %v1523
      %v1525 = vpop.f32.mrf.mxu0
      %v1526 = vpop.f32.mrf.mxu0
      %v1527 = vadd.f32 0.0, %v1526
      %v1528 = vpop.f32.mrf.mxu0
      %1529 = vmatprep.mubr.bf16.mxu0 0
      %1530 = vmatmul.mubr.bf16.gmra.mxu0 %v1487
      %v1531 = vpop.f32.mrf.mxu0
      %v1532 = vadd.f32 0.0, %v1531
      %v1533 = vpop.f32.mrf.mxu0
      %v1534 = vpop.f32.mrf.mxu0
      %v1535 = vadd.f32 0.0, %v1534
      %v1536 = vpop.f32.mrf.mxu0
      %1537 = vdwg.mxu0
      %1539 = vset.pattern.permute.xlu0 0
      %1540 = vperm.xlu0 %1539, %v1461
      %v1541 = vpop.permute.xlu0 %1540
      %1544 = vset.pattern.permute.xlu0 0
      %1545 = vperm.xlu0 %1544, %v1462
      %v1546 = vpop.permute.xlu0 %1545
      %1549 = vset.pattern.permute.xlu0 0
      %1550 = vperm.xlu0 %1549, %v1463
      %v1551 = vpop.permute.xlu0 %1550
      %1554 = vset.pattern.permute.xlu0 0
      %1555 = vperm.xlu0 %1554, %v1464
      %v1556 = vpop.permute.xlu0 %1555
      %v1558 = vmul.f32 %v1524, %v1541
      %v1559 = vmul.f32 %v1527, %v1546
      %v1560 = vmul.f32 %v1532, %v1551
      %v1561 = vmul.f32 %v1535, %v1556
      %1563 = vset.pattern.permute.xlu0 0
      %1564 = vperm.xlu0 %1563, %v1466
      %v1565 = vpop.permute.xlu0 %1564
      %1568 = vset.pattern.permute.xlu0 0
      %1569 = vperm.xlu0 %1568, %v1467
      %v1570 = vpop.permute.xlu0 %1569
      %1573 = vset.pattern.permute.xlu0 0
      %1574 = vperm.xlu0 %1573, %v1468
      %v1575 = vpop.permute.xlu0 %1574
      %1578 = vset.pattern.permute.xlu0 0
      %1579 = vperm.xlu0 %1578, %v1469
      %v1580 = vpop.permute.xlu0 %1579
      %v1582 = vadd.f32 %v1558, %v1565
      %v1583 = vadd.f32 %v1559, %v1570
      %v1584 = vadd.f32 %v1560, %v1575
      %v1585 = vadd.f32 %v1561, %v1580
      %v1586 = vmax.f32 %v1582, 0.0
      %v1587 = vmax.f32 %v1583, 0.0
      %v1588 = vmax.f32 %v1584, 0.0
      %v1589 = vmax.f32 %v1585, 0.0
      %v1590 = vpack.c.bf16 %v1587, %v1586
      %v1591 = vpack.c.bf16 %v1589, %v1588
      %v1600 = vunpack.c.l.b16 %v742
      %v1601 = vunpack.c.h.b16 %v742
      %v1602 = vunpack.c.l.b16 %v743
      %v1603 = vunpack.c.h.b16 %v743
      %v1604 = vunpack.c.l.b16 %v744
      %v1605 = vunpack.c.h.b16 %v744
      %v1606 = vunpack.c.l.b16 %v745
      %v1607 = vunpack.c.h.b16 %v745
      %v1608 = vunpack.c.l.b16 %v746
      %v1609 = vunpack.c.h.b16 %v746
      %v1610 = vunpack.c.l.b16 %v747
      %v1611 = vunpack.c.h.b16 %v747
      %v1612 = vunpack.c.l.b16 %v748
      %v1613 = vunpack.c.h.b16 %v748
      %v1614 = vunpack.c.l.b16 %v749
      %v1615 = vunpack.c.h.b16 %v749
      %v1616 = vpack.c.b16 %v1602, %v1600
      %v1617 = vpack.c.b16 %v1603, %v1601
      %v1618 = vpack.c.b16 %v1606, %v1604
      %v1619 = vpack.c.b16 %v1607, %v1605
      %v1620 = vpack.c.b16 %v1610, %v1608
      %v1621 = vpack.c.b16 %v1611, %v1609
      %v1622 = vpack.c.b16 %v1614, %v1612
      %v1623 = vpack.c.b16 %v1615, %v1613
      %vm1632 = vcmask 523264
      %v1634 = vsel %vm1632, %v1590, 0
      %v1637 = vsel %vm1632, %v1591, 0
      %1639 = vmatprep.subr.bf16.mxu0 0
      %1640 = vmatpush1.bf16.msra.mxu0 0
      %1641 = vmatprep.subr.bf16.mxu0 0
      %1642 = vmatpush1.bf16.msra.mxu0 0
      %1643 = vmatprep.subr.bf16.mxu0 0
      %1644 = vmatpush1.bf16.msra.mxu0 0
      %1645 = vmatprep.subr.bf16.mxu0 0
      %1646 = vmatpush1.bf16.msra.mxu0 0
      %1647 = vmatprep.subr.bf16.mxu0 %v1623
      %1648 = vmatpush1.bf16.msra.mxu0 %v1622
      %1649 = vmatprep.subr.bf16.mxu0 %v1621
      %1650 = vmatpush1.bf16.msra.mxu0 %v1620
      %1651 = vmatprep.subr.bf16.mxu0 %v1619
      %1652 = vmatpush1.bf16.msra.mxu0 %v1618
      %1653 = vmatprep.subr.bf16.mxu0 %v1617
      %1654 = vmatpush1.bf16.msra.mxu0 %v1616
      %1655 = vmatprep.subr.bf16.mxu0 0
      %1656 = vmatpush2.bf16.msra.mxu0 0
      %1657 = vmatprep.subr.bf16.mxu0 0
      %1658 = vmatpush2.bf16.msra.mxu0 0
      %1659 = vmatprep.subr.bf16.mxu0 0
      %1660 = vmatpush2.bf16.msra.mxu0 0
      %1661 = vmatprep.subr.bf16.mxu0 0
      %1662 = vmatpush2.bf16.msra.mxu0 0
      %1663 = vmatprep.subr.bf16.mxu0 0
      %1664 = vmatpush2.bf16.msra.mxu0 0
      %1665 = vmatprep.subr.bf16.mxu0 0
      %1666 = vmatpush2.bf16.msra.mxu0 0
      %1667 = vmatprep.subr.bf16.mxu0 0
      %1668 = vmatpush2.bf16.msra.mxu0 0
      %1669 = vmatprep.subr.bf16.mxu0 0
      %1670 = vmatpush2.bf16.msra.mxu0 0
      %1671 = vmatprep.mubr.bf16.mxu0 0
      %1672 = vmatmul.mubr.bf16.gmra.mxu0 %v1634
      %v1673 = vpop.f32.mrf.mxu0
      %v1674 = vadd.f32 0.0, %v1673
      %v1675 = vpop.f32.mrf.mxu0
      %v1676 = vadd.f32 0.0, %v1675
      %v1677 = vpop.f32.mrf.mxu0
      %v1678 = vadd.f32 0.0, %v1677
      %v1679 = vpop.f32.mrf.mxu0
      %v1680 = vadd.f32 0.0, %v1679
      %1681 = vmatprep.mubr.bf16.mxu0 0
      %1682 = vmatmul.mubr.bf16.gmra.mxu0 %v1637
      %v1683 = vpop.f32.mrf.mxu0
      %v1684 = vadd.f32 0.0, %v1683
      %v1685 = vpop.f32.mrf.mxu0
      %v1686 = vadd.f32 0.0, %v1685
      %v1687 = vpop.f32.mrf.mxu0
      %v1688 = vadd.f32 0.0, %v1687
      %v1689 = vpop.f32.mrf.mxu0
      %v1690 = vadd.f32 0.0, %v1689
      %1691 = vdwg.mxu0
      %v1692 = vld [vmem:[%s721] sm:$0xff]
      %v1693 = vld [vmem:[%s721 + $0x8] sm:$0xff]
      %v1694 = vld [vmem:[%s721 + $0x10] sm:$0xff]
      %v1695 = vld [vmem:[%s721 + $0x18] sm:$0xff]
      %v1696 = vld [vmem:[%s721 + $0x20] sm:$0xff]
      %v1697 = vld [vmem:[%s721 + $0x28] sm:$0xff]
      %s1698 = scalar_lea.vmem %s5, 32
      %v1699 = vld [vmem:[%s1698] sm:$0xf]
      %v1700 = vld [vmem:[%s1698 + $0x4] sm:$0xf]
      %v1701 = vld [vmem:[%s1698 + $0x8] sm:$0xf]
      %v1702 = vld [vmem:[%s1698 + $0xc] sm:$0xf]
      %s1703 = scalar_lea.vmem %s6, 64
      %v1704 = vld [vmem:[%s1703] sm:$0xff]
      %v1705 = vld [vmem:[%s1703 + $0x8] sm:$0xff]
      %v1706 = vld [vmem:[%s1703 + $0x10] sm:$0xff]
      %v1707 = vld [vmem:[%s1703 + $0x18] sm:$0xff]
      %s1708 = scalar_lea.vmem %s7, 64
      %v1709 = vld [vmem:[%s1708] sm:$0xff]
      %v1710 = vld [vmem:[%s1708 + $0x8] sm:$0xff]
      %v1711 = vld [vmem:[%s1708 + $0x10] sm:$0xff]
      %v1712 = vld [vmem:[%s1708 + $0x18] sm:$0xff]
      %v1713 = vpack.c.bf16 %v1693, %v1692
      %v1714 = vpack.c.bf16 %v1695, %v1694
      %v1715 = vpack.c.bf16 %v1697, %v1696
      %v1720 = vunpack.c.l.b16 %v1699
      %v1721 = vunpack.c.l.b16 %v1700
      %v1722 = vunpack.c.l.b16 %v1701
      %v1723 = vunpack.c.l.b16 %v1702
      %v1724 = vpack.c.b16 %v1721, %v1720
      %v1725 = vpack.c.b16 %v1723, %v1722
      %v1727 = vsel %vm1325, %v1724, 0
      %v1730 = vsel %vm1325, %v1725, 0
      %1732 = vmatprep.subr.bf16.mxu0 0
      %1733 = vmatpush1.bf16.msra.mxu0 0
      %1734 = vmatprep.subr.bf16.mxu0 0
      %1735 = vmatpush1.bf16.msra.mxu0 0
      %1736 = vmatprep.subr.bf16.mxu0 0
      %1737 = vmatpush1.bf16.msra.mxu0 0
      %1738 = vmatprep.subr.bf16.mxu0 0
      %1739 = vmatpush1.bf16.msra.mxu0 0
      %1740 = vmatprep.subr.bf16.mxu0 0
      %1741 = vmatpush1.bf16.msra.mxu0 0
      %1742 = vmatprep.subr.bf16.mxu0 0
      %1743 = vmatpush1.bf16.msra.mxu0 %v1715
      %1744 = vmatprep.subr.bf16.mxu0 0
      %1745 = vmatpush1.bf16.msra.mxu0 %v1714
      %1746 = vmatprep.subr.bf16.mxu0 0
      %1747 = vmatpush1.bf16.msra.mxu0 %v1713
      %1748 = vmatprep.subr.bf16.mxu0 0
      %1749 = vmatpush2.bf16.msra.mxu0 0
      %1750 = vmatprep.subr.bf16.mxu0 0
      %1751 = vmatpush2.bf16.msra.mxu0 0
      %1752 = vmatprep.subr.bf16.mxu0 0
      %1753 = vmatpush2.bf16.msra.mxu0 0
      %1754 = vmatprep.subr.bf16.mxu0 0
      %1755 = vmatpush2.bf16.msra.mxu0 0
      %1756 = vmatprep.subr.bf16.mxu0 0
      %1757 = vmatpush2.bf16.msra.mxu0 0
      %1758 = vmatprep.subr.bf16.mxu0 0
      %1759 = vmatpush2.bf16.msra.mxu0 0
      %1760 = vmatprep.subr.bf16.mxu0 0
      %1761 = vmatpush2.bf16.msra.mxu0 0
      %1762 = vmatprep.subr.bf16.mxu0 0
      %1763 = vmatpush2.bf16.msra.mxu0 0
      %1764 = vmatprep.mubr.bf16.mxu0 0
      %1765 = vmatmul.mubr.bf16.gmra.mxu0 %v1727
      %v1766 = vpop.f32.mrf.mxu0
      %v1767 = vadd.f32 0.0, %v1766
      %v1768 = vpop.f32.mrf.mxu0
      %v1769 = vpop.f32.mrf.mxu0
      %v1770 = vadd.f32 0.0, %v1769
      %v1771 = vpop.f32.mrf.mxu0
      %1772 = vmatprep.mubr.bf16.mxu0 0
      %1773 = vmatmul.mubr.bf16.gmra.mxu0 %v1730
      %v1774 = vpop.f32.mrf.mxu0
      %v1775 = vadd.f32 0.0, %v1774
      %v1776 = vpop.f32.mrf.mxu0
      %v1777 = vpop.f32.mrf.mxu0
      %v1778 = vadd.f32 0.0, %v1777
      %v1779 = vpop.f32.mrf.mxu0
      %1780 = vdwg.mxu0
      %1782 = vset.pattern.permute.xlu0 0
      %1783 = vperm.xlu0 %1782, %v1704
      %v1784 = vpop.permute.xlu0 %1783
      %1787 = vset.pattern.permute.xlu0 0
      %1788 = vperm.xlu0 %1787, %v1705
      %v1789 = vpop.permute.xlu0 %1788
      %1792 = vset.pattern.permute.xlu0 0
      %1793 = vperm.xlu0 %1792, %v1706
      %v1794 = vpop.permute.xlu0 %1793
      %1797 = vset.pattern.permute.xlu0 0
      %1798 = vperm.xlu0 %1797, %v1707
      %v1799 = vpop.permute.xlu0 %1798
      %v1801 = vmul.f32 %v1767, %v1784
      %v1802 = vmul.f32 %v1770, %v1789
      %v1803 = vmul.f32 %v1775, %v1794
      %v1804 = vmul.f32 %v1778, %v1799
      %1806 = vset.pattern.permute.xlu0 0
      %1807 = vperm.xlu0 %1806, %v1709
      %v1808 = vpop.permute.xlu0 %1807
      %1811 = vset.pattern.permute.xlu0 0
      %1812 = vperm.xlu0 %1811, %v1710
      %v1813 = vpop.permute.xlu0 %1812
      %1816 = vset.pattern.permute.xlu0 0
      %1817 = vperm.xlu0 %1816, %v1711
      %v1818 = vpop.permute.xlu0 %1817
      %1821 = vset.pattern.permute.xlu0 0
      %1822 = vperm.xlu0 %1821, %v1712
      %v1823 = vpop.permute.xlu0 %1822
      %v1825 = vadd.f32 %v1801, %v1808
      %v1826 = vadd.f32 %v1802, %v1813
      %v1827 = vadd.f32 %v1803, %v1818
      %v1828 = vadd.f32 %v1804, %v1823
      %v1829 = vmax.f32 %v1825, 0.0
      %v1830 = vmax.f32 %v1826, 0.0
      %v1831 = vmax.f32 %v1827, 0.0
      %v1832 = vmax.f32 %v1828, 0.0
      %v1833 = vpack.c.bf16 %v1830, %v1829
      %v1834 = vpack.c.bf16 %v1832, %v1831
      %v1837 = vunpack.c.l.b16 %v750
      %v1838 = vunpack.c.h.b16 %v750
      %v1839 = vunpack.c.l.b16 %v751
      %v1840 = vunpack.c.h.b16 %v751
      %v1841 = vpack.c.b16 %v1839, %v1837
      %v1842 = vpack.c.b16 %v1840, %v1838
      %vm1845 = vcmask 130048
      %v1847 = vsel %vm1845, %v1833, 0
      %v1850 = vsel %vm1845, %v1834, 0
      %1852 = vmatprep.subr.bf16.mxu0 0
      %1853 = vmatpush1.bf16.msra.mxu0 0
      %1854 = vmatprep.subr.bf16.mxu0 0
      %1855 = vmatpush1.bf16.msra.mxu0 0
      %1856 = vmatprep.subr.bf16.mxu0 0
      %1857 = vmatpush1.bf16.msra.mxu0 0
      %1858 = vmatprep.subr.bf16.mxu0 0
      %1859 = vmatpush1.bf16.msra.mxu0 0
      %1860 = vmatprep.subr.bf16.mxu0 0
      %1861 = vmatpush1.bf16.msra.mxu0 0
      %1862 = vmatprep.subr.bf16.mxu0 0
      %1863 = vmatpush1.bf16.msra.mxu0 0
      %1864 = vmatprep.subr.bf16.mxu0 0
      %1865 = vmatpush1.bf16.msra.mxu0 0
      %1866 = vmatprep.subr.bf16.mxu0 %v1842
      %1867 = vmatpush1.bf16.msra.mxu0 %v1841
      %1868 = vmatprep.subr.bf16.mxu0 0
      %1869 = vmatpush2.bf16.msra.mxu0 0
      %1870 = vmatprep.subr.bf16.mxu0 0
      %1871 = vmatpush2.bf16.msra.mxu0 0
      %1872 = vmatprep.subr.bf16.mxu0 0
      %1873 = vmatpush2.bf16.msra.mxu0 0
      %1874 = vmatprep.subr.bf16.mxu0 0
      %1875 = vmatpush2.bf16.msra.mxu0 0
      %1876 = vmatprep.subr.bf16.mxu0 0
      %1877 = vmatpush2.bf16.msra.mxu0 0
      %1878 = vmatprep.subr.bf16.mxu0 0
      %1879 = vmatpush2.bf16.msra.mxu0 0
      %1880 = vmatprep.subr.bf16.mxu0 0
      %1881 = vmatpush2.bf16.msra.mxu0 0
      %1882 = vmatprep.subr.bf16.mxu0 0
      %1883 = vmatpush2.bf16.msra.mxu0 0
      %1884 = vmatprep.mubr.bf16.mxu0 0
      %1885 = vmatmul.mubr.bf16.gmra.mxu0 %v1847
      %v1886 = vpop.f32.mrf.mxu0
      %v1887 = vadd.f32 0.0, %v1886
      %v1888 = vpop.f32.mrf.mxu0
      %v1889 = vadd.f32 0.0, %v1888
      %v1890 = vpop.f32.mrf.mxu0
      %v1891 = vadd.f32 0.0, %v1890
      %v1892 = vpop.f32.mrf.mxu0
      %v1893 = vadd.f32 0.0, %v1892
      %1894 = vmatprep.mubr.bf16.mxu0 0
      %1895 = vmatmul.mubr.bf16.gmra.mxu0 %v1850
      %v1896 = vpop.f32.mrf.mxu0
      %v1897 = vadd.f32 0.0, %v1896
      %v1898 = vpop.f32.mrf.mxu0
      %v1899 = vadd.f32 0.0, %v1898
      %v1900 = vpop.f32.mrf.mxu0
      %v1901 = vadd.f32 0.0, %v1900
      %v1902 = vpop.f32.mrf.mxu0
      %v1903 = vadd.f32 0.0, %v1902
      %1904 = vdwg.mxu0
      %v1905 = vadd.f32 %v1441, %v1674
      %v1906 = vadd.f32 %v1442, %v1676
      %v1907 = vadd.f32 %v1443, %v1678
      %v1908 = vadd.f32 %v1444, %v1680
      %v1909 = vadd.f32 %v1445, %v1684
      %v1910 = vadd.f32 %v1446, %v1686
      %v1911 = vadd.f32 %v1447, %v1688
      %v1912 = vadd.f32 %v1448, %v1690
      %v1913 = vadd.f32 %v1905, %v1887
      %v1914 = vadd.f32 %v1906, %v1889
      %v1915 = vadd.f32 %v1907, %v1891
      %v1916 = vadd.f32 %v1908, %v1893
      %v1917 = vadd.f32 %v1909, %v1897
      %v1918 = vadd.f32 %v1910, %v1899
      %v1919 = vadd.f32 %v1911, %v1901
      %v1920 = vadd.f32 %v1912, %v1903
      %1921 = vrot.lane.b32.xlu0 %v1913, 17
      %v1922 = vpop.permute.xlu0 %1921
      %1923 = vrot.lane.b32.xlu0 %v1915, 17
      %v1924 = vpop.permute.xlu0 %1923
      %1925 = vrot.lane.b32.xlu0 %v1917, 17
      %v1926 = vpop.permute.xlu0 %1925
      %1927 = vrot.lane.b32.xlu0 %v1919, 17
      %v1928 = vpop.permute.xlu0 %1927
      %1929 = vrot.lane.b32.xlu0 %v1914, 17
      %v1930 = vpop.permute.xlu0 %1929
      %1931 = vrot.lane.b32.xlu0 %v1916, 17
      %v1932 = vpop.permute.xlu0 %1931
      %1933 = vrot.lane.b32.xlu0 %v1918, 17
      %v1934 = vpop.permute.xlu0 %1933
      %1935 = vrot.lane.b32.xlu0 %v1920, 17
      %v1936 = vpop.permute.xlu0 %1935
      %v1937 = vlaneseq
      %v1938 = vand.u32 %v1937, 127
      %vm1939 = vcmp.lt.s32.totalorder %v1938, 17
      %v1940 = vsel %vm1939, %v1922, %v1930
      %v1941 = vsel %vm1939, %v1924, %v1932
      %v1942 = vsel %vm1939, %v1926, %v1934
      %v1943 = vsel %vm1939, %v1928, %v1936
      %v1944 = vsel %vm1939, %v1930, %v1922
      %v1945 = vsel %vm1939, %v1932, %v1924
      %v1946 = vsel %vm1939, %v1934, %v1926
      %v1947 = vsel %vm1939, %v1936, %v1928
      %v1948 = vlaneseq
      %v1949 = vshrl.u32 %v1948, 7
      %v1950 = vsub.s32 0, %v1949
      %v1951 = vrot.slane %v738, %v1950
      %v1952 = vlaneseq
      %v1953 = vshrl.u32 %v1952, 7
      %v1954 = vsub.s32 0, %v1953
      %v1955 = vrot.slane %v739, %v1954
      %v1956 = vmul.f32 %v1944, %v1951
      %v1957 = vmul.f32 %v1940, %v1955
      %v1958 = vmul.f32 %v1945, %v1951
      %v1959 = vmul.f32 %v1941, %v1955
      %v1960 = vmul.f32 %v1946, %v1951
      %v1961 = vmul.f32 %v1942, %v1955
      %v1962 = vmul.f32 %v1947, %v1951
      %v1963 = vmul.f32 %v1943, %v1955
      %1964 = vrot.lane.b32.xlu0 %v1913, 16
      %v1965 = vpop.permute.xlu0 %1964
      %1966 = vrot.lane.b32.xlu0 %v1915, 16
      %v1967 = vpop.permute.xlu0 %1966
      %1968 = vrot.lane.b32.xlu0 %v1917, 16
      %v1969 = vpop.permute.xlu0 %1968
      %1970 = vrot.lane.b32.xlu0 %v1919, 16
      %v1971 = vpop.permute.xlu0 %1970
      %1972 = vrot.lane.b32.xlu0 %v1914, 16
      %v1973 = vpop.permute.xlu0 %1972
      %1974 = vrot.lane.b32.xlu0 %v1916, 16
      %v1975 = vpop.permute.xlu0 %1974
      %1976 = vrot.lane.b32.xlu0 %v1918, 16
      %v1977 = vpop.permute.xlu0 %1976
      %1978 = vrot.lane.b32.xlu0 %v1920, 16
      %v1979 = vpop.permute.xlu0 %1978
      %vm1980 = vcmp.lt.s32.totalorder %v1938, 16
      %v1981 = vsel %vm1980, %v1965, %v1973
      %v1982 = vsel %vm1980, %v1967, %v1975
      %v1983 = vsel %vm1980, %v1969, %v1977
      %v1984 = vsel %vm1980, %v1971, %v1979
      %v1985 = vsel %vm1980, %v1973, %v1965
      %v1986 = vsel %vm1980, %v1975, %v1967
      %v1987 = vsel %vm1980, %v1977, %v1969
      %v1988 = vsel %vm1980, %v1979, %v1971
      %v1989 = vlaneseq
      %v1990 = vshrl.u32 %v1989, 7
      %v1991 = vsub.s32 1, %v1990
      %v1992 = vrot.slane %v738, %v1991
      %v1993 = vlaneseq
      %v1994 = vshrl.u32 %v1993, 7
      %v1995 = vsub.s32 1, %v1994
      %v1996 = vrot.slane %v739, %v1995
      %v1997 = vmul.f32 %v1985, %v1992
      %v1998 = vmul.f32 %v1981, %v1996
      %v1999 = vmul.f32 %v1986, %v1992
      %v2000 = vmul.f32 %v1982, %v1996
      %v2001 = vmul.f32 %v1987, %v1992
      %v2002 = vmul.f32 %v1983, %v1996
      %v2003 = vmul.f32 %v1988, %v1992
      %v2004 = vmul.f32 %v1984, %v1996
      %2005 = vrot.lane.b32.xlu0 %v1913, 15
      %v2006 = vpop.permute.xlu0 %2005
      %2007 = vrot.lane.b32.xlu0 %v1915, 15
      %v2008 = vpop.permute.xlu0 %2007
      %2009 = vrot.lane.b32.xlu0 %v1917, 15
      %v2010 = vpop.permute.xlu0 %2009
      %2011 = vrot.lane.b32.xlu0 %v1919, 15
      %v2012 = vpop.permute.xlu0 %2011
      %2013 = vrot.lane.b32.xlu0 %v1914, 15
      %v2014 = vpop.permute.xlu0 %2013
      %2015 = vrot.lane.b32.xlu0 %v1916, 15
      %v2016 = vpop.permute.xlu0 %2015
      %2017 = vrot.lane.b32.xlu0 %v1918, 15
      %v2018 = vpop.permute.xlu0 %2017
      %2019 = vrot.lane.b32.xlu0 %v1920, 15
      %v2020 = vpop.permute.xlu0 %2019
      %vm2021 = vcmp.lt.s32.totalorder %v1938, 15
      %v2022 = vsel %vm2021, %v2006, %v2014
      %v2023 = vsel %vm2021, %v2008, %v2016
      %v2024 = vsel %vm2021, %v2010, %v2018
      %v2025 = vsel %vm2021, %v2012, %v2020
      %v2026 = vsel %vm2021, %v2014, %v2006
      %v2027 = vsel %vm2021, %v2016, %v2008
      %v2028 = vsel %vm2021, %v2018, %v2010
      %v2029 = vsel %vm2021, %v2020, %v2012
      %v2030 = vlaneseq
      %v2031 = vshrl.u32 %v2030, 7
      %v2032 = vsub.s32 2, %v2031
      %v2033 = vrot.slane %v738, %v2032
      %v2034 = vlaneseq
      %v2035 = vshrl.u32 %v2034, 7
      %v2036 = vsub.s32 2, %v2035
      %v2037 = vrot.slane %v739, %v2036
      %v2038 = vmul.f32 %v2026, %v2033
      %v2039 = vmul.f32 %v2022, %v2037
      %v2040 = vmul.f32 %v2027, %v2033
      %v2041 = vmul.f32 %v2023, %v2037
      %v2042 = vmul.f32 %v2028, %v2033
      %v2043 = vmul.f32 %v2024, %v2037
      %v2044 = vmul.f32 %v2029, %v2033
      %v2045 = vmul.f32 %v2025, %v2037
      %2046 = vrot.lane.b32.xlu0 %v1913, 1
      %v2047 = vpop.permute.xlu0 %2046
      %2048 = vrot.lane.b32.xlu0 %v1915, 1
      %v2049 = vpop.permute.xlu0 %2048
      %2050 = vrot.lane.b32.xlu0 %v1917, 1
      %v2051 = vpop.permute.xlu0 %2050
      %2052 = vrot.lane.b32.xlu0 %v1919, 1
      %v2053 = vpop.permute.xlu0 %2052
      %2054 = vrot.lane.b32.xlu0 %v1914, 1
      %v2055 = vpop.permute.xlu0 %2054
      %2056 = vrot.lane.b32.xlu0 %v1916, 1
      %v2057 = vpop.permute.xlu0 %2056
      %2058 = vrot.lane.b32.xlu0 %v1918, 1
      %v2059 = vpop.permute.xlu0 %2058
      %2060 = vrot.lane.b32.xlu0 %v1920, 1
      %v2061 = vpop.permute.xlu0 %2060
      %vm2062 = vcmp.lt.s32.totalorder %v1938, 1
      %v2063 = vsel %vm2062, %v2047, %v2055
      %v2064 = vsel %vm2062, %v2049, %v2057
      %v2065 = vsel %vm2062, %v2051, %v2059
      %v2066 = vsel %vm2062, %v2053, %v2061
      %v2067 = vsel %vm2062, %v2055, %v2047
      %v2068 = vsel %vm2062, %v2057, %v2049
      %v2069 = vsel %vm2062, %v2059, %v2051
      %v2070 = vsel %vm2062, %v2061, %v2053
      %v2071 = vlaneseq
      %v2072 = vshrl.u32 %v2071, 7
      %v2073 = vsub.s32 3, %v2072
      %v2074 = vrot.slane %v738, %v2073
      %v2075 = vlaneseq
      %v2076 = vshrl.u32 %v2075, 7
      %v2077 = vsub.s32 3, %v2076
      %v2078 = vrot.slane %v739, %v2077
      %v2079 = vmul.f32 %v2067, %v2074
      %v2080 = vmul.f32 %v2063, %v2078
      %v2081 = vmul.f32 %v2068, %v2074
      %v2082 = vmul.f32 %v2064, %v2078
      %v2083 = vmul.f32 %v2069, %v2074
      %v2084 = vmul.f32 %v2065, %v2078
      %v2085 = vmul.f32 %v2070, %v2074
      %v2086 = vmul.f32 %v2066, %v2078
      %2087 = vrot.lane.b32.xlu0 %v1913, 127
      %v2088 = vpop.permute.xlu0 %2087
      %2089 = vrot.lane.b32.xlu0 %v1915, 127
      %v2090 = vpop.permute.xlu0 %2089
      %2091 = vrot.lane.b32.xlu0 %v1917, 127
      %v2092 = vpop.permute.xlu0 %2091
      %2093 = vrot.lane.b32.xlu0 %v1919, 127
      %v2094 = vpop.permute.xlu0 %2093
      %2095 = vrot.lane.b32.xlu0 %v1914, 127
      %v2096 = vpop.permute.xlu0 %2095
      %2097 = vrot.lane.b32.xlu0 %v1916, 127
      %v2098 = vpop.permute.xlu0 %2097
      %2099 = vrot.lane.b32.xlu0 %v1918, 127
      %v2100 = vpop.permute.xlu0 %2099
      %2101 = vrot.lane.b32.xlu0 %v1920, 127
      %v2102 = vpop.permute.xlu0 %2101
      %vm2103 = vcmp.lt.s32.totalorder %v1938, 127
      %v2104 = vsel %vm2103, %v2088, %v2096
      %v2105 = vsel %vm2103, %v2090, %v2098
      %v2106 = vsel %vm2103, %v2092, %v2100
      %v2107 = vsel %vm2103, %v2094, %v2102
      %v2108 = vsel %vm2103, %v2096, %v2088
      %v2109 = vsel %vm2103, %v2098, %v2090
      %v2110 = vsel %vm2103, %v2100, %v2092
      %v2111 = vsel %vm2103, %v2102, %v2094
      %v2112 = vlaneseq
      %v2113 = vshrl.u32 %v2112, 7
      %v2114 = vsub.s32 5, %v2113
      %v2115 = vrot.slane %v738, %v2114
      %v2116 = vlaneseq
      %v2117 = vshrl.u32 %v2116, 7
      %v2118 = vsub.s32 5, %v2117
      %v2119 = vrot.slane %v739, %v2118
      %v2120 = vmul.f32 %v2104, %v2115
      %v2121 = vmul.f32 %v2108, %v2119
      %v2122 = vmul.f32 %v2105, %v2115
      %v2123 = vmul.f32 %v2109, %v2119
      %v2124 = vmul.f32 %v2106, %v2115
      %v2125 = vmul.f32 %v2110, %v2119
      %v2126 = vmul.f32 %v2107, %v2115
      %v2127 = vmul.f32 %v2111, %v2119
      %2128 = vrot.lane.b32.xlu0 %v1913, 113
      %v2129 = vpop.permute.xlu0 %2128
      %2130 = vrot.lane.b32.xlu0 %v1915, 113
      %v2131 = vpop.permute.xlu0 %2130
      %2132 = vrot.lane.b32.xlu0 %v1917, 113
      %v2133 = vpop.permute.xlu0 %2132
      %2134 = vrot.lane.b32.xlu0 %v1919, 113
      %v2135 = vpop.permute.xlu0 %2134
      %2136 = vrot.lane.b32.xlu0 %v1914, 113
      %v2137 = vpop.permute.xlu0 %2136
      %2138 = vrot.lane.b32.xlu0 %v1916, 113
      %v2139 = vpop.permute.xlu0 %2138
      %2140 = vrot.lane.b32.xlu0 %v1918, 113
      %v2141 = vpop.permute.xlu0 %2140
      %2142 = vrot.lane.b32.xlu0 %v1920, 113
      %v2143 = vpop.permute.xlu0 %2142
      %vm2144 = vcmp.lt.s32.totalorder %v1938, 113
      %v2145 = vsel %vm2144, %v2129, %v2137
      %v2146 = vsel %vm2144, %v2131, %v2139
      %v2147 = vsel %vm2144, %v2133, %v2141
      %v2148 = vsel %vm2144, %v2135, %v2143
      %v2149 = vsel %vm2144, %v2137, %v2129
      %v2150 = vsel %vm2144, %v2139, %v2131
      %v2151 = vsel %vm2144, %v2141, %v2133
      %v2152 = vsel %vm2144, %v2143, %v2135
      %v2153 = vlaneseq
      %v2154 = vshrl.u32 %v2153, 7
      %v2155 = vsub.s32 6, %v2154
      %v2156 = vrot.slane %v738, %v2155
      %v2157 = vlaneseq
      %v2158 = vshrl.u32 %v2157, 7
      %v2159 = vsub.s32 6, %v2158
      %v2160 = vrot.slane %v739, %v2159
      %v2161 = vmul.f32 %v2145, %v2156
      %v2162 = vmul.f32 %v2149, %v2160
      %v2163 = vmul.f32 %v2146, %v2156
      %v2164 = vmul.f32 %v2150, %v2160
      %v2165 = vmul.f32 %v2147, %v2156
      %v2166 = vmul.f32 %v2151, %v2160
      %v2167 = vmul.f32 %v2148, %v2156
      %v2168 = vmul.f32 %v2152, %v2160
      %2169 = vrot.lane.b32.xlu0 %v1913, 112
      %v2170 = vpop.permute.xlu0 %2169
      %2171 = vrot.lane.b32.xlu0 %v1915, 112
      %v2172 = vpop.permute.xlu0 %2171
      %2173 = vrot.lane.b32.xlu0 %v1917, 112
      %v2174 = vpop.permute.xlu0 %2173
      %2175 = vrot.lane.b32.xlu0 %v1919, 112
      %v2176 = vpop.permute.xlu0 %2175
      %2177 = vrot.lane.b32.xlu0 %v1914, 112
      %v2178 = vpop.permute.xlu0 %2177
      %2179 = vrot.lane.b32.xlu0 %v1916, 112
      %v2180 = vpop.permute.xlu0 %2179
      %2181 = vrot.lane.b32.xlu0 %v1918, 112
      %v2182 = vpop.permute.xlu0 %2181
      %2183 = vrot.lane.b32.xlu0 %v1920, 112
      %v2184 = vpop.permute.xlu0 %2183
      %vm2185 = vcmp.lt.s32.totalorder %v1938, 112
      %v2186 = vsel %vm2185, %v2170, %v2178
      %v2187 = vsel %vm2185, %v2172, %v2180
      %v2188 = vsel %vm2185, %v2174, %v2182
      %v2189 = vsel %vm2185, %v2176, %v2184
      %v2190 = vsel %vm2185, %v2178, %v2170
      %v2191 = vsel %vm2185, %v2180, %v2172
      %v2192 = vsel %vm2185, %v2182, %v2174
      %v2193 = vsel %vm2185, %v2184, %v2176
      %v2194 = vlaneseq
      %v2195 = vshrl.u32 %v2194, 7
      %v2196 = vsub.s32 7, %v2195
      %v2197 = vrot.slane %v738, %v2196
      %v2198 = vlaneseq
      %v2199 = vshrl.u32 %v2198, 7
      %v2200 = vsub.s32 7, %v2199
      %v2201 = vrot.slane %v739, %v2200
      %v2202 = vmul.f32 %v2186, %v2197
      %v2203 = vmul.f32 %v2190, %v2201
      %v2204 = vmul.f32 %v2187, %v2197
      %v2205 = vmul.f32 %v2191, %v2201
      %v2206 = vmul.f32 %v2188, %v2197
      %v2207 = vmul.f32 %v2192, %v2201
      %v2208 = vmul.f32 %v2189, %v2197
      %v2209 = vmul.f32 %v2193, %v2201
      %2210 = vrot.lane.b32.xlu0 %v1913, 111
      %v2211 = vpop.permute.xlu0 %2210
      %2212 = vrot.lane.b32.xlu0 %v1915, 111
      %v2213 = vpop.permute.xlu0 %2212
      %2214 = vrot.lane.b32.xlu0 %v1917, 111
      %v2215 = vpop.permute.xlu0 %2214
      %2216 = vrot.lane.b32.xlu0 %v1919, 111
      %v2217 = vpop.permute.xlu0 %2216
      %2218 = vrot.lane.b32.xlu0 %v1914, 111
      %v2219 = vpop.permute.xlu0 %2218
      %2220 = vrot.lane.b32.xlu0 %v1916, 111
      %v2221 = vpop.permute.xlu0 %2220
      %2222 = vrot.lane.b32.xlu0 %v1918, 111
      %v2223 = vpop.permute.xlu0 %2222
      %2224 = vrot.lane.b32.xlu0 %v1920, 111
      %v2225 = vpop.permute.xlu0 %2224
      %vm2226 = vcmp.lt.s32.totalorder %v1938, 111
      %v2227 = vsel %vm2226, %v2211, %v2219
      %v2228 = vsel %vm2226, %v2213, %v2221
      %v2229 = vsel %vm2226, %v2215, %v2223
      %v2230 = vsel %vm2226, %v2217, %v2225
      %v2231 = vsel %vm2226, %v2219, %v2211
      %v2232 = vsel %vm2226, %v2221, %v2213
      %v2233 = vsel %vm2226, %v2223, %v2215
      %v2234 = vsel %vm2226, %v2225, %v2217
      %v2235 = vlaneseq
      %v2236 = vshrl.u32 %v2235, 7
      %v2237 = vsub.s32 0, %v2236
      %v2238 = vrot.slane %v740, %v2237
      %v2239 = vlaneseq
      %v2240 = vshrl.u32 %v2239, 7
      %v2241 = vsub.s32 0, %v2240
      %v2242 = vrot.slane %v741, %v2241
      %v2243 = vmul.f32 %v2227, %v2238
      %v2244 = vmul.f32 %v2231, %v2242
      %v2245 = vmul.f32 %v2228, %v2238
      %v2246 = vmul.f32 %v2232, %v2242
      %v2247 = vmul.f32 %v2229, %v2238
      %v2248 = vmul.f32 %v2233, %v2242
      %v2249 = vmul.f32 %v2230, %v2238
      %v2250 = vmul.f32 %v2234, %v2242
      %v2251 = vpack.c.bf16 %v1958, %v1956
      %v2252 = vpack.c.bf16 %v1959, %v1957
      %v2253 = vpack.c.bf16 %v1962, %v1960
      %v2254 = vpack.c.bf16 %v1963, %v1961
      %v2255 = vpack.c.bf16 %v1999, %v1997
      %v2256 = vpack.c.bf16 %v2000, %v1998
      %v2257 = vpack.c.bf16 %v2003, %v2001
      %v2258 = vpack.c.bf16 %v2004, %v2002
      %v2259 = vpack.c.bf16 %v2040, %v2038
      %v2260 = vpack.c.bf16 %v2041, %v2039
      %v2261 = vpack.c.bf16 %v2044, %v2042
      %v2262 = vpack.c.bf16 %v2045, %v2043
      %v2263 = vpack.c.bf16 %v2081, %v2079
      %v2264 = vpack.c.bf16 %v2082, %v2080
      %v2265 = vpack.c.bf16 %v2085, %v2083
      %v2266 = vpack.c.bf16 %v2086, %v2084
      %v2267 = vpack.c.bf16 %v1915, %v1913
      %v2268 = vpack.c.bf16 %v1916, %v1914
      %v2269 = vpack.c.bf16 %v1919, %v1917
      %v2270 = vpack.c.bf16 %v1920, %v1918
      %v2271 = vpack.c.bf16 %v2122, %v2120
      %v2272 = vpack.c.bf16 %v2123, %v2121
      %v2273 = vpack.c.bf16 %v2126, %v2124
      %v2274 = vpack.c.bf16 %v2127, %v2125
      %v2275 = vpack.c.bf16 %v2163, %v2161
      %v2276 = vpack.c.bf16 %v2164, %v2162
      %v2277 = vpack.c.bf16 %v2167, %v2165
      %v2278 = vpack.c.bf16 %v2168, %v2166
      %v2279 = vpack.c.bf16 %v2204, %v2202
      %v2280 = vpack.c.bf16 %v2205, %v2203
      %v2281 = vpack.c.bf16 %v2208, %v2206
      %v2282 = vpack.c.bf16 %v2209, %v2207
      %v2283 = vpack.c.bf16 %v2245, %v2243
      %v2284 = vpack.c.bf16 %v2246, %v2244
      %v2285 = vpack.c.bf16 %v2249, %v2247
      %v2286 = vpack.c.bf16 %v2250, %v2248
      %v2295 = vunpack.c.l.b16 %v755
      %v2296 = vunpack.c.h.b16 %v755
      %v2297 = vunpack.c.l.b16 %v756
      %v2298 = vunpack.c.l.b16 %v757
      %v2299 = vunpack.c.h.b16 %v757
      %v2300 = vunpack.c.l.b16 %v758
      %v2301 = vunpack.c.l.b16 %v759
      %v2302 = vunpack.c.h.b16 %v759
      %v2303 = vunpack.c.l.b16 %v760
      %v2304 = vunpack.c.l.b16 %v761
      %v2305 = vunpack.c.h.b16 %v761
      %v2306 = vunpack.c.l.b16 %v762
      %v2307 = vpack.c.b16 %v2298, %v2295
      %v2308 = vpack.c.b16 %v2299, %v2296
      %v2309 = vpack.c.b16 %v2300, %v2297
      %v2310 = vpack.c.b16 %v2304, %v2301
      %v2311 = vpack.c.b16 %v2305, %v2302
      %v2312 = vpack.c.b16 %v2306, %v2303
      %vm2317 = vcmask 261120
      %v2319 = vsel %vm2317, %v2309, 0
      %v2322 = vsel %vm2317, %v2312, 0
      %2324 = vmatprep.subr.bf16.mxu0 %v2266
      %2325 = vmatpush1.bf16.msra.mxu0 %v2265
      %2326 = vmatprep.subr.bf16.mxu0 %v2264
      %2327 = vmatpush1.bf16.msra.mxu0 %v2263
      %2328 = vmatprep.subr.bf16.mxu0 %v2262
      %2329 = vmatpush1.bf16.msra.mxu0 %v2261
      %2330 = vmatprep.subr.bf16.mxu0 %v2260
      %2331 = vmatpush1.bf16.msra.mxu0 %v2259
      %2332 = vmatprep.subr.bf16.mxu0 %v2258
      %2333 = vmatpush1.bf16.msra.mxu0 %v2257
      %2334 = vmatprep.subr.bf16.mxu0 %v2256
      %2335 = vmatpush1.bf16.msra.mxu0 %v2255
      %2336 = vmatprep.subr.bf16.mxu0 %v2254
      %2337 = vmatpush1.bf16.msra.mxu0 %v2253
      %2338 = vmatprep.subr.bf16.mxu0 %v2252
      %2339 = vmatpush1.bf16.msra.mxu0 %v2251
      %2340 = vmatprep.subr.bf16.mxu0 %v2282
      %2341 = vmatpush2.bf16.msra.mxu0 %v2281
      %2342 = vmatprep.subr.bf16.mxu0 %v2280
      %2343 = vmatpush2.bf16.msra.mxu0 %v2279
      %2344 = vmatprep.subr.bf16.mxu0 %v2278
      %2345 = vmatpush2.bf16.msra.mxu0 %v2277
      %2346 = vmatprep.subr.bf16.mxu0 %v2276
      %2347 = vmatpush2.bf16.msra.mxu0 %v2275
      %2348 = vmatprep.subr.bf16.mxu0 %v2274
      %2349 = vmatpush2.bf16.msra.mxu0 %v2273
      %2350 = vmatprep.subr.bf16.mxu0 %v2272
      %2351 = vmatpush2.bf16.msra.mxu0 %v2271
      %2352 = vmatprep.subr.bf16.mxu0 %v2270
      %2353 = vmatpush2.bf16.msra.mxu0 %v2269
      %2354 = vmatprep.subr.bf16.mxu0 %v2268
      %2355 = vmatpush2.bf16.msra.mxu0 %v2267
      %2356 = vmatprep.mubr.bf16.mxu0 %v2308
      %2357 = vmatmul.mubr.bf16.gmra.mxu0 %v2307
      %v2358 = vpop.f32.mrf.mxu0
      %v2359 = vadd.f32 0.0, %v2358
      %v2360 = vpop.f32.mrf.mxu0
      %v2361 = vadd.f32 0.0, %v2360
      %v2362 = vpop.f32.mrf.mxu0
      %v2363 = vadd.f32 0.0, %v2362
      %v2364 = vpop.f32.mrf.mxu0
      %v2365 = vadd.f32 0.0, %v2364
      %2366 = vmatprep.mubr.bf16.mxu0 %v2311
      %2367 = vmatmul.mubr.bf16.gmra.mxu0 %v2310
      %v2368 = vpop.f32.mrf.mxu0
      %v2369 = vadd.f32 0.0, %v2368
      %v2370 = vpop.f32.mrf.mxu0
      %v2371 = vadd.f32 0.0, %v2370
      %v2372 = vpop.f32.mrf.mxu0
      %v2373 = vadd.f32 0.0, %v2372
      %v2374 = vpop.f32.mrf.mxu0
      %v2375 = vadd.f32 0.0, %v2374
      %2376 = vdwg.mxu0
      %2377 = vmatprep.subr.bf16.mxu0 0
      %2378 = vmatpush1.bf16.msra.mxu0 0
      %2379 = vmatprep.subr.bf16.mxu0 0
      %2380 = vmatpush1.bf16.msra.mxu0 0
      %2381 = vmatprep.subr.bf16.mxu0 0
      %2382 = vmatpush1.bf16.msra.mxu0 0
      %2383 = vmatprep.subr.bf16.mxu0 0
      %2384 = vmatpush1.bf16.msra.mxu0 0
      %2385 = vmatprep.subr.bf16.mxu0 0
      %2386 = vmatpush1.bf16.msra.mxu0 0
      %2387 = vmatprep.subr.bf16.mxu0 0
      %2388 = vmatpush1.bf16.msra.mxu0 0
      %2389 = vmatprep.subr.bf16.mxu0 %v2286
      %2390 = vmatpush1.bf16.msra.mxu0 %v2285
      %2391 = vmatprep.subr.bf16.mxu0 %v2284
      %2392 = vmatpush1.bf16.msra.mxu0 %v2283
      %2393 = vmatprep.subr.bf16.mxu0 0
      %2394 = vmatpush2.bf16.msra.mxu0 0
      %2395 = vmatprep.subr.bf16.mxu0 0
      %2396 = vmatpush2.bf16.msra.mxu0 0
      %2397 = vmatprep.subr.bf16.mxu0 0
      %2398 = vmatpush2.bf16.msra.mxu0 0
      %2399 = vmatprep.subr.bf16.mxu0 0
      %2400 = vmatpush2.bf16.msra.mxu0 0
      %2401 = vmatprep.subr.bf16.mxu0 0
      %2402 = vmatpush2.bf16.msra.mxu0 0
      %2403 = vmatprep.subr.bf16.mxu0 0
      %2404 = vmatpush2.bf16.msra.mxu0 0
      %2405 = vmatprep.subr.bf16.mxu0 0
      %2406 = vmatpush2.bf16.msra.mxu0 0
      %2407 = vmatprep.subr.bf16.mxu0 0
      %2408 = vmatpush2.bf16.msra.mxu0 0
      %2409 = vmatprep.mubr.bf16.mxu0 0
      %2410 = vmatmul.mubr.bf16.gmra.mxu0 %v2319
      %v2411 = vpop.f32.mrf.mxu0
      %v2412 = vadd.f32 %v2359, %v2411
      %v2413 = vpop.f32.mrf.mxu0
      %v2414 = vadd.f32 %v2361, %v2413
      %v2415 = vpop.f32.mrf.mxu0
      %v2416 = vadd.f32 %v2363, %v2415
      %v2417 = vpop.f32.mrf.mxu0
      %v2418 = vadd.f32 %v2365, %v2417
      %2419 = vmatprep.mubr.bf16.mxu0 0
      %2420 = vmatmul.mubr.bf16.gmra.mxu0 %v2322
      %v2421 = vpop.f32.mrf.mxu0
      %v2422 = vadd.f32 %v2369, %v2421
      %v2423 = vpop.f32.mrf.mxu0
      %v2424 = vadd.f32 %v2371, %v2423
      %v2425 = vpop.f32.mrf.mxu0
      %v2426 = vadd.f32 %v2373, %v2425
      %v2427 = vpop.f32.mrf.mxu0
      %v2428 = vadd.f32 %v2375, %v2427
      %2429 = vdwg.mxu0
      %2431 = vset.pattern.permute.xlu0 0
      %2432 = vperm.xlu0 %2431, %v1277
      %v2433 = vpop.permute.xlu0 %2432
      %2436 = vset.pattern.permute.xlu0 0
      %2437 = vperm.xlu0 %2436, %v1278
      %v2438 = vpop.permute.xlu0 %2437
      %2441 = vset.pattern.permute.xlu0 0
      %2442 = vperm.xlu0 %2441, %v1279
      %v2443 = vpop.permute.xlu0 %2442
      %2446 = vset.pattern.permute.xlu0 0
      %2447 = vperm.xlu0 %2446, %v1280
      %v2448 = vpop.permute.xlu0 %2447
      %v2450 = vmul.f32 %v2412, %v2433
      %v2451 = vmul.f32 %v2414, %v2433
      %v2452 = vmul.f32 %v2416, %v2438
      %v2453 = vmul.f32 %v2418, %v2438
      %v2454 = vmul.f32 %v2422, %v2443
      %v2455 = vmul.f32 %v2424, %v2443
      %v2456 = vmul.f32 %v2426, %v2448
      %v2457 = vmul.f32 %v2428, %v2448
      %2459 = vset.pattern.permute.xlu0 0
      %2460 = vperm.xlu0 %2459, %v1281
      %v2461 = vpop.permute.xlu0 %2460
      %2464 = vset.pattern.permute.xlu0 0
      %2465 = vperm.xlu0 %2464, %v1282
      %v2466 = vpop.permute.xlu0 %2465
      %2469 = vset.pattern.permute.xlu0 0
      %2470 = vperm.xlu0 %2469, %v1283
      %v2471 = vpop.permute.xlu0 %2470
      %2474 = vset.pattern.permute.xlu0 0
      %2475 = vperm.xlu0 %2474, %v1284
      %v2476 = vpop.permute.xlu0 %2475
      %v2478 = vadd.f32 %v2450, %v2461
      %v2479 = vadd.f32 %v2451, %v2461
      %v2480 = vadd.f32 %v2452, %v2466
      %v2481 = vadd.f32 %v2453, %v2466
      %v2482 = vadd.f32 %v2454, %v2471
      %v2483 = vadd.f32 %v2455, %v2471
      %v2484 = vadd.f32 %v2456, %v2476
      %v2485 = vadd.f32 %v2457, %v2476
      %v2486 = vmax.f32 %v2478, 0.0
      %v2487 = vmax.f32 %v2479, 0.0
      %v2488 = vmax.f32 %v2480, 0.0
      %v2489 = vmax.f32 %v2481, 0.0
      %v2490 = vmax.f32 %v2482, 0.0
      %v2491 = vmax.f32 %v2483, 0.0
      %v2492 = vmax.f32 %v2484, 0.0
      %v2493 = vmax.f32 %v2485, 0.0
      %v2494 = vld [vmem:[%s726] sm:$0xff]
      %v2495 = vld [vmem:[%s726 + $0x8] sm:$0xff]
      %v2496 = vld [vmem:[%s726 + $0x10] sm:$0xff]
      %v2497 = vld [vmem:[%s726 + $0x18] sm:$0xff]
      %v2498 = vld [vmem:[%s726 + $0x20] sm:$0xff]
      %v2499 = vld [vmem:[%s726 + $0x28] sm:$0xff]
      %v2500 = vld [vmem:[%s726 + $0x30] sm:$0xff]
      %v2501 = vld [vmem:[%s726 + $0x38] sm:$0xff]
      %v2502 = vld [vmem:[%s726 + $0x40] sm:$0xff]
      %v2503 = vld [vmem:[%s726 + $0x48] sm:$0xff]
      %v2504 = vld [vmem:[%s726 + $0x50] sm:$0xff]
      %v2505 = vld [vmem:[%s726 + $0x58] sm:$0xff]
      %v2506 = vld [vmem:[%s726 + $0x60] sm:$0xff]
      %v2507 = vld [vmem:[%s726 + $0x68] sm:$0xff]
      %v2508 = vld [vmem:[%s726 + $0x70] sm:$0xff]
      %v2509 = vld [vmem:[%s726 + $0x78] sm:$0xff]
      %v2510 = vld [vmem:[%s726 + $0x80] sm:$0xff]
      %v2511 = vld [vmem:[%s726 + $0x88] sm:$0xff]
      %v2512 = vld [vmem:[%s726 + $0x90] sm:$0xff]
      %v2513 = vld [vmem:[%s726 + $0x98] sm:$0xff]
      %v2514 = vld [vmem:[%s726 + $0xa0] sm:$0xff]
      %v2515 = vld [vmem:[%s726 + $0xa8] sm:$0xff]
      %v2516 = vld [vmem:[%s726 + $0xb0] sm:$0xff]
      %v2517 = vld [vmem:[%s726 + $0xb8] sm:$0xff]
      %v2518 = vld [vmem:[%s8] sm:$0xff]
      %v2519 = vld [vmem:[%s8 + $0x8] sm:$0xff]
      %v2520 = vld [vmem:[%s8 + $0x10] sm:$0xff]
      %v2521 = vld [vmem:[%s8 + $0x18] sm:$0xff]
      %v2522 = vld [vmem:[%s9] sm:$0xff]
      %v2523 = vld [vmem:[%s9 + $0x8] sm:$0xff]
      %v2524 = vld [vmem:[%s9 + $0x10] sm:$0xff]
      %v2525 = vld [vmem:[%s9 + $0x18] sm:$0xff]
      %v2526 = vld [vmem:[%s10] sm:$0xff]
      %v2527 = vld [vmem:[%s10 + $0x8] sm:$0xff]
      %v2528 = vld [vmem:[%s10 + $0x10] sm:$0xff]
      %v2529 = vld [vmem:[%s10 + $0x18] sm:$0xff]
      %v2530 = vpack.c.bf16 %v2495, %v2494
      %v2531 = vpack.c.bf16 %v2497, %v2496
      %v2532 = vpack.c.bf16 %v2499, %v2498
      %v2533 = vpack.c.bf16 %v2501, %v2500
      %v2534 = vpack.c.bf16 %v2503, %v2502
      %v2535 = vpack.c.bf16 %v2505, %v2504
      %v2536 = vpack.c.bf16 %v2507, %v2506
      %v2537 = vpack.c.bf16 %v2509, %v2508
      %v2538 = vpack.c.bf16 %v2511, %v2510
      %v2539 = vpack.c.bf16 %v2513, %v2512
      %v2540 = vpack.c.bf16 %v2515, %v2514
      %v2541 = vpack.c.bf16 %v2517, %v2516
      %v2546 = vunpack.c.l.b16 %v2518
      %v2547 = vunpack.c.h.b16 %v2518
      %v2548 = vunpack.c.l.b16 %v2519
      %v2549 = vunpack.c.h.b16 %v2519
      %v2550 = vunpack.c.l.b16 %v2520
      %v2551 = vunpack.c.h.b16 %v2520
      %v2552 = vunpack.c.l.b16 %v2521
      %v2553 = vunpack.c.h.b16 %v2521
      %v2554 = vpack.c.b16 %v2548, %v2546
      %v2555 = vpack.c.b16 %v2549, %v2547
      %v2556 = vpack.c.b16 %v2552, %v2550
      %v2557 = vpack.c.b16 %v2553, %v2551
      %v2561 = vsel %vm1632, %v2555, 0
      %v2564 = vsel %vm1632, %v2557, 0
      %2566 = vmatprep.subr.bf16.mxu0 0
      %2567 = vmatpush1.bf16.msra.mxu0 %v2537
      %2568 = vmatprep.subr.bf16.mxu0 0
      %2569 = vmatpush1.bf16.msra.mxu0 %v2536
      %2570 = vmatprep.subr.bf16.mxu0 0
      %2571 = vmatpush1.bf16.msra.mxu0 %v2535
      %2572 = vmatprep.subr.bf16.mxu0 0
      %2573 = vmatpush1.bf16.msra.mxu0 %v2534
      %2574 = vmatprep.subr.bf16.mxu0 0
      %2575 = vmatpush1.bf16.msra.mxu0 %v2533
      %2576 = vmatprep.subr.bf16.mxu0 0
      %2577 = vmatpush1.bf16.msra.mxu0 %v2532
      %2578 = vmatprep.subr.bf16.mxu0 0
      %2579 = vmatpush1.bf16.msra.mxu0 %v2531
      %2580 = vmatprep.subr.bf16.mxu0 0
      %2581 = vmatpush1.bf16.msra.mxu0 %v2530
      %2582 = vmatprep.subr.bf16.mxu0 0
      %2583 = vmatpush2.bf16.msra.mxu0 0
      %2584 = vmatprep.subr.bf16.mxu0 0
      %2585 = vmatpush2.bf16.msra.mxu0 0
      %2586 = vmatprep.subr.bf16.mxu0 0
      %2587 = vmatpush2.bf16.msra.mxu0 0
      %2588 = vmatprep.subr.bf16.mxu0 0
      %2589 = vmatpush2.bf16.msra.mxu0 0
      %2590 = vmatprep.subr.bf16.mxu0 0
      %2591 = vmatpush2.bf16.msra.mxu0 %v2541
      %2592 = vmatprep.subr.bf16.mxu0 0
      %2593 = vmatpush2.bf16.msra.mxu0 %v2540
      %2594 = vmatprep.subr.bf16.mxu0 0
      %2595 = vmatpush2.bf16.msra.mxu0 %v2539
      %2596 = vmatprep.subr.bf16.mxu0 0
      %2597 = vmatpush2.bf16.msra.mxu0 %v2538
      %2598 = vmatprep.mubr.bf16.mxu0 %v2561
      %2599 = vmatmul.mubr.bf16.gmra.mxu0 %v2554
      %v2600 = vpop.f32.mrf.mxu0
      %v2601 = vadd.f32 0.0, %v2600
      %v2602 = vpop.f32.mrf.mxu0
      %v2603 = vpop.f32.mrf.mxu0
      %v2604 = vadd.f32 0.0, %v2603
      %v2605 = vpop.f32.mrf.mxu0
      %2606 = vmatprep.mubr.bf16.mxu0 %v2564
      %2607 = vmatmul.mubr.bf16.gmra.mxu0 %v2556
      %v2608 = vpop.f32.mrf.mxu0
      %v2609 = vadd.f32 0.0, %v2608
      %v2610 = vpop.f32.mrf.mxu0
      %v2611 = vpop.f32.mrf.mxu0
      %v2612 = vadd.f32 0.0, %v2611
      %v2613 = vpop.f32.mrf.mxu0
      %2614 = vdwg.mxu0
      %2616 = vset.pattern.permute.xlu0 0
      %2617 = vperm.xlu0 %2616, %v2522
      %v2618 = vpop.permute.xlu0 %2617
      %2621 = vset.pattern.permute.xlu0 0
      %2622 = vperm.xlu0 %2621, %v2523
      %v2623 = vpop.permute.xlu0 %2622
      %2626 = vset.pattern.permute.xlu0 0
      %2627 = vperm.xlu0 %2626, %v2524
      %v2628 = vpop.permute.xlu0 %2627
      %2631 = vset.pattern.permute.xlu0 0
      %2632 = vperm.xlu0 %2631, %v2525
      %v2633 = vpop.permute.xlu0 %2632
      %v2635 = vmul.f32 %v2601, %v2618
      %v2636 = vmul.f32 %v2604, %v2623
      %v2637 = vmul.f32 %v2609, %v2628
      %v2638 = vmul.f32 %v2612, %v2633
      %2640 = vset.pattern.permute.xlu0 0
      %2641 = vperm.xlu0 %2640, %v2526
      %v2642 = vpop.permute.xlu0 %2641
      %2645 = vset.pattern.permute.xlu0 0
      %2646 = vperm.xlu0 %2645, %v2527
      %v2647 = vpop.permute.xlu0 %2646
      %2650 = vset.pattern.permute.xlu0 0
      %2651 = vperm.xlu0 %2650, %v2528
      %v2652 = vpop.permute.xlu0 %2651
      %2655 = vset.pattern.permute.xlu0 0
      %2656 = vperm.xlu0 %2655, %v2529
      %v2657 = vpop.permute.xlu0 %2656
      %v2659 = vadd.f32 %v2635, %v2642
      %v2660 = vadd.f32 %v2636, %v2647
      %v2661 = vadd.f32 %v2637, %v2652
      %v2662 = vadd.f32 %v2638, %v2657
      %v2663 = vmax.f32 %v2659, 0.0
      %v2664 = vmax.f32 %v2660, 0.0
      %v2665 = vmax.f32 %v2661, 0.0
      %v2666 = vmax.f32 %v2662, 0.0
      %v2667 = vpack.c.bf16 %v2664, %v2663
      %v2668 = vpack.c.bf16 %v2666, %v2665
      %v2671 = vunpack.c.l.b16 %v752
      %v2672 = vunpack.c.h.b16 %v752
      %v2673 = vunpack.c.l.b16 %v753
      %v2674 = vunpack.c.h.b16 %v753
      %v2675 = vpack.c.b16 %v2673, %v2671
      %v2676 = vpack.c.b16 %v2674, %v2672
      %v2680 = vsel %vm1845, %v2667, 0
      %v2683 = vsel %vm1845, %v2668, 0
      %2685 = vmatprep.subr.bf16.mxu0 0
      %2686 = vmatpush1.bf16.msra.mxu0 0
      %2687 = vmatprep.subr.bf16.mxu0 0
      %2688 = vmatpush1.bf16.msra.mxu0 0
      %2689 = vmatprep.subr.bf16.mxu0 0
      %2690 = vmatpush1.bf16.msra.mxu0 0
      %2691 = vmatprep.subr.bf16.mxu0 0
      %2692 = vmatpush1.bf16.msra.mxu0 0
      %2693 = vmatprep.subr.bf16.mxu0 0
      %2694 = vmatpush1.bf16.msra.mxu0 0
      %2695 = vmatprep.subr.bf16.mxu0 0
      %2696 = vmatpush1.bf16.msra.mxu0 0
      %2697 = vmatprep.subr.bf16.mxu0 0
      %2698 = vmatpush1.bf16.msra.mxu0 0
      %2699 = vmatprep.subr.bf16.mxu0 %v2676
      %2700 = vmatpush1.bf16.msra.mxu0 %v2675
      %2701 = vmatprep.subr.bf16.mxu0 0
      %2702 = vmatpush2.bf16.msra.mxu0 0
      %2703 = vmatprep.subr.bf16.mxu0 0
      %2704 = vmatpush2.bf16.msra.mxu0 0
      %2705 = vmatprep.subr.bf16.mxu0 0
      %2706 = vmatpush2.bf16.msra.mxu0 0
      %2707 = vmatprep.subr.bf16.mxu0 0
      %2708 = vmatpush2.bf16.msra.mxu0 0
      %2709 = vmatprep.subr.bf16.mxu0 0
      %2710 = vmatpush2.bf16.msra.mxu0 0
      %2711 = vmatprep.subr.bf16.mxu0 0
      %2712 = vmatpush2.bf16.msra.mxu0 0
      %2713 = vmatprep.subr.bf16.mxu0 0
      %2714 = vmatpush2.bf16.msra.mxu0 0
      %2715 = vmatprep.subr.bf16.mxu0 0
      %2716 = vmatpush2.bf16.msra.mxu0 0
      %2717 = vmatprep.mubr.bf16.mxu0 0
      %2718 = vmatmul.mubr.bf16.gmra.mxu0 %v2680
      %v2719 = vpop.f32.mrf.mxu0
      %v2720 = vadd.f32 0.0, %v2719
      %v2721 = vpop.f32.mrf.mxu0
      %v2722 = vadd.f32 0.0, %v2721
      %v2723 = vpop.f32.mrf.mxu0
      %v2724 = vadd.f32 0.0, %v2723
      %v2725 = vpop.f32.mrf.mxu0
      %v2726 = vadd.f32 0.0, %v2725
      %2727 = vmatprep.mubr.bf16.mxu0 0
      %2728 = vmatmul.mubr.bf16.gmra.mxu0 %v2683
      %v2729 = vpop.f32.mrf.mxu0
      %v2730 = vadd.f32 0.0, %v2729
      %v2731 = vpop.f32.mrf.mxu0
      %v2732 = vadd.f32 0.0, %v2731
      %v2733 = vpop.f32.mrf.mxu0
      %v2734 = vadd.f32 0.0, %v2733
      %v2735 = vpop.f32.mrf.mxu0
      %v2736 = vadd.f32 0.0, %v2735
      %2737 = vdwg.mxu0
      %v2738 = vld [vmem:[%s731] sm:$0xff]
      %v2739 = vld [vmem:[%s731 + $0x8] sm:$0xff]
      %v2740 = vld [vmem:[%s731 + $0x10] sm:$0xff]
      %v2741 = vld [vmem:[%s731 + $0x18] sm:$0xff]
      %v2742 = vld [vmem:[%s731 + $0x20] sm:$0xff]
      %v2743 = vld [vmem:[%s731 + $0x28] sm:$0xff]
      %v2744 = vld [vmem:[%s731 + $0x30] sm:$0xff]
      %v2745 = vld [vmem:[%s731 + $0x38] sm:$0xff]
      %v2746 = vld [vmem:[%s731 + $0x40] sm:$0xff]
      %v2747 = vld [vmem:[%s731 + $0x48] sm:$0xff]
      %v2748 = vld [vmem:[%s731 + $0x50] sm:$0xff]
      %v2749 = vld [vmem:[%s731 + $0x58] sm:$0xff]
      %v2750 = vld [vmem:[%s731 + $0x60] sm:$0xff]
      %v2751 = vld [vmem:[%s731 + $0x68] sm:$0xff]
      %v2752 = vld [vmem:[%s731 + $0x70] sm:$0xff]
      %v2753 = vld [vmem:[%s731 + $0x78] sm:$0xff]
      %v2754 = vld [vmem:[%s731 + $0x80] sm:$0xff]
      %v2755 = vld [vmem:[%s731 + $0x88] sm:$0xff]
      %v2756 = vld [vmem:[%s731 + $0x90] sm:$0xff]
      %v2757 = vld [vmem:[%s731 + $0x98] sm:$0xff]
      %v2758 = vld [vmem:[%s731 + $0xa0] sm:$0xff]
      %v2759 = vld [vmem:[%s731 + $0xa8] sm:$0xff]
      %v2760 = vld [vmem:[%s731 + $0xb0] sm:$0xff]
      %v2761 = vld [vmem:[%s731 + $0xb8] sm:$0xff]
      %s2762 = scalar_lea.vmem %s8, 32
      %v2763 = vld [vmem:[%s2762] sm:$0xff]
      %v2764 = vld [vmem:[%s2762 + $0x8] sm:$0xff]
      %v2765 = vld [vmem:[%s2762 + $0x10] sm:$0xff]
      %v2766 = vld [vmem:[%s2762 + $0x18] sm:$0xff]
      %s2767 = scalar_lea.vmem %s9, 32
      %v2768 = vld [vmem:[%s2767] sm:$0xff]
      %v2769 = vld [vmem:[%s2767 + $0x8] sm:$0xff]
      %v2770 = vld [vmem:[%s2767 + $0x10] sm:$0xff]
      %v2771 = vld [vmem:[%s2767 + $0x18] sm:$0xff]
      %s2772 = scalar_lea.vmem %s10, 32
      %v2773 = vld [vmem:[%s2772] sm:$0xff]
      %v2774 = vld [vmem:[%s2772 + $0x8] sm:$0xff]
      %v2775 = vld [vmem:[%s2772 + $0x10] sm:$0xff]
      %v2776 = vld [vmem:[%s2772 + $0x18] sm:$0xff]
      %v2777 = vpack.c.bf16 %v2739, %v2738
      %v2778 = vpack.c.bf16 %v2741, %v2740
      %v2779 = vpack.c.bf16 %v2743, %v2742
      %v2780 = vpack.c.bf16 %v2745, %v2744
      %v2781 = vpack.c.bf16 %v2747, %v2746
      %v2782 = vpack.c.bf16 %v2749, %v2748
      %v2783 = vpack.c.bf16 %v2751, %v2750
      %v2784 = vpack.c.bf16 %v2753, %v2752
      %v2785 = vpack.c.bf16 %v2755, %v2754
      %v2786 = vpack.c.bf16 %v2757, %v2756
      %v2787 = vpack.c.bf16 %v2759, %v2758
      %v2788 = vpack.c.bf16 %v2761, %v2760
      %v2793 = vunpack.c.l.b16 %v2763
      %v2794 = vunpack.c.h.b16 %v2763
      %v2795 = vunpack.c.l.b16 %v2764
      %v2796 = vunpack.c.h.b16 %v2764
      %v2797 = vunpack.c.l.b16 %v2765
      %v2798 = vunpack.c.h.b16 %v2765
      %v2799 = vunpack.c.l.b16 %v2766
      %v2800 = vunpack.c.h.b16 %v2766
      %v2801 = vpack.c.b16 %v2795, %v2793
      %v2802 = vpack.c.b16 %v2796, %v2794
      %v2803 = vpack.c.b16 %v2799, %v2797
      %v2804 = vpack.c.b16 %v2800, %v2798
      %v2808 = vsel %vm1632, %v2802, 0
      %v2811 = vsel %vm1632, %v2804, 0
      %2813 = vmatprep.subr.bf16.mxu0 0
      %2814 = vmatpush1.bf16.msra.mxu0 %v2784
      %2815 = vmatprep.subr.bf16.mxu0 0
      %2816 = vmatpush1.bf16.msra.mxu0 %v2783
      %2817 = vmatprep.subr.bf16.mxu0 0
      %2818 = vmatpush1.bf16.msra.mxu0 %v2782
      %2819 = vmatprep.subr.bf16.mxu0 0
      %2820 = vmatpush1.bf16.msra.mxu0 %v2781
      %2821 = vmatprep.subr.bf16.mxu0 0
      %2822 = vmatpush1.bf16.msra.mxu0 %v2780
      %2823 = vmatprep.subr.bf16.mxu0 0
      %2824 = vmatpush1.bf16.msra.mxu0 %v2779
      %2825 = vmatprep.subr.bf16.mxu0 0
      %2826 = vmatpush1.bf16.msra.mxu0 %v2778
      %2827 = vmatprep.subr.bf16.mxu0 0
      %2828 = vmatpush1.bf16.msra.mxu0 %v2777
      %2829 = vmatprep.subr.bf16.mxu0 0
      %2830 = vmatpush2.bf16.msra.mxu0 0
      %2831 = vmatprep.subr.bf16.mxu0 0
      %2832 = vmatpush2.bf16.msra.mxu0 0
      %2833 = vmatprep.subr.bf16.mxu0 0
      %2834 = vmatpush2.bf16.msra.mxu0 0
      %2835 = vmatprep.subr.bf16.mxu0 0
      %2836 = vmatpush2.bf16.msra.mxu0 0
      %2837 = vmatprep.subr.bf16.mxu0 0
      %2838 = vmatpush2.bf16.msra.mxu0 %v2788
      %2839 = vmatprep.subr.bf16.mxu0 0
      %2840 = vmatpush2.bf16.msra.mxu0 %v2787
      %2841 = vmatprep.subr.bf16.mxu0 0
      %2842 = vmatpush2.bf16.msra.mxu0 %v2786
      %2843 = vmatprep.subr.bf16.mxu0 0
      %2844 = vmatpush2.bf16.msra.mxu0 %v2785
      %2845 = vmatprep.mubr.bf16.mxu0 %v2808
      %2846 = vmatmul.mubr.bf16.gmra.mxu0 %v2801
      %v2847 = vpop.f32.mrf.mxu0
      %v2848 = vadd.f32 0.0, %v2847
      %v2849 = vpop.f32.mrf.mxu0
      %v2850 = vpop.f32.mrf.mxu0
      %v2851 = vadd.f32 0.0, %v2850
      %v2852 = vpop.f32.mrf.mxu0
      %2853 = vmatprep.mubr.bf16.mxu0 %v2811
      %2854 = vmatmul.mubr.bf16.gmra.mxu0 %v2803
      %v2855 = vpop.f32.mrf.mxu0
      %v2856 = vadd.f32 0.0, %v2855
      %v2857 = vpop.f32.mrf.mxu0
      %v2858 = vpop.f32.mrf.mxu0
      %v2859 = vadd.f32 0.0, %v2858
      %v2860 = vpop.f32.mrf.mxu0
      %2861 = vdwg.mxu0
      %2863 = vset.pattern.permute.xlu0 0
      %2864 = vperm.xlu0 %2863, %v2768
      %v2865 = vpop.permute.xlu0 %2864
      %2868 = vset.pattern.permute.xlu0 0
      %2869 = vperm.xlu0 %2868, %v2769
      %v2870 = vpop.permute.xlu0 %2869
      %2873 = vset.pattern.permute.xlu0 0
      %2874 = vperm.xlu0 %2873, %v2770
      %v2875 = vpop.permute.xlu0 %2874
      %2878 = vset.pattern.permute.xlu0 0
      %2879 = vperm.xlu0 %2878, %v2771
      %v2880 = vpop.permute.xlu0 %2879
      %v2882 = vmul.f32 %v2848, %v2865
      %v2883 = vmul.f32 %v2851, %v2870
      %v2884 = vmul.f32 %v2856, %v2875
      %v2885 = vmul.f32 %v2859, %v2880
      %2887 = vset.pattern.permute.xlu0 0
      %2888 = vperm.xlu0 %2887, %v2773
      %v2889 = vpop.permute.xlu0 %2888
      %2892 = vset.pattern.permute.xlu0 0
      %2893 = vperm.xlu0 %2892, %v2774
      %v2894 = vpop.permute.xlu0 %2893
      %2897 = vset.pattern.permute.xlu0 0
      %2898 = vperm.xlu0 %2897, %v2775
      %v2899 = vpop.permute.xlu0 %2898
      %2902 = vset.pattern.permute.xlu0 0
      %2903 = vperm.xlu0 %2902, %v2776
      %v2904 = vpop.permute.xlu0 %2903
      %v2906 = vadd.f32 %v2882, %v2889
      %v2907 = vadd.f32 %v2883, %v2894
      %v2908 = vadd.f32 %v2884, %v2899
      %v2909 = vadd.f32 %v2885, %v2904
      %v2910 = vmax.f32 %v2906, 0.0
      %v2911 = vmax.f32 %v2907, 0.0
      %v2912 = vmax.f32 %v2908, 0.0
      %v2913 = vmax.f32 %v2909, 0.0
      %v2914 = vpack.c.bf16 %v2911, %v2910
      %v2915 = vpack.c.bf16 %v2913, %v2912
      %v2917 = vunpack.c.l.b16 %v754
      %v2918 = vunpack.c.h.b16 %v754
      %v2919 = vpack.c.b16 %v2917, %v2917
      %v2920 = vpack.c.b16 %v2918, %v2918
      %vm2921 = vcmask 64512
      %v2923 = vsel %vm2921, %v2914, 0
      %v2926 = vsel %vm2921, %v2915, 0
      %vm2928 = vcmask 1043456
      %v2930 = vsel %vm2928, %v2919, 0
      %v2933 = vsel %vm2928, %v2920, 0
      %2935 = vmatprep.subr.bf16.mxu0 0
      %2936 = vmatpush1.bf16.msra.mxu0 0
      %2937 = vmatprep.subr.bf16.mxu0 0
      %2938 = vmatpush1.bf16.msra.mxu0 0
      %2939 = vmatprep.subr.bf16.mxu0 0
      %2940 = vmatpush1.bf16.msra.mxu0 0
      %2941 = vmatprep.subr.bf16.mxu0 0
      %2942 = vmatpush1.bf16.msra.mxu0 0
      %2943 = vmatprep.subr.bf16.mxu0 0
      %2944 = vmatpush1.bf16.msra.mxu0 0
      %2945 = vmatprep.subr.bf16.mxu0 0
      %2946 = vmatpush1.bf16.msra.mxu0 0
      %2947 = vmatprep.subr.bf16.mxu0 0
      %2948 = vmatpush1.bf16.msra.mxu0 0
      %2949 = vmatprep.subr.bf16.mxu0 %v2933
      %2950 = vmatpush1.bf16.msra.mxu0 %v2930
      %2951 = vmatprep.subr.bf16.mxu0 0
      %2952 = vmatpush2.bf16.msra.mxu0 0
      %2953 = vmatprep.subr.bf16.mxu0 0
      %2954 = vmatpush2.bf16.msra.mxu0 0
      %2955 = vmatprep.subr.bf16.mxu0 0
      %2956 = vmatpush2.bf16.msra.mxu0 0
      %2957 = vmatprep.subr.bf16.mxu0 0
      %2958 = vmatpush2.bf16.msra.mxu0 0
      %2959 = vmatprep.subr.bf16.mxu0 0
      %2960 = vmatpush2.bf16.msra.mxu0 0
      %2961 = vmatprep.subr.bf16.mxu0 0
      %2962 = vmatpush2.bf16.msra.mxu0 0
      %2963 = vmatprep.subr.bf16.mxu0 0
      %2964 = vmatpush2.bf16.msra.mxu0 0
      %2965 = vmatprep.subr.bf16.mxu0 0
      %2966 = vmatpush2.bf16.msra.mxu0 0
      %2967 = vmatprep.mubr.bf16.mxu0 0
      %2968 = vmatmul.mubr.bf16.gmra.mxu0 %v2923
      %v2969 = vpop.f32.mrf.mxu0
      %v2970 = vadd.f32 0.0, %v2969
      %v2971 = vpop.f32.mrf.mxu0
      %v2972 = vadd.f32 0.0, %v2971
      %v2973 = vpop.f32.mrf.mxu0
      %v2974 = vadd.f32 0.0, %v2973
      %v2975 = vpop.f32.mrf.mxu0
      %v2976 = vadd.f32 0.0, %v2975
      %2977 = vmatprep.mubr.bf16.mxu0 0
      %2978 = vmatmul.mubr.bf16.gmra.mxu0 %v2926
      %v2979 = vpop.f32.mrf.mxu0
      %v2980 = vadd.f32 0.0, %v2979
      %v2981 = vpop.f32.mrf.mxu0
      %v2982 = vadd.f32 0.0, %v2981
      %v2983 = vpop.f32.mrf.mxu0
      %v2984 = vadd.f32 0.0, %v2983
      %v2985 = vpop.f32.mrf.mxu0
      %v2986 = vadd.f32 0.0, %v2985
      %2987 = vdwg.mxu0
      %v2988 = vadd.f32 %v2486, %v2720
      %v2989 = vadd.f32 %v2487, %v2722
      %v2990 = vadd.f32 %v2488, %v2724
      %v2991 = vadd.f32 %v2489, %v2726
      %v2992 = vadd.f32 %v2490, %v2730
      %v2993 = vadd.f32 %v2491, %v2732
      %v2994 = vadd.f32 %v2492, %v2734
      %v2995 = vadd.f32 %v2493, %v2736
      %v2996 = vadd.f32 %v2988, %v2970
      %v2997 = vadd.f32 %v2989, %v2972
      %v2998 = vadd.f32 %v2990, %v2974
      %v2999 = vadd.f32 %v2991, %v2976
      %v3000 = vadd.f32 %v2992, %v2980
      %v3001 = vadd.f32 %v2993, %v2982
      %v3002 = vadd.f32 %v2994, %v2984
      %v3003 = vadd.f32 %v2995, %v2986
      %3004 = vrot.lane.b32.xlu0 %v2996, 17
      %v3005 = vpop.permute.xlu0 %3004
      %3006 = vrot.lane.b32.xlu0 %v2998, 17
      %v3007 = vpop.permute.xlu0 %3006
      %3008 = vrot.lane.b32.xlu0 %v3000, 17
      %v3009 = vpop.permute.xlu0 %3008
      %3010 = vrot.lane.b32.xlu0 %v3002, 17
      %v3011 = vpop.permute.xlu0 %3010
      %3012 = vrot.lane.b32.xlu0 %v2997, 17
      %v3013 = vpop.permute.xlu0 %3012
      %3014 = vrot.lane.b32.xlu0 %v2999, 17
      %v3015 = vpop.permute.xlu0 %3014
      %3016 = vrot.lane.b32.xlu0 %v3001, 17
      %v3017 = vpop.permute.xlu0 %3016
      %3018 = vrot.lane.b32.xlu0 %v3003, 17
      %v3019 = vpop.permute.xlu0 %3018
      %v3020 = vsel %vm1939, %v3005, %v3013
      %v3021 = vsel %vm1939, %v3007, %v3015
      %v3022 = vsel %vm1939, %v3009, %v3017
      %v3023 = vsel %vm1939, %v3011, %v3019
      %v3024 = vsel %vm1939, %v3013, %v3005
      %v3025 = vsel %vm1939, %v3015, %v3007
      %v3026 = vsel %vm1939, %v3017, %v3009
      %v3027 = vsel %vm1939, %v3019, %v3011
      %v3028 = vmul.f32 %v3024, %v1951
      %v3029 = vmul.f32 %v3020, %v1955
      %v3030 = vmul.f32 %v3025, %v1951
      %v3031 = vmul.f32 %v3021, %v1955
      %v3032 = vmul.f32 %v3026, %v1951
      %v3033 = vmul.f32 %v3022, %v1955
      %v3034 = vmul.f32 %v3027, %v1951
      %v3035 = vmul.f32 %v3023, %v1955
      %3036 = vrot.lane.b32.xlu0 %v2996, 16
      %v3037 = vpop.permute.xlu0 %3036
      %3038 = vrot.lane.b32.xlu0 %v2998, 16
      %v3039 = vpop.permute.xlu0 %3038
      %3040 = vrot.lane.b32.xlu0 %v3000, 16
      %v3041 = vpop.permute.xlu0 %3040
      %3042 = vrot.lane.b32.xlu0 %v3002, 16
      %v3043 = vpop.permute.xlu0 %3042
      %3044 = vrot.lane.b32.xlu0 %v2997, 16
      %v3045 = vpop.permute.xlu0 %3044
      %3046 = vrot.lane.b32.xlu0 %v2999, 16
      %v3047 = vpop.permute.xlu0 %3046
      %3048 = vrot.lane.b32.xlu0 %v3001, 16
      %v3049 = vpop.permute.xlu0 %3048
      %3050 = vrot.lane.b32.xlu0 %v3003, 16
      %v3051 = vpop.permute.xlu0 %3050
      %v3052 = vsel %vm1980, %v3037, %v3045
      %v3053 = vsel %vm1980, %v3039, %v3047
      %v3054 = vsel %vm1980, %v3041, %v3049
      %v3055 = vsel %vm1980, %v3043, %v3051
      %v3056 = vsel %vm1980, %v3045, %v3037
      %v3057 = vsel %vm1980, %v3047, %v3039
      %v3058 = vsel %vm1980, %v3049, %v3041
      %v3059 = vsel %vm1980, %v3051, %v3043
      %v3060 = vmul.f32 %v3056, %v1992
      %v3061 = vmul.f32 %v3052, %v1996
      %v3062 = vmul.f32 %v3057, %v1992
      %v3063 = vmul.f32 %v3053, %v1996
      %v3064 = vmul.f32 %v3058, %v1992
      %v3065 = vmul.f32 %v3054, %v1996
      %v3066 = vmul.f32 %v3059, %v1992
      %v3067 = vmul.f32 %v3055, %v1996
      %3068 = vrot.lane.b32.xlu0 %v2996, 15
      %v3069 = vpop.permute.xlu0 %3068
      %3070 = vrot.lane.b32.xlu0 %v2998, 15
      %v3071 = vpop.permute.xlu0 %3070
      %3072 = vrot.lane.b32.xlu0 %v3000, 15
      %v3073 = vpop.permute.xlu0 %3072
      %3074 = vrot.lane.b32.xlu0 %v3002, 15
      %v3075 = vpop.permute.xlu0 %3074
      %3076 = vrot.lane.b32.xlu0 %v2997, 15
      %v3077 = vpop.permute.xlu0 %3076
      %3078 = vrot.lane.b32.xlu0 %v2999, 15
      %v3079 = vpop.permute.xlu0 %3078
      %3080 = vrot.lane.b32.xlu0 %v3001, 15
      %v3081 = vpop.permute.xlu0 %3080
      %3082 = vrot.lane.b32.xlu0 %v3003, 15
      %v3083 = vpop.permute.xlu0 %3082
      %v3084 = vsel %vm2021, %v3069, %v3077
      %v3085 = vsel %vm2021, %v3071, %v3079
      %v3086 = vsel %vm2021, %v3073, %v3081
      %v3087 = vsel %vm2021, %v3075, %v3083
      %v3088 = vsel %vm2021, %v3077, %v3069
      %v3089 = vsel %vm2021, %v3079, %v3071
      %v3090 = vsel %vm2021, %v3081, %v3073
      %v3091 = vsel %vm2021, %v3083, %v3075
      %v3092 = vmul.f32 %v3088, %v2033
      %v3093 = vmul.f32 %v3084, %v2037
      %v3094 = vmul.f32 %v3089, %v2033
      %v3095 = vmul.f32 %v3085, %v2037
      %v3096 = vmul.f32 %v3090, %v2033
      %v3097 = vmul.f32 %v3086, %v2037
      %v3098 = vmul.f32 %v3091, %v2033
      %v3099 = vmul.f32 %v3087, %v2037
      %3100 = vrot.lane.b32.xlu0 %v2996, 1
      %v3101 = vpop.permute.xlu0 %3100
      %3102 = vrot.lane.b32.xlu0 %v2998, 1
      %v3103 = vpop.permute.xlu0 %3102
      %3104 = vrot.lane.b32.xlu0 %v3000, 1
      %v3105 = vpop.permute.xlu0 %3104
      %3106 = vrot.lane.b32.xlu0 %v3002, 1
      %v3107 = vpop.permute.xlu0 %3106
      %3108 = vrot.lane.b32.xlu0 %v2997, 1
      %v3109 = vpop.permute.xlu0 %3108
      %3110 = vrot.lane.b32.xlu0 %v2999, 1
      %v3111 = vpop.permute.xlu0 %3110
      %3112 = vrot.lane.b32.xlu0 %v3001, 1
      %v3113 = vpop.permute.xlu0 %3112
      %3114 = vrot.lane.b32.xlu0 %v3003, 1
      %v3115 = vpop.permute.xlu0 %3114
      %v3116 = vsel %vm2062, %v3101, %v3109
      %v3117 = vsel %vm2062, %v3103, %v3111
      %v3118 = vsel %vm2062, %v3105, %v3113
      %v3119 = vsel %vm2062, %v3107, %v3115
      %v3120 = vsel %vm2062, %v3109, %v3101
      %v3121 = vsel %vm2062, %v3111, %v3103
      %v3122 = vsel %vm2062, %v3113, %v3105
      %v3123 = vsel %vm2062, %v3115, %v3107
      %v3124 = vmul.f32 %v3120, %v2074
      %v3125 = vmul.f32 %v3116, %v2078
      %v3126 = vmul.f32 %v3121, %v2074
      %v3127 = vmul.f32 %v3117, %v2078
      %v3128 = vmul.f32 %v3122, %v2074
      %v3129 = vmul.f32 %v3118, %v2078
      %v3130 = vmul.f32 %v3123, %v2074
      %v3131 = vmul.f32 %v3119, %v2078
      %3132 = vrot.lane.b32.xlu0 %v2996, 127
      %v3133 = vpop.permute.xlu0 %3132
      %3134 = vrot.lane.b32.xlu0 %v2998, 127
      %v3135 = vpop.permute.xlu0 %3134
      %3136 = vrot.lane.b32.xlu0 %v3000, 127
      %v3137 = vpop.permute.xlu0 %3136
      %3138 = vrot.lane.b32.xlu0 %v3002, 127
      %v3139 = vpop.permute.xlu0 %3138
      %3140 = vrot.lane.b32.xlu0 %v2997, 127
      %v3141 = vpop.permute.xlu0 %3140
      %3142 = vrot.lane.b32.xlu0 %v2999, 127
      %v3143 = vpop.permute.xlu0 %3142
      %3144 = vrot.lane.b32.xlu0 %v3001, 127
      %v3145 = vpop.permute.xlu0 %3144
      %3146 = vrot.lane.b32.xlu0 %v3003, 127
      %v3147 = vpop.permute.xlu0 %3146
      %v3148 = vsel %vm2103, %v3133, %v3141
      %v3149 = vsel %vm2103, %v3135, %v3143
      %v3150 = vsel %vm2103, %v3137, %v3145
      %v3151 = vsel %vm2103, %v3139, %v3147
      %v3152 = vsel %vm2103, %v3141, %v3133
      %v3153 = vsel %vm2103, %v3143, %v3135
      %v3154 = vsel %vm2103, %v3145, %v3137
      %v3155 = vsel %vm2103, %v3147, %v3139
      %v3156 = vmul.f32 %v3148, %v2115
      %v3157 = vmul.f32 %v3152, %v2119
      %v3158 = vmul.f32 %v3149, %v2115
      %v3159 = vmul.f32 %v3153, %v2119
      %v3160 = vmul.f32 %v3150, %v2115
      %v3161 = vmul.f32 %v3154, %v2119
      %v3162 = vmul.f32 %v3151, %v2115
      %v3163 = vmul.f32 %v3155, %v2119
      %3164 = vrot.lane.b32.xlu0 %v2996, 113
      %v3165 = vpop.permute.xlu0 %3164
      %3166 = vrot.lane.b32.xlu0 %v2998, 113
      %v3167 = vpop.permute.xlu0 %3166
      %3168 = vrot.lane.b32.xlu0 %v3000, 113
      %v3169 = vpop.permute.xlu0 %3168
      %3170 = vrot.lane.b32.xlu0 %v3002, 113
      %v3171 = vpop.permute.xlu0 %3170
      %3172 = vrot.lane.b32.xlu0 %v2997, 113
      %v3173 = vpop.permute.xlu0 %3172
      %3174 = vrot.lane.b32.xlu0 %v2999, 113
      %v3175 = vpop.permute.xlu0 %3174
      %3176 = vrot.lane.b32.xlu0 %v3001, 113
      %v3177 = vpop.permute.xlu0 %3176
      %3178 = vrot.lane.b32.xlu0 %v3003, 113
      %v3179 = vpop.permute.xlu0 %3178
      %v3180 = vsel %vm2144, %v3165, %v3173
      %v3181 = vsel %vm2144, %v3167, %v3175
      %v3182 = vsel %vm2144, %v3169, %v3177
      %v3183 = vsel %vm2144, %v3171, %v3179
      %v3184 = vsel %vm2144, %v3173, %v3165
      %v3185 = vsel %vm2144, %v3175, %v3167
      %v3186 = vsel %vm2144, %v3177, %v3169
      %v3187 = vsel %vm2144, %v3179, %v3171
      %v3188 = vmul.f32 %v3180, %v2156
      %v3189 = vmul.f32 %v3184, %v2160
      %v3190 = vmul.f32 %v3181, %v2156
      %v3191 = vmul.f32 %v3185, %v2160
      %v3192 = vmul.f32 %v3182, %v2156
      %v3193 = vmul.f32 %v3186, %v2160
      %v3194 = vmul.f32 %v3183, %v2156
      %v3195 = vmul.f32 %v3187, %v2160
      %3196 = vrot.lane.b32.xlu0 %v2996, 112
      %v3197 = vpop.permute.xlu0 %3196
      %3198 = vrot.lane.b32.xlu0 %v2998, 112
      %v3199 = vpop.permute.xlu0 %3198
      %3200 = vrot.lane.b32.xlu0 %v3000, 112
      %v3201 = vpop.permute.xlu0 %3200
      %3202 = vrot.lane.b32.xlu0 %v3002, 112
      %v3203 = vpop.permute.xlu0 %3202
      %3204 = vrot.lane.b32.xlu0 %v2997, 112
      %v3205 = vpop.permute.xlu0 %3204
      %3206 = vrot.lane.b32.xlu0 %v2999, 112
      %v3207 = vpop.permute.xlu0 %3206
      %3208 = vrot.lane.b32.xlu0 %v3001, 112
      %v3209 = vpop.permute.xlu0 %3208
      %3210 = vrot.lane.b32.xlu0 %v3003, 112
      %v3211 = vpop.permute.xlu0 %3210
      %v3212 = vsel %vm2185, %v3197, %v3205
      %v3213 = vsel %vm2185, %v3199, %v3207
      %v3214 = vsel %vm2185, %v3201, %v3209
      %v3215 = vsel %vm2185, %v3203, %v3211
      %v3216 = vsel %vm2185, %v3205, %v3197
      %v3217 = vsel %vm2185, %v3207, %v3199
      %v3218 = vsel %vm2185, %v3209, %v3201
      %v3219 = vsel %vm2185, %v3211, %v3203
      %v3220 = vmul.f32 %v3212, %v2197
      %v3221 = vmul.f32 %v3216, %v2201
      %v3222 = vmul.f32 %v3213, %v2197
      %v3223 = vmul.f32 %v3217, %v2201
      %v3224 = vmul.f32 %v3214, %v2197
      %v3225 = vmul.f32 %v3218, %v2201
      %v3226 = vmul.f32 %v3215, %v2197
      %v3227 = vmul.f32 %v3219, %v2201
      %3228 = vrot.lane.b32.xlu0 %v2996, 111
      %v3229 = vpop.permute.xlu0 %3228
      %3230 = vrot.lane.b32.xlu0 %v2998, 111
      %v3231 = vpop.permute.xlu0 %3230
      %3232 = vrot.lane.b32.xlu0 %v3000, 111
      %v3233 = vpop.permute.xlu0 %3232
      %3234 = vrot.lane.b32.xlu0 %v3002, 111
      %v3235 = vpop.permute.xlu0 %3234
      %3236 = vrot.lane.b32.xlu0 %v2997, 111
      %v3237 = vpop.permute.xlu0 %3236
      %3238 = vrot.lane.b32.xlu0 %v2999, 111
      %v3239 = vpop.permute.xlu0 %3238
      %3240 = vrot.lane.b32.xlu0 %v3001, 111
      %v3241 = vpop.permute.xlu0 %3240
      %3242 = vrot.lane.b32.xlu0 %v3003, 111
      %v3243 = vpop.permute.xlu0 %3242
      %v3244 = vsel %vm2226, %v3229, %v3237
      %v3245 = vsel %vm2226, %v3231, %v3239
      %v3246 = vsel %vm2226, %v3233, %v3241
      %v3247 = vsel %vm2226, %v3235, %v3243
      %v3248 = vsel %vm2226, %v3237, %v3229
      %v3249 = vsel %vm2226, %v3239, %v3231
      %v3250 = vsel %vm2226, %v3241, %v3233
      %v3251 = vsel %vm2226, %v3243, %v3235
      %v3252 = vmul.f32 %v3244, %v2238
      %v3253 = vmul.f32 %v3248, %v2242
      %v3254 = vmul.f32 %v3245, %v2238
      %v3255 = vmul.f32 %v3249, %v2242
      %v3256 = vmul.f32 %v3246, %v2238
      %v3257 = vmul.f32 %v3250, %v2242
      %v3258 = vmul.f32 %v3247, %v2238
      %v3259 = vmul.f32 %v3251, %v2242
      %v3260 = vpack.c.bf16 %v3030, %v3028
      %v3261 = vpack.c.bf16 %v3031, %v3029
      %v3262 = vpack.c.bf16 %v3034, %v3032
      %v3263 = vpack.c.bf16 %v3035, %v3033
      %v3264 = vpack.c.bf16 %v3062, %v3060
      %v3265 = vpack.c.bf16 %v3063, %v3061
      %v3266 = vpack.c.bf16 %v3066, %v3064
      %v3267 = vpack.c.bf16 %v3067, %v3065
      %v3268 = vpack.c.bf16 %v3094, %v3092
      %v3269 = vpack.c.bf16 %v3095, %v3093
      %v3270 = vpack.c.bf16 %v3098, %v3096
      %v3271 = vpack.c.bf16 %v3099, %v3097
      %v3272 = vpack.c.bf16 %v3126, %v3124
      %v3273 = vpack.c.bf16 %v3127, %v3125
      %v3274 = vpack.c.bf16 %v3130, %v3128
      %v3275 = vpack.c.bf16 %v3131, %v3129
      %v3276 = vpack.c.bf16 %v2998, %v2996
      %v3277 = vpack.c.bf16 %v2999, %v2997
      %v3278 = vpack.c.bf16 %v3002, %v3000
      %v3279 = vpack.c.bf16 %v3003, %v3001
      %v3280 = vpack.c.bf16 %v3158, %v3156
      %v3281 = vpack.c.bf16 %v3159, %v3157
      %v3282 = vpack.c.bf16 %v3162, %v3160
      %v3283 = vpack.c.bf16 %v3163, %v3161
      %v3284 = vpack.c.bf16 %v3190, %v3188
      %v3285 = vpack.c.bf16 %v3191, %v3189
      %v3286 = vpack.c.bf16 %v3194, %v3192
      %v3287 = vpack.c.bf16 %v3195, %v3193
      %v3288 = vpack.c.bf16 %v3222, %v3220
      %v3289 = vpack.c.bf16 %v3223, %v3221
      %v3290 = vpack.c.bf16 %v3226, %v3224
      %v3291 = vpack.c.bf16 %v3227, %v3225
      %v3292 = vpack.c.bf16 %v3254, %v3252
      %v3293 = vpack.c.bf16 %v3255, %v3253
      %v3294 = vpack.c.bf16 %v3258, %v3256
      %v3295 = vpack.c.bf16 %v3259, %v3257
      %v3298 = vunpack.c.l.b16 %v763
      %v3299 = vunpack.c.h.b16 %v763
      %v3300 = vunpack.c.l.b16 %v764
      %v3301 = vpack.c.b16 %v3298, %v3298
      %v3302 = vpack.c.b16 %v3299, %v3299
      %v3303 = vpack.c.b16 %v3300, %v3300
      %v3307 = vsel %vm2317, %v3303, 0
      %3309 = vmatprep.subr.bf16.mxu0 %v3275
      %3310 = vmatpush1.bf16.msra.mxu0 %v3274
      %3311 = vmatprep.subr.bf16.mxu0 %v3273
      %3312 = vmatpush1.bf16.msra.mxu0 %v3272
      %3313 = vmatprep.subr.bf16.mxu0 %v3271
      %3314 = vmatpush1.bf16.msra.mxu0 %v3270
      %3315 = vmatprep.subr.bf16.mxu0 %v3269
      %3316 = vmatpush1.bf16.msra.mxu0 %v3268
      %3317 = vmatprep.subr.bf16.mxu0 %v3267
      %3318 = vmatpush1.bf16.msra.mxu0 %v3266
      %3319 = vmatprep.subr.bf16.mxu0 %v3265
      %3320 = vmatpush1.bf16.msra.mxu0 %v3264
      %3321 = vmatprep.subr.bf16.mxu0 %v3263
      %3322 = vmatpush1.bf16.msra.mxu0 %v3262
      %3323 = vmatprep.subr.bf16.mxu0 %v3261
      %3324 = vmatpush1.bf16.msra.mxu0 %v3260
      %3325 = vmatprep.subr.bf16.mxu0 %v3291
      %3326 = vmatpush2.bf16.msra.mxu0 %v3290
      %3327 = vmatprep.subr.bf16.mxu0 %v3289
      %3328 = vmatpush2.bf16.msra.mxu0 %v3288
      %3329 = vmatprep.subr.bf16.mxu0 %v3287
      %3330 = vmatpush2.bf16.msra.mxu0 %v3286
      %3331 = vmatprep.subr.bf16.mxu0 %v3285
      %3332 = vmatpush2.bf16.msra.mxu0 %v3284
      %3333 = vmatprep.subr.bf16.mxu0 %v3283
      %3334 = vmatpush2.bf16.msra.mxu0 %v3282
      %3335 = vmatprep.subr.bf16.mxu0 %v3281
      %3336 = vmatpush2.bf16.msra.mxu0 %v3280
      %3337 = vmatprep.subr.bf16.mxu0 %v3279
      %3338 = vmatpush2.bf16.msra.mxu0 %v3278
      %3339 = vmatprep.subr.bf16.mxu0 %v3277
      %3340 = vmatpush2.bf16.msra.mxu0 %v3276
      %3341 = vmatprep.mubr.bf16.mxu0 %v3302
      %3342 = vmatmul.mubr.bf16.gmra.mxu0 %v3301
      %v3343 = vpop.f32.mrf.mxu0
      %v3344 = vadd.f32 0.0, %v3343
      %v3345 = vpop.f32.mrf.mxu0
      %v3346 = vadd.f32 0.0, %v3345
      %v3347 = vpop.f32.mrf.mxu0
      %v3348 = vpop.f32.mrf.mxu0
      %3349 = vdwg.mxu0
      %3350 = vmatprep.subr.bf16.mxu0 0
      %3351 = vmatpush1.bf16.msra.mxu0 0
      %3352 = vmatprep.subr.bf16.mxu0 0
      %3353 = vmatpush1.bf16.msra.mxu0 0
      %3354 = vmatprep.subr.bf16.mxu0 0
      %3355 = vmatpush1.bf16.msra.mxu0 0
      %3356 = vmatprep.subr.bf16.mxu0 0
      %3357 = vmatpush1.bf16.msra.mxu0 0
      %3358 = vmatprep.subr.bf16.mxu0 0
      %3359 = vmatpush1.bf16.msra.mxu0 0
      %3360 = vmatprep.subr.bf16.mxu0 0
      %3361 = vmatpush1.bf16.msra.mxu0 0
      %3362 = vmatprep.subr.bf16.mxu0 %v3295
      %3363 = vmatpush1.bf16.msra.mxu0 %v3294
      %3364 = vmatprep.subr.bf16.mxu0 %v3293
      %3365 = vmatpush1.bf16.msra.mxu0 %v3292
      %3366 = vmatprep.subr.bf16.mxu0 0
      %3367 = vmatpush2.bf16.msra.mxu0 0
      %3368 = vmatprep.subr.bf16.mxu0 0
      %3369 = vmatpush2.bf16.msra.mxu0 0
      %3370 = vmatprep.subr.bf16.mxu0 0
      %3371 = vmatpush2.bf16.msra.mxu0 0
      %3372 = vmatprep.subr.bf16.mxu0 0
      %3373 = vmatpush2.bf16.msra.mxu0 0
      %3374 = vmatprep.subr.bf16.mxu0 0
      %3375 = vmatpush2.bf16.msra.mxu0 0
      %3376 = vmatprep.subr.bf16.mxu0 0
      %3377 = vmatpush2.bf16.msra.mxu0 0
      %3378 = vmatprep.subr.bf16.mxu0 0
      %3379 = vmatpush2.bf16.msra.mxu0 0
      %3380 = vmatprep.subr.bf16.mxu0 0
      %3381 = vmatpush2.bf16.msra.mxu0 0
      %3382 = vmatprep.mubr.bf16.mxu0 0
      %3383 = vmatmul.mubr.bf16.gmra.mxu0 %v3307
      %v3384 = vpop.f32.mrf.mxu0
      %v3385 = vadd.f32 %v3344, %v3384
      %v3386 = vpop.f32.mrf.mxu0
      %v3387 = vadd.f32 %v3346, %v3386
      %v3388 = vpop.f32.mrf.mxu0
      %v3389 = vpop.f32.mrf.mxu0
      %3390 = vdwg.mxu0
      %v3391 = vpack.c.bf16 %v3385, %v3385
      %v3392 = vpack.c.bf16 %v3387, %v3387
      %v3905 = vunpack.c.l.b16 %v765
      %v3906 = vunpack.c.h.b16 %v765
      %v3907 = vunpack.c.l.b16 %v766
      %v3908 = vunpack.c.h.b16 %v766
      %v3909 = vunpack.c.l.b16 %v767
      %v3910 = vunpack.c.h.b16 %v767
      %v3911 = vunpack.c.l.b16 %v768
      %v3912 = vunpack.c.h.b16 %v768
      %v3913 = vunpack.c.l.b16 %v769
      %v3914 = vunpack.c.h.b16 %v769
      %v3915 = vunpack.c.l.b16 %v770
      %v3916 = vunpack.c.h.b16 %v770
      %v3917 = vunpack.c.l.b16 %v771
      %v3918 = vunpack.c.h.b16 %v771
      %v3919 = vunpack.c.l.b16 %v772
      %v3920 = vunpack.c.h.b16 %v772
      %v3921 = vunpack.c.l.b16 %v773
      %v3922 = vunpack.c.h.b16 %v773
      %v3923 = vunpack.c.l.b16 %v774
      %v3924 = vunpack.c.h.b16 %v774
      %v3925 = vunpack.c.l.b16 %v775
      %v3926 = vunpack.c.h.b16 %v775
      %v3927 = vunpack.c.l.b16 %v776
      %v3928 = vunpack.c.h.b16 %v776
      %v3929 = vunpack.c.l.b16 %v777
      %v3930 = vunpack.c.h.b16 %v777
      %v3931 = vunpack.c.l.b16 %v778
      %v3932 = vunpack.c.h.b16 %v778
      %v3933 = vunpack.c.l.b16 %v779
      %v3934 = vunpack.c.h.b16 %v779
      %v3935 = vunpack.c.l.b16 %v780
      %v3936 = vunpack.c.h.b16 %v780
      %v3937 = vunpack.c.l.b16 %v781
      %v3938 = vunpack.c.h.b16 %v781
      %v3939 = vunpack.c.l.b16 %v782
      %v3940 = vunpack.c.h.b16 %v782
      %v3941 = vunpack.c.l.b16 %v783
      %v3942 = vunpack.c.h.b16 %v783
      %v3943 = vunpack.c.l.b16 %v784
      %v3944 = vunpack.c.h.b16 %v784
      %v3945 = vunpack.c.l.b16 %v785
      %v3946 = vunpack.c.h.b16 %v785
      %v3947 = vunpack.c.l.b16 %v786
      %v3948 = vunpack.c.h.b16 %v786
      %v3949 = vunpack.c.l.b16 %v787
      %v3950 = vunpack.c.h.b16 %v787
      %v3951 = vunpack.c.l.b16 %v788
      %v3952 = vunpack.c.h.b16 %v788
      %v3953 = vunpack.c.l.b16 %v789
      %v3954 = vunpack.c.h.b16 %v789
      %v3955 = vunpack.c.l.b16 %v790
      %v3956 = vunpack.c.h.b16 %v790
      %v3957 = vunpack.c.l.b16 %v791
      %v3958 = vunpack.c.h.b16 %v791
      %v3959 = vunpack.c.l.b16 %v792
      %v3960 = vunpack.c.h.b16 %v792
      %v3961 = vunpack.c.l.b16 %v793
      %v3962 = vunpack.c.h.b16 %v793
      %v3963 = vunpack.c.l.b16 %v794
      %v3964 = vunpack.c.h.b16 %v794
      %v3965 = vunpack.c.l.b16 %v795
      %v3966 = vunpack.c.h.b16 %v795
      %v3967 = vunpack.c.l.b16 %v796
      %v3968 = vunpack.c.h.b16 %v796
      %v3969 = vunpack.c.l.b16 %v797
      %v3970 = vunpack.c.h.b16 %v797
      %v3971 = vunpack.c.l.b16 %v798
      %v3972 = vunpack.c.h.b16 %v798
      %v3973 = vunpack.c.l.b16 %v799
      %v3974 = vunpack.c.h.b16 %v799
      %v3975 = vunpack.c.l.b16 %v800
      %v3976 = vunpack.c.h.b16 %v800
      %v3977 = vunpack.c.l.b16 %v801
      %v3978 = vunpack.c.h.b16 %v801
      %v3979 = vunpack.c.l.b16 %v802
      %v3980 = vunpack.c.h.b16 %v802
      %v3981 = vunpack.c.l.b16 %v803
      %v3982 = vunpack.c.h.b16 %v803
      %v3983 = vunpack.c.l.b16 %v804
      %v3984 = vunpack.c.h.b16 %v804
      %v3985 = vunpack.c.l.b16 %v805
      %v3986 = vunpack.c.h.b16 %v805
      %v3987 = vunpack.c.l.b16 %v806
      %v3988 = vunpack.c.h.b16 %v806
      %v3989 = vunpack.c.l.b16 %v807
      %v3990 = vunpack.c.h.b16 %v807
      %v3991 = vunpack.c.l.b16 %v808
      %v3992 = vunpack.c.h.b16 %v808
      %v3993 = vunpack.c.l.b16 %v809
      %v3994 = vunpack.c.h.b16 %v809
      %v3995 = vunpack.c.l.b16 %v810
      %v3996 = vunpack.c.h.b16 %v810
      %v3997 = vunpack.c.l.b16 %v811
      %v3998 = vunpack.c.h.b16 %v811
      %v3999 = vunpack.c.l.b16 %v812
      %v4000 = vunpack.c.h.b16 %v812
      %v4001 = vunpack.c.l.b16 %v813
      %v4002 = vunpack.c.h.b16 %v813
      %v4003 = vunpack.c.l.b16 %v814
      %v4004 = vunpack.c.h.b16 %v814
      %v4005 = vunpack.c.l.b16 %v815
      %v4006 = vunpack.c.h.b16 %v815
      %v4007 = vunpack.c.l.b16 %v816
      %v4008 = vunpack.c.h.b16 %v816
      %v4009 = vunpack.c.l.b16 %v817
      %v4010 = vunpack.c.h.b16 %v817
      %v4011 = vunpack.c.l.b16 %v818
      %v4012 = vunpack.c.h.b16 %v818
      %v4013 = vunpack.c.l.b16 %v819
      %v4014 = vunpack.c.h.b16 %v819
      %v4015 = vunpack.c.l.b16 %v820
      %v4016 = vunpack.c.h.b16 %v820
      %v4017 = vunpack.c.l.b16 %v821
      %v4018 = vunpack.c.h.b16 %v821
      %v4019 = vunpack.c.l.b16 %v822
      %v4020 = vunpack.c.h.b16 %v822
      %v4021 = vunpack.c.l.b16 %v823
      %v4022 = vunpack.c.h.b16 %v823
      %v4023 = vunpack.c.l.b16 %v824
      %v4024 = vunpack.c.h.b16 %v824
      %v4025 = vunpack.c.l.b16 %v825
      %v4026 = vunpack.c.h.b16 %v825
      %v4027 = vunpack.c.l.b16 %v826
      %v4028 = vunpack.c.h.b16 %v826
      %v4029 = vunpack.c.l.b16 %v827
      %v4030 = vunpack.c.h.b16 %v827
      %v4031 = vunpack.c.l.b16 %v828
      %v4032 = vunpack.c.h.b16 %v828
      %v4033 = vunpack.c.l.b16 %v829
      %v4034 = vunpack.c.h.b16 %v829
      %v4035 = vunpack.c.l.b16 %v830
      %v4036 = vunpack.c.h.b16 %v830
      %v4037 = vunpack.c.l.b16 %v831
      %v4038 = vunpack.c.h.b16 %v831
      %v4039 = vunpack.c.l.b16 %v832
      %v4040 = vunpack.c.h.b16 %v832
      %v4041 = vunpack.c.l.b16 %v833
      %v4042 = vunpack.c.h.b16 %v833
      %v4043 = vunpack.c.l.b16 %v834
      %v4044 = vunpack.c.h.b16 %v834
      %v4045 = vunpack.c.l.b16 %v835
      %v4046 = vunpack.c.h.b16 %v835
      %v4047 = vunpack.c.l.b16 %v836
      %v4048 = vunpack.c.h.b16 %v836
      %v4049 = vunpack.c.l.b16 %v837
      %v4050 = vunpack.c.h.b16 %v837
      %v4051 = vunpack.c.l.b16 %v838
      %v4052 = vunpack.c.h.b16 %v838
      %v4053 = vunpack.c.l.b16 %v839
      %v4054 = vunpack.c.h.b16 %v839
      %v4055 = vunpack.c.l.b16 %v840
      %v4056 = vunpack.c.h.b16 %v840
      %v4057 = vunpack.c.l.b16 %v841
      %v4058 = vunpack.c.h.b16 %v841
      %v4059 = vunpack.c.l.b16 %v842
      %v4060 = vunpack.c.h.b16 %v842
      %v4061 = vunpack.c.l.b16 %v843
      %v4062 = vunpack.c.h.b16 %v843
      %v4063 = vunpack.c.l.b16 %v844
      %v4064 = vunpack.c.h.b16 %v844
      %v4065 = vunpack.c.l.b16 %v845
      %v4066 = vunpack.c.h.b16 %v845
      %v4067 = vunpack.c.l.b16 %v846
      %v4068 = vunpack.c.h.b16 %v846
      %v4069 = vunpack.c.l.b16 %v847
      %v4070 = vunpack.c.h.b16 %v847
      %v4071 = vunpack.c.l.b16 %v848
      %v4072 = vunpack.c.h.b16 %v848
      %v4073 = vunpack.c.l.b16 %v849
      %v4074 = vunpack.c.h.b16 %v849
      %v4075 = vunpack.c.l.b16 %v850
      %v4076 = vunpack.c.h.b16 %v850
      %v4077 = vunpack.c.l.b16 %v851
      %v4078 = vunpack.c.h.b16 %v851
      %v4079 = vunpack.c.l.b16 %v852
      %v4080 = vunpack.c.h.b16 %v852
      %v4081 = vunpack.c.l.b16 %v853
      %v4082 = vunpack.c.h.b16 %v853
      %v4083 = vunpack.c.l.b16 %v854
      %v4084 = vunpack.c.h.b16 %v854
      %v4085 = vunpack.c.l.b16 %v855
      %v4086 = vunpack.c.h.b16 %v855
      %v4087 = vunpack.c.l.b16 %v856
      %v4088 = vunpack.c.h.b16 %v856
      %v4089 = vunpack.c.l.b16 %v857
      %v4090 = vunpack.c.h.b16 %v857
      %v4091 = vunpack.c.l.b16 %v858
      %v4092 = vunpack.c.h.b16 %v858
      %v4093 = vunpack.c.l.b16 %v859
      %v4094 = vunpack.c.h.b16 %v859
      %v4095 = vunpack.c.l.b16 %v860
      %v4096 = vunpack.c.h.b16 %v860
      %v4097 = vunpack.c.l.b16 %v861
      %v4098 = vunpack.c.h.b16 %v861
      %v4099 = vunpack.c.l.b16 %v862
      %v4100 = vunpack.c.h.b16 %v862
      %v4101 = vunpack.c.l.b16 %v863
      %v4102 = vunpack.c.h.b16 %v863
      %v4103 = vunpack.c.l.b16 %v864
      %v4104 = vunpack.c.h.b16 %v864
      %v4105 = vunpack.c.l.b16 %v865
      %v4106 = vunpack.c.h.b16 %v865
      %v4107 = vunpack.c.l.b16 %v866
      %v4108 = vunpack.c.h.b16 %v866
      %v4109 = vunpack.c.l.b16 %v867
      %v4110 = vunpack.c.h.b16 %v867
      %v4111 = vunpack.c.l.b16 %v868
      %v4112 = vunpack.c.h.b16 %v868
      %v4113 = vunpack.c.l.b16 %v869
      %v4114 = vunpack.c.h.b16 %v869
      %v4115 = vunpack.c.l.b16 %v870
      %v4116 = vunpack.c.h.b16 %v870
      %v4117 = vunpack.c.l.b16 %v871
      %v4118 = vunpack.c.h.b16 %v871
      %v4119 = vunpack.c.l.b16 %v872
      %v4120 = vunpack.c.h.b16 %v872
      %v4121 = vunpack.c.l.b16 %v873
      %v4122 = vunpack.c.h.b16 %v873
      %v4123 = vunpack.c.l.b16 %v874
      %v4124 = vunpack.c.h.b16 %v874
      %v4125 = vunpack.c.l.b16 %v875
      %v4126 = vunpack.c.h.b16 %v875
      %v4127 = vunpack.c.l.b16 %v876
      %v4128 = vunpack.c.h.b16 %v876
      %v4129 = vunpack.c.l.b16 %v877
      %v4130 = vunpack.c.h.b16 %v877
      %v4131 = vunpack.c.l.b16 %v878
      %v4132 = vunpack.c.h.b16 %v878
      %v4133 = vunpack.c.l.b16 %v879
      %v4134 = vunpack.c.h.b16 %v879
      %v4135 = vunpack.c.l.b16 %v880
      %v4136 = vunpack.c.h.b16 %v880
      %v4137 = vunpack.c.l.b16 %v881
      %v4138 = vunpack.c.h.b16 %v881
      %v4139 = vunpack.c.l.b16 %v882
      %v4140 = vunpack.c.h.b16 %v882
      %v4141 = vunpack.c.l.b16 %v883
      %v4142 = vunpack.c.h.b16 %v883
      %v4143 = vunpack.c.l.b16 %v884
      %v4144 = vunpack.c.h.b16 %v884
      %v4145 = vunpack.c.l.b16 %v885
      %v4146 = vunpack.c.h.b16 %v885
      %v4147 = vunpack.c.l.b16 %v886
      %v4148 = vunpack.c.h.b16 %v886
      %v4149 = vunpack.c.l.b16 %v887
      %v4150 = vunpack.c.h.b16 %v887
      %v4151 = vunpack.c.l.b16 %v888
      %v4152 = vunpack.c.h.b16 %v888
      %v4153 = vunpack.c.l.b16 %v889
      %v4154 = vunpack.c.h.b16 %v889
      %v4155 = vunpack.c.l.b16 %v890
      %v4156 = vunpack.c.h.b16 %v890
      %v4157 = vunpack.c.l.b16 %v891
      %v4158 = vunpack.c.h.b16 %v891
      %v4159 = vunpack.c.l.b16 %v892
      %v4160 = vunpack.c.h.b16 %v892
      %v4161 = vunpack.c.l.b16 %v893
      %v4162 = vunpack.c.h.b16 %v893
      %v4163 = vunpack.c.l.b16 %v894
      %v4164 = vunpack.c.h.b16 %v894
      %v4165 = vunpack.c.l.b16 %v895
      %v4166 = vunpack.c.h.b16 %v895
      %v4167 = vunpack.c.l.b16 %v896
      %v4168 = vunpack.c.h.b16 %v896
      %v4169 = vunpack.c.l.b16 %v897
      %v4170 = vunpack.c.h.b16 %v897
      %v4171 = vunpack.c.l.b16 %v898
      %v4172 = vunpack.c.h.b16 %v898
      %v4173 = vunpack.c.l.b16 %v899
      %v4174 = vunpack.c.h.b16 %v899
      %v4175 = vunpack.c.l.b16 %v900
      %v4176 = vunpack.c.h.b16 %v900
      %v4177 = vunpack.c.l.b16 %v901
      %v4178 = vunpack.c.h.b16 %v901
      %v4179 = vunpack.c.l.b16 %v902
      %v4180 = vunpack.c.h.b16 %v902
      %v4181 = vunpack.c.l.b16 %v903
      %v4182 = vunpack.c.h.b16 %v903
      %v4183 = vunpack.c.l.b16 %v904
      %v4184 = vunpack.c.h.b16 %v904
      %v4185 = vunpack.c.l.b16 %v905
      %v4186 = vunpack.c.h.b16 %v905
      %v4187 = vunpack.c.l.b16 %v906
      %v4188 = vunpack.c.h.b16 %v906
      %v4189 = vunpack.c.l.b16 %v907
      %v4190 = vunpack.c.h.b16 %v907
      %v4191 = vunpack.c.l.b16 %v908
      %v4192 = vunpack.c.h.b16 %v908
      %v4193 = vunpack.c.l.b16 %v909
      %v4194 = vunpack.c.h.b16 %v909
      %v4195 = vunpack.c.l.b16 %v910
      %v4196 = vunpack.c.h.b16 %v910
      %v4197 = vunpack.c.l.b16 %v911
      %v4198 = vunpack.c.h.b16 %v911
      %v4199 = vunpack.c.l.b16 %v912
      %v4200 = vunpack.c.h.b16 %v912
      %v4201 = vunpack.c.l.b16 %v913
      %v4202 = vunpack.c.h.b16 %v913
      %v4203 = vunpack.c.l.b16 %v914
      %v4204 = vunpack.c.h.b16 %v914
      %v4205 = vunpack.c.l.b16 %v915
      %v4206 = vunpack.c.h.b16 %v915
      %v4207 = vunpack.c.l.b16 %v916
      %v4208 = vunpack.c.h.b16 %v916
      %v4209 = vunpack.c.l.b16 %v917
      %v4210 = vunpack.c.h.b16 %v917
      %v4211 = vunpack.c.l.b16 %v918
      %v4212 = vunpack.c.h.b16 %v918
      %v4213 = vunpack.c.l.b16 %v919
      %v4214 = vunpack.c.h.b16 %v919
      %v4215 = vunpack.c.l.b16 %v920
      %v4216 = vunpack.c.h.b16 %v920
      %v4217 = vunpack.c.l.b16 %v921
      %v4218 = vunpack.c.h.b16 %v921
      %v4219 = vunpack.c.l.b16 %v922
      %v4220 = vunpack.c.h.b16 %v922
      %v4221 = vunpack.c.l.b16 %v923
      %v4222 = vunpack.c.h.b16 %v923
      %v4223 = vunpack.c.l.b16 %v924
      %v4224 = vunpack.c.h.b16 %v924
      %v4225 = vunpack.c.l.b16 %v925
      %v4226 = vunpack.c.h.b16 %v925
      %v4227 = vunpack.c.l.b16 %v926
      %v4228 = vunpack.c.h.b16 %v926
      %v4229 = vunpack.c.l.b16 %v927
      %v4230 = vunpack.c.h.b16 %v927
      %v4231 = vunpack.c.l.b16 %v928
      %v4232 = vunpack.c.h.b16 %v928
      %v4233 = vunpack.c.l.b16 %v929
      %v4234 = vunpack.c.h.b16 %v929
      %v4235 = vunpack.c.l.b16 %v930
      %v4236 = vunpack.c.h.b16 %v930
      %v4237 = vunpack.c.l.b16 %v931
      %v4238 = vunpack.c.h.b16 %v931
      %v4239 = vunpack.c.l.b16 %v932
      %v4240 = vunpack.c.h.b16 %v932
      %v4241 = vunpack.c.l.b16 %v933
      %v4242 = vunpack.c.h.b16 %v933
      %v4243 = vunpack.c.l.b16 %v934
      %v4244 = vunpack.c.h.b16 %v934
      %v4245 = vunpack.c.l.b16 %v935
      %v4246 = vunpack.c.h.b16 %v935
      %v4247 = vunpack.c.l.b16 %v936
      %v4248 = vunpack.c.h.b16 %v936
      %v4249 = vunpack.c.l.b16 %v937
      %v4250 = vunpack.c.h.b16 %v937
      %v4251 = vunpack.c.l.b16 %v938
      %v4252 = vunpack.c.h.b16 %v938
      %v4253 = vunpack.c.l.b16 %v939
      %v4254 = vunpack.c.h.b16 %v939
      %v4255 = vunpack.c.l.b16 %v940
      %v4256 = vunpack.c.h.b16 %v940
      %v4257 = vunpack.c.l.b16 %v941
      %v4258 = vunpack.c.h.b16 %v941
      %v4259 = vunpack.c.l.b16 %v942
      %v4260 = vunpack.c.h.b16 %v942
      %v4261 = vunpack.c.l.b16 %v943
      %v4262 = vunpack.c.h.b16 %v943
      %v4263 = vunpack.c.l.b16 %v944
      %v4264 = vunpack.c.h.b16 %v944
      %v4265 = vunpack.c.l.b16 %v945
      %v4266 = vunpack.c.h.b16 %v945
      %v4267 = vunpack.c.l.b16 %v946
      %v4268 = vunpack.c.h.b16 %v946
      %v4269 = vunpack.c.l.b16 %v947
      %v4270 = vunpack.c.h.b16 %v947
      %v4271 = vunpack.c.l.b16 %v948
      %v4272 = vunpack.c.h.b16 %v948
      %v4273 = vunpack.c.l.b16 %v949
      %v4274 = vunpack.c.h.b16 %v949
      %v4275 = vunpack.c.l.b16 %v950
      %v4276 = vunpack.c.h.b16 %v950
      %v4277 = vunpack.c.l.b16 %v951
      %v4278 = vunpack.c.h.b16 %v951
      %v4279 = vunpack.c.l.b16 %v952
      %v4280 = vunpack.c.h.b16 %v952
      %v4281 = vunpack.c.l.b16 %v953
      %v4282 = vunpack.c.h.b16 %v953
      %v4283 = vunpack.c.l.b16 %v954
      %v4284 = vunpack.c.h.b16 %v954
      %v4285 = vunpack.c.l.b16 %v955
      %v4286 = vunpack.c.h.b16 %v955
      %v4287 = vunpack.c.l.b16 %v956
      %v4288 = vunpack.c.h.b16 %v956
      %v4289 = vunpack.c.l.b16 %v957
      %v4290 = vunpack.c.h.b16 %v957
      %v4291 = vunpack.c.l.b16 %v958
      %v4292 = vunpack.c.h.b16 %v958
      %v4293 = vunpack.c.l.b16 %v959
      %v4294 = vunpack.c.h.b16 %v959
      %v4295 = vunpack.c.l.b16 %v960
      %v4296 = vunpack.c.h.b16 %v960
      %v4297 = vunpack.c.l.b16 %v961
      %v4298 = vunpack.c.h.b16 %v961
      %v4299 = vunpack.c.l.b16 %v962
      %v4300 = vunpack.c.h.b16 %v962
      %v4301 = vunpack.c.l.b16 %v963
      %v4302 = vunpack.c.h.b16 %v963
      %v4303 = vunpack.c.l.b16 %v964
      %v4304 = vunpack.c.h.b16 %v964
      %v4305 = vunpack.c.l.b16 %v965
      %v4306 = vunpack.c.h.b16 %v965
      %v4307 = vunpack.c.l.b16 %v966
      %v4308 = vunpack.c.h.b16 %v966
      %v4309 = vunpack.c.l.b16 %v967
      %v4310 = vunpack.c.h.b16 %v967
      %v4311 = vunpack.c.l.b16 %v968
      %v4312 = vunpack.c.h.b16 %v968
      %v4313 = vunpack.c.l.b16 %v969
      %v4314 = vunpack.c.h.b16 %v969
      %v4315 = vunpack.c.l.b16 %v970
      %v4316 = vunpack.c.h.b16 %v970
      %v4317 = vunpack.c.l.b16 %v971
      %v4318 = vunpack.c.h.b16 %v971
      %v4319 = vunpack.c.l.b16 %v972
      %v4320 = vunpack.c.h.b16 %v972
      %v4321 = vunpack.c.l.b16 %v973
      %v4322 = vunpack.c.h.b16 %v973
      %v4323 = vunpack.c.l.b16 %v974
      %v4324 = vunpack.c.h.b16 %v974
      %v4325 = vunpack.c.l.b16 %v975
      %v4326 = vunpack.c.h.b16 %v975
      %v4327 = vunpack.c.l.b16 %v976
      %v4328 = vunpack.c.h.b16 %v976
      %v4329 = vunpack.c.l.b16 %v977
      %v4330 = vunpack.c.h.b16 %v977
      %v4331 = vunpack.c.l.b16 %v978
      %v4332 = vunpack.c.h.b16 %v978
      %v4333 = vunpack.c.l.b16 %v979
      %v4334 = vunpack.c.h.b16 %v979
      %v4335 = vunpack.c.l.b16 %v980
      %v4336 = vunpack.c.h.b16 %v980
      %v4337 = vunpack.c.l.b16 %v981
      %v4338 = vunpack.c.h.b16 %v981
      %v4339 = vunpack.c.l.b16 %v982
      %v4340 = vunpack.c.h.b16 %v982
      %v4341 = vunpack.c.l.b16 %v983
      %v4342 = vunpack.c.h.b16 %v983
      %v4343 = vunpack.c.l.b16 %v984
      %v4344 = vunpack.c.h.b16 %v984
      %v4345 = vunpack.c.l.b16 %v985
      %v4346 = vunpack.c.h.b16 %v985
      %v4347 = vunpack.c.l.b16 %v986
      %v4348 = vunpack.c.h.b16 %v986
      %v4349 = vunpack.c.l.b16 %v987
      %v4350 = vunpack.c.h.b16 %v987
      %v4351 = vunpack.c.l.b16 %v988
      %v4352 = vunpack.c.h.b16 %v988
      %v4353 = vunpack.c.l.b16 %v989
      %v4354 = vunpack.c.h.b16 %v989
      %v4355 = vunpack.c.l.b16 %v990
      %v4356 = vunpack.c.h.b16 %v990
      %v4357 = vunpack.c.l.b16 %v991
      %v4358 = vunpack.c.h.b16 %v991
      %v4359 = vunpack.c.l.b16 %v992
      %v4360 = vunpack.c.h.b16 %v992
      %v4361 = vunpack.c.l.b16 %v993
      %v4362 = vunpack.c.h.b16 %v993
      %v4363 = vunpack.c.l.b16 %v994
      %v4364 = vunpack.c.h.b16 %v994
      %v4365 = vunpack.c.l.b16 %v995
      %v4366 = vunpack.c.h.b16 %v995
      %v4367 = vunpack.c.l.b16 %v996
      %v4368 = vunpack.c.h.b16 %v996
      %v4369 = vunpack.c.l.b16 %v997
      %v4370 = vunpack.c.h.b16 %v997
      %v4371 = vunpack.c.l.b16 %v998
      %v4372 = vunpack.c.h.b16 %v998
      %v4373 = vunpack.c.l.b16 %v999
      %v4374 = vunpack.c.h.b16 %v999
      %v4375 = vunpack.c.l.b16 %v1000
      %v4376 = vunpack.c.h.b16 %v1000
      %v4377 = vunpack.c.l.b16 %v1001
      %v4378 = vunpack.c.h.b16 %v1001
      %v4379 = vunpack.c.l.b16 %v1002
      %v4380 = vunpack.c.h.b16 %v1002
      %v4381 = vunpack.c.l.b16 %v1003
      %v4382 = vunpack.c.h.b16 %v1003
      %v4383 = vunpack.c.l.b16 %v1004
      %v4384 = vunpack.c.h.b16 %v1004
      %v4385 = vunpack.c.l.b16 %v1005
      %v4386 = vunpack.c.h.b16 %v1005
      %v4387 = vunpack.c.l.b16 %v1006
      %v4388 = vunpack.c.h.b16 %v1006
      %v4389 = vunpack.c.l.b16 %v1007
      %v4390 = vunpack.c.h.b16 %v1007
      %v4391 = vunpack.c.l.b16 %v1008
      %v4392 = vunpack.c.h.b16 %v1008
      %v4393 = vunpack.c.l.b16 %v1009
      %v4394 = vunpack.c.h.b16 %v1009
      %v4395 = vunpack.c.l.b16 %v1010
      %v4396 = vunpack.c.h.b16 %v1010
      %v4397 = vunpack.c.l.b16 %v1011
      %v4398 = vunpack.c.h.b16 %v1011
      %v4399 = vunpack.c.l.b16 %v1012
      %v4400 = vunpack.c.h.b16 %v1012
      %v4401 = vunpack.c.l.b16 %v1013
      %v4402 = vunpack.c.h.b16 %v1013
      %v4403 = vunpack.c.l.b16 %v1014
      %v4404 = vunpack.c.h.b16 %v1014
      %v4405 = vunpack.c.l.b16 %v1015
      %v4406 = vunpack.c.h.b16 %v1015
      %v4407 = vunpack.c.l.b16 %v1016
      %v4408 = vunpack.c.h.b16 %v1016
      %v4409 = vunpack.c.l.b16 %v1017
      %v4410 = vunpack.c.h.b16 %v1017
      %v4411 = vunpack.c.l.b16 %v1018
      %v4412 = vunpack.c.h.b16 %v1018
      %v4413 = vunpack.c.l.b16 %v1019
      %v4414 = vunpack.c.h.b16 %v1019
      %v4415 = vunpack.c.l.b16 %v1020
      %v4416 = vunpack.c.h.b16 %v1020
      %v4417 = vunpack.c.l.b16 %v1021
      %v4418 = vunpack.c.h.b16 %v1021
      %v4419 = vunpack.c.l.b16 %v1022
      %v4420 = vunpack.c.h.b16 %v1022
      %v4421 = vunpack.c.l.b16 %v1023
      %v4422 = vunpack.c.h.b16 %v1023
      %v4423 = vunpack.c.l.b16 %v1024
      %v4424 = vunpack.c.h.b16 %v1024
      %v4425 = vunpack.c.l.b16 %v1025
      %v4426 = vunpack.c.h.b16 %v1025
      %v4427 = vunpack.c.l.b16 %v1026
      %v4428 = vunpack.c.h.b16 %v1026
      %v4429 = vunpack.c.l.b16 %v1027
      %v4430 = vunpack.c.h.b16 %v1027
      %v4431 = vunpack.c.l.b16 %v1028
      %v4432 = vunpack.c.h.b16 %v1028
      %v4433 = vunpack.c.l.b16 %v1029
      %v4434 = vunpack.c.h.b16 %v1029
      %v4435 = vunpack.c.l.b16 %v1030
      %v4436 = vunpack.c.h.b16 %v1030
      %v4437 = vunpack.c.l.b16 %v1031
      %v4438 = vunpack.c.h.b16 %v1031
      %v4439 = vunpack.c.l.b16 %v1032
      %v4440 = vunpack.c.h.b16 %v1032
      %v4441 = vunpack.c.l.b16 %v1033
      %v4442 = vunpack.c.h.b16 %v1033
      %v4443 = vunpack.c.l.b16 %v1034
      %v4444 = vunpack.c.h.b16 %v1034
      %v4445 = vunpack.c.l.b16 %v1035
      %v4446 = vunpack.c.h.b16 %v1035
      %v4447 = vunpack.c.l.b16 %v1036
      %v4448 = vunpack.c.h.b16 %v1036
      %v4449 = vunpack.c.l.b16 %v1037
      %v4450 = vunpack.c.h.b16 %v1037
      %v4451 = vunpack.c.l.b16 %v1038
      %v4452 = vunpack.c.h.b16 %v1038
      %v4453 = vunpack.c.l.b16 %v1039
      %v4454 = vunpack.c.h.b16 %v1039
      %v4455 = vunpack.c.l.b16 %v1040
      %v4456 = vunpack.c.h.b16 %v1040
      %v4457 = vunpack.c.l.b16 %v1041
      %v4458 = vunpack.c.h.b16 %v1041
      %v4459 = vunpack.c.l.b16 %v1042
      %v4460 = vunpack.c.h.b16 %v1042
      %v4461 = vunpack.c.l.b16 %v1043
      %v4462 = vunpack.c.h.b16 %v1043
      %v4463 = vunpack.c.l.b16 %v1044
      %v4464 = vunpack.c.h.b16 %v1044
      %v4465 = vunpack.c.l.b16 %v1045
      %v4466 = vunpack.c.h.b16 %v1045
      %v4467 = vunpack.c.l.b16 %v1046
      %v4468 = vunpack.c.h.b16 %v1046
      %v4469 = vunpack.c.l.b16 %v1047
      %v4470 = vunpack.c.h.b16 %v1047
      %v4471 = vunpack.c.l.b16 %v1048
      %v4472 = vunpack.c.h.b16 %v1048
      %v4473 = vunpack.c.l.b16 %v1049
      %v4474 = vunpack.c.h.b16 %v1049
      %v4475 = vunpack.c.l.b16 %v1050
      %v4476 = vunpack.c.h.b16 %v1050
      %v4477 = vunpack.c.l.b16 %v1051
      %v4478 = vunpack.c.h.b16 %v1051
      %v4479 = vunpack.c.l.b16 %v1052
      %v4480 = vunpack.c.h.b16 %v1052
      %v4481 = vunpack.c.l.b16 %v1053
      %v4482 = vunpack.c.h.b16 %v1053
      %v4483 = vunpack.c.l.b16 %v1054
      %v4484 = vunpack.c.h.b16 %v1054
      %v4485 = vunpack.c.l.b16 %v1055
      %v4486 = vunpack.c.h.b16 %v1055
      %v4487 = vunpack.c.l.b16 %v1056
      %v4488 = vunpack.c.h.b16 %v1056
      %v4489 = vunpack.c.l.b16 %v1057
      %v4490 = vunpack.c.h.b16 %v1057
      %v4491 = vunpack.c.l.b16 %v1058
      %v4492 = vunpack.c.h.b16 %v1058
      %v4493 = vunpack.c.l.b16 %v1059
      %v4494 = vunpack.c.h.b16 %v1059
      %v4495 = vunpack.c.l.b16 %v1060
      %v4496 = vunpack.c.h.b16 %v1060
      %v4497 = vunpack.c.l.b16 %v1061
      %v4498 = vunpack.c.h.b16 %v1061
      %v4499 = vunpack.c.l.b16 %v1062
      %v4500 = vunpack.c.h.b16 %v1062
      %v4501 = vunpack.c.l.b16 %v1063
      %v4502 = vunpack.c.h.b16 %v1063
      %v4503 = vunpack.c.l.b16 %v1064
      %v4504 = vunpack.c.h.b16 %v1064
      %v4505 = vunpack.c.l.b16 %v1065
      %v4506 = vunpack.c.h.b16 %v1065
      %v4507 = vunpack.c.l.b16 %v1066
      %v4508 = vunpack.c.h.b16 %v1066
      %v4509 = vunpack.c.l.b16 %v1067
      %v4510 = vunpack.c.h.b16 %v1067
      %v4511 = vunpack.c.l.b16 %v1068
      %v4512 = vunpack.c.h.b16 %v1068
      %v4513 = vunpack.c.l.b16 %v1069
      %v4514 = vunpack.c.h.b16 %v1069
      %v4515 = vunpack.c.l.b16 %v1070
      %v4516 = vunpack.c.h.b16 %v1070
      %v4517 = vunpack.c.l.b16 %v1071
      %v4518 = vunpack.c.h.b16 %v1071
      %v4519 = vunpack.c.l.b16 %v1072
      %v4520 = vunpack.c.h.b16 %v1072
      %v4521 = vunpack.c.l.b16 %v1073
      %v4522 = vunpack.c.h.b16 %v1073
      %v4523 = vunpack.c.l.b16 %v1074
      %v4524 = vunpack.c.h.b16 %v1074
      %v4525 = vunpack.c.l.b16 %v1075
      %v4526 = vunpack.c.h.b16 %v1075
      %v4527 = vunpack.c.l.b16 %v1076
      %v4528 = vunpack.c.h.b16 %v1076
      %v4529 = vunpack.c.l.b16 %v1077
      %v4530 = vunpack.c.h.b16 %v1077
      %v4531 = vunpack.c.l.b16 %v1078
      %v4532 = vunpack.c.h.b16 %v1078
      %v4533 = vunpack.c.l.b16 %v1079
      %v4534 = vunpack.c.h.b16 %v1079
      %v4535 = vunpack.c.l.b16 %v1080
      %v4536 = vunpack.c.h.b16 %v1080
      %v4537 = vunpack.c.l.b16 %v1081
      %v4538 = vunpack.c.h.b16 %v1081
      %v4539 = vunpack.c.l.b16 %v1082
      %v4540 = vunpack.c.h.b16 %v1082
      %v4541 = vunpack.c.l.b16 %v1083
      %v4542 = vunpack.c.h.b16 %v1083
      %v4543 = vunpack.c.l.b16 %v1084
      %v4544 = vunpack.c.h.b16 %v1084
      %v4545 = vunpack.c.l.b16 %v1085
      %v4546 = vunpack.c.h.b16 %v1085
      %v4547 = vunpack.c.l.b16 %v1086
      %v4548 = vunpack.c.h.b16 %v1086
      %v4549 = vunpack.c.l.b16 %v1087
      %v4550 = vunpack.c.h.b16 %v1087
      %v4551 = vunpack.c.l.b16 %v1088
      %v4552 = vunpack.c.h.b16 %v1088
      %v4553 = vunpack.c.l.b16 %v1089
      %v4554 = vunpack.c.h.b16 %v1089
      %v4555 = vunpack.c.l.b16 %v1090
      %v4556 = vunpack.c.h.b16 %v1090
      %v4557 = vunpack.c.l.b16 %v1091
      %v4558 = vunpack.c.h.b16 %v1091
      %v4559 = vunpack.c.l.b16 %v1092
      %v4560 = vunpack.c.h.b16 %v1092
      %v4561 = vunpack.c.l.b16 %v1093
      %v4562 = vunpack.c.h.b16 %v1093
      %v4563 = vunpack.c.l.b16 %v1094
      %v4564 = vunpack.c.h.b16 %v1094
      %v4565 = vunpack.c.l.b16 %v1095
      %v4566 = vunpack.c.h.b16 %v1095
      %v4567 = vunpack.c.l.b16 %v1096
      %v4568 = vunpack.c.h.b16 %v1096
      %v4569 = vunpack.c.l.b16 %v1097
      %v4570 = vunpack.c.h.b16 %v1097
      %v4571 = vunpack.c.l.b16 %v1098
      %v4572 = vunpack.c.h.b16 %v1098
      %v4573 = vunpack.c.l.b16 %v1099
      %v4574 = vunpack.c.h.b16 %v1099
      %v4575 = vunpack.c.l.b16 %v1100
      %v4576 = vunpack.c.h.b16 %v1100
      %v4577 = vunpack.c.l.b16 %v1101
      %v4578 = vunpack.c.h.b16 %v1101
      %v4579 = vunpack.c.l.b16 %v1102
      %v4580 = vunpack.c.h.b16 %v1102
      %v4581 = vunpack.c.l.b16 %v1103
      %v4582 = vunpack.c.h.b16 %v1103
      %v4583 = vunpack.c.l.b16 %v1104
      %v4584 = vunpack.c.h.b16 %v1104
      %v4585 = vunpack.c.l.b16 %v1105
      %v4586 = vunpack.c.h.b16 %v1105
      %v4587 = vunpack.c.l.b16 %v1106
      %v4588 = vunpack.c.h.b16 %v1106
      %v4589 = vunpack.c.l.b16 %v1107
      %v4590 = vunpack.c.h.b16 %v1107
      %v4591 = vunpack.c.l.b16 %v1108
      %v4592 = vunpack.c.h.b16 %v1108
      %v4593 = vunpack.c.l.b16 %v1109
      %v4594 = vunpack.c.h.b16 %v1109
      %v4595 = vunpack.c.l.b16 %v1110
      %v4596 = vunpack.c.h.b16 %v1110
      %v4597 = vunpack.c.l.b16 %v1111
      %v4598 = vunpack.c.h.b16 %v1111
      %v4599 = vunpack.c.l.b16 %v1112
      %v4600 = vunpack.c.h.b16 %v1112
      %v4601 = vunpack.c.l.b16 %v1113
      %v4602 = vunpack.c.h.b16 %v1113
      %v4603 = vunpack.c.l.b16 %v1114
      %v4604 = vunpack.c.h.b16 %v1114
      %v4605 = vunpack.c.l.b16 %v1115
      %v4606 = vunpack.c.h.b16 %v1115
      %v4607 = vunpack.c.l.b16 %v1116
      %v4608 = vunpack.c.h.b16 %v1116
      %v4609 = vunpack.c.l.b16 %v1117
      %v4610 = vunpack.c.h.b16 %v1117
      %v4611 = vunpack.c.l.b16 %v1118
      %v4612 = vunpack.c.h.b16 %v1118
      %v4613 = vunpack.c.l.b16 %v1119
      %v4614 = vunpack.c.h.b16 %v1119
      %v4615 = vunpack.c.l.b16 %v1120
      %v4616 = vunpack.c.h.b16 %v1120
      %v4617 = vunpack.c.l.b16 %v1121
      %v4618 = vunpack.c.h.b16 %v1121
      %v4619 = vunpack.c.l.b16 %v1122
      %v4620 = vunpack.c.h.b16 %v1122
      %v4621 = vunpack.c.l.b16 %v1123
      %v4622 = vunpack.c.h.b16 %v1123
      %v4623 = vunpack.c.l.b16 %v1124
      %v4624 = vunpack.c.h.b16 %v1124
      %v4625 = vunpack.c.l.b16 %v1125
      %v4626 = vunpack.c.h.b16 %v1125
      %v4627 = vunpack.c.l.b16 %v1126
      %v4628 = vunpack.c.h.b16 %v1126
      %v4629 = vunpack.c.l.b16 %v1127
      %v4630 = vunpack.c.h.b16 %v1127
      %v4631 = vunpack.c.l.b16 %v1128
      %v4632 = vunpack.c.h.b16 %v1128
      %v4633 = vunpack.c.l.b16 %v1129
      %v4634 = vunpack.c.h.b16 %v1129
      %v4635 = vunpack.c.l.b16 %v1130
      %v4636 = vunpack.c.h.b16 %v1130
      %v4637 = vunpack.c.l.b16 %v1131
      %v4638 = vunpack.c.h.b16 %v1131
      %v4639 = vunpack.c.l.b16 %v1132
      %v4640 = vunpack.c.h.b16 %v1132
      %v4641 = vunpack.c.l.b16 %v1133
      %v4642 = vunpack.c.h.b16 %v1133
      %v4643 = vunpack.c.l.b16 %v1134
      %v4644 = vunpack.c.h.b16 %v1134
      %v4645 = vunpack.c.l.b16 %v1135
      %v4646 = vunpack.c.h.b16 %v1135
      %v4647 = vunpack.c.l.b16 %v1136
      %v4648 = vunpack.c.h.b16 %v1136
      %v4649 = vunpack.c.l.b16 %v1137
      %v4650 = vunpack.c.h.b16 %v1137
      %v4651 = vunpack.c.l.b16 %v1138
      %v4652 = vunpack.c.h.b16 %v1138
      %v4653 = vunpack.c.l.b16 %v1139
      %v4654 = vunpack.c.h.b16 %v1139
      %v4655 = vunpack.c.l.b16 %v1140
      %v4656 = vunpack.c.h.b16 %v1140
      %v4657 = vunpack.c.l.b16 %v1141
      %v4658 = vunpack.c.h.b16 %v1141
      %v4659 = vunpack.c.l.b16 %v1142
      %v4660 = vunpack.c.h.b16 %v1142
      %v4661 = vunpack.c.l.b16 %v1143
      %v4662 = vunpack.c.h.b16 %v1143
      %v4663 = vunpack.c.l.b16 %v1144
      %v4664 = vunpack.c.h.b16 %v1144
      %v4665 = vunpack.c.l.b16 %v1145
      %v4666 = vunpack.c.h.b16 %v1145
      %v4667 = vunpack.c.l.b16 %v1146
      %v4668 = vunpack.c.h.b16 %v1146
      %v4669 = vunpack.c.l.b16 %v1147
      %v4670 = vunpack.c.h.b16 %v1147
      %v4671 = vunpack.c.l.b16 %v1148
      %v4672 = vunpack.c.h.b16 %v1148
      %v4673 = vunpack.c.l.b16 %v1149
      %v4674 = vunpack.c.h.b16 %v1149
      %v4675 = vunpack.c.l.b16 %v1150
      %v4676 = vunpack.c.h.b16 %v1150
      %v4677 = vunpack.c.l.b16 %v1151
      %v4678 = vunpack.c.h.b16 %v1151
      %v4679 = vunpack.c.l.b16 %v1152
      %v4680 = vunpack.c.h.b16 %v1152
      %v4681 = vunpack.c.l.b16 %v1153
      %v4682 = vunpack.c.h.b16 %v1153
      %v4683 = vunpack.c.l.b16 %v1154
      %v4684 = vunpack.c.h.b16 %v1154
      %v4685 = vunpack.c.l.b16 %v1155
      %v4686 = vunpack.c.h.b16 %v1155
      %v4687 = vunpack.c.l.b16 %v1156
      %v4688 = vunpack.c.h.b16 %v1156
      %v4689 = vunpack.c.l.b16 %v1157
      %v4690 = vunpack.c.h.b16 %v1157
      %v4691 = vunpack.c.l.b16 %v1158
      %v4692 = vunpack.c.h.b16 %v1158
      %v4693 = vunpack.c.l.b16 %v1159
      %v4694 = vunpack.c.h.b16 %v1159
      %v4695 = vunpack.c.l.b16 %v1160
      %v4696 = vunpack.c.h.b16 %v1160
      %v4697 = vunpack.c.l.b16 %v1161
      %v4698 = vunpack.c.h.b16 %v1161
      %v4699 = vunpack.c.l.b16 %v1162
      %v4700 = vunpack.c.h.b16 %v1162
      %v4701 = vunpack.c.l.b16 %v1163
      %v4702 = vunpack.c.h.b16 %v1163
      %v4703 = vunpack.c.l.b16 %v1164
      %v4704 = vunpack.c.h.b16 %v1164
      %v4705 = vunpack.c.l.b16 %v1165
      %v4706 = vunpack.c.h.b16 %v1165
      %v4707 = vunpack.c.l.b16 %v1166
      %v4708 = vunpack.c.h.b16 %v1166
      %v4709 = vunpack.c.l.b16 %v1167
      %v4710 = vunpack.c.h.b16 %v1167
      %v4711 = vunpack.c.l.b16 %v1168
      %v4712 = vunpack.c.h.b16 %v1168
      %v4713 = vunpack.c.l.b16 %v1169
      %v4714 = vunpack.c.h.b16 %v1169
      %v4715 = vunpack.c.l.b16 %v1170
      %v4716 = vunpack.c.h.b16 %v1170
      %v4717 = vunpack.c.l.b16 %v1171
      %v4718 = vunpack.c.h.b16 %v1171
      %v4719 = vunpack.c.l.b16 %v1172
      %v4720 = vunpack.c.h.b16 %v1172
      %v4721 = vunpack.c.l.b16 %v1173
      %v4722 = vunpack.c.h.b16 %v1173
      %v4723 = vunpack.c.l.b16 %v1174
      %v4724 = vunpack.c.h.b16 %v1174
      %v4725 = vunpack.c.l.b16 %v1175
      %v4726 = vunpack.c.h.b16 %v1175
      %v4727 = vunpack.c.l.b16 %v1176
      %v4728 = vunpack.c.h.b16 %v1176
      %v4729 = vunpack.c.l.b16 %v1177
      %v4730 = vunpack.c.h.b16 %v1177
      %v4731 = vunpack.c.l.b16 %v1178
      %v4732 = vunpack.c.h.b16 %v1178
      %v4733 = vunpack.c.l.b16 %v1179
      %v4734 = vunpack.c.h.b16 %v1179
      %v4735 = vunpack.c.l.b16 %v1180
      %v4736 = vunpack.c.h.b16 %v1180
      %v4737 = vunpack.c.l.b16 %v1181
      %v4738 = vunpack.c.h.b16 %v1181
      %v4739 = vunpack.c.l.b16 %v1182
      %v4740 = vunpack.c.h.b16 %v1182
      %v4741 = vunpack.c.l.b16 %v1183
      %v4742 = vunpack.c.h.b16 %v1183
      %v4743 = vunpack.c.l.b16 %v1184
      %v4744 = vunpack.c.h.b16 %v1184
      %v4745 = vunpack.c.l.b16 %v1185
      %v4746 = vunpack.c.h.b16 %v1185
      %v4747 = vunpack.c.l.b16 %v1186
      %v4748 = vunpack.c.h.b16 %v1186
      %v4749 = vunpack.c.l.b16 %v1187
      %v4750 = vunpack.c.h.b16 %v1187
      %v4751 = vunpack.c.l.b16 %v1188
      %v4752 = vunpack.c.h.b16 %v1188
      %v4753 = vunpack.c.l.b16 %v1189
      %v4754 = vunpack.c.h.b16 %v1189
      %v4755 = vunpack.c.l.b16 %v1190
      %v4756 = vunpack.c.h.b16 %v1190
      %v4757 = vunpack.c.l.b16 %v1191
      %v4758 = vunpack.c.h.b16 %v1191
      %v4759 = vunpack.c.l.b16 %v1192
      %v4760 = vunpack.c.h.b16 %v1192
      %v4761 = vunpack.c.l.b16 %v1193
      %v4762 = vunpack.c.h.b16 %v1193
      %v4763 = vunpack.c.l.b16 %v1194
      %v4764 = vunpack.c.h.b16 %v1194
      %v4765 = vunpack.c.l.b16 %v1195
      %v4766 = vunpack.c.h.b16 %v1195
      %v4767 = vunpack.c.l.b16 %v1196
      %v4768 = vunpack.c.h.b16 %v1196
      %v4769 = vunpack.c.l.b16 %v1197
      %v4770 = vunpack.c.h.b16 %v1197
      %v4771 = vunpack.c.l.b16 %v1198
      %v4772 = vunpack.c.h.b16 %v1198
      %v4773 = vunpack.c.l.b16 %v1199
      %v4774 = vunpack.c.h.b16 %v1199
      %v4775 = vunpack.c.l.b16 %v1200
      %v4776 = vunpack.c.h.b16 %v1200
      %v4777 = vunpack.c.l.b16 %v1201
      %v4778 = vunpack.c.h.b16 %v1201
      %v4779 = vunpack.c.l.b16 %v1202
      %v4780 = vunpack.c.h.b16 %v1202
      %v4781 = vunpack.c.l.b16 %v1203
      %v4782 = vunpack.c.h.b16 %v1203
      %v4783 = vunpack.c.l.b16 %v1204
      %v4784 = vunpack.c.h.b16 %v1204
      %v4785 = vunpack.c.l.b16 %v1205
      %v4786 = vunpack.c.h.b16 %v1205
      %v4787 = vunpack.c.l.b16 %v1206
      %v4788 = vunpack.c.h.b16 %v1206
      %v4789 = vunpack.c.l.b16 %v1207
      %v4790 = vunpack.c.h.b16 %v1207
      %v4791 = vunpack.c.l.b16 %v1208
      %v4792 = vunpack.c.h.b16 %v1208
      %v4793 = vunpack.c.l.b16 %v1209
      %v4794 = vunpack.c.h.b16 %v1209
      %v4795 = vunpack.c.l.b16 %v1210
      %v4796 = vunpack.c.h.b16 %v1210
      %v4797 = vunpack.c.l.b16 %v1211
      %v4798 = vunpack.c.h.b16 %v1211
      %v4799 = vunpack.c.l.b16 %v1212
      %v4800 = vunpack.c.h.b16 %v1212
      %v4801 = vunpack.c.l.b16 %v1213
      %v4802 = vunpack.c.h.b16 %v1213
      %v4803 = vunpack.c.l.b16 %v1214
      %v4804 = vunpack.c.h.b16 %v1214
      %v4805 = vunpack.c.l.b16 %v1215
      %v4806 = vunpack.c.h.b16 %v1215
      %v4807 = vunpack.c.l.b16 %v1216
      %v4808 = vunpack.c.h.b16 %v1216
      %v4809 = vunpack.c.l.b16 %v1217
      %v4810 = vunpack.c.h.b16 %v1217
      %v4811 = vunpack.c.l.b16 %v1218
      %v4812 = vunpack.c.h.b16 %v1218
      %v4813 = vunpack.c.l.b16 %v1219
      %v4814 = vunpack.c.h.b16 %v1219
      %v4815 = vunpack.c.l.b16 %v1220
      %v4816 = vunpack.c.h.b16 %v1220
      %v4817 = vunpack.c.l.b16 %v1221
      %v4818 = vunpack.c.h.b16 %v1221
      %v4819 = vunpack.c.l.b16 %v1222
      %v4820 = vunpack.c.h.b16 %v1222
      %v4821 = vunpack.c.l.b16 %v1223
      %v4822 = vunpack.c.h.b16 %v1223
      %v4823 = vunpack.c.l.b16 %v1224
      %v4824 = vunpack.c.h.b16 %v1224
      %v4825 = vunpack.c.l.b16 %v1225
      %v4826 = vunpack.c.h.b16 %v1225
      %v4827 = vunpack.c.l.b16 %v1226
      %v4828 = vunpack.c.h.b16 %v1226
      %v4829 = vunpack.c.l.b16 %v1227
      %v4830 = vunpack.c.h.b16 %v1227
      %v4831 = vunpack.c.l.b16 %v1228
      %v4832 = vunpack.c.h.b16 %v1228
      %v4833 = vunpack.c.l.b16 %v1229
      %v4834 = vunpack.c.h.b16 %v1229
      %v4835 = vunpack.c.l.b16 %v1230
      %v4836 = vunpack.c.h.b16 %v1230
      %v4837 = vunpack.c.l.b16 %v1231
      %v4838 = vunpack.c.h.b16 %v1231
      %v4839 = vunpack.c.l.b16 %v1232
      %v4840 = vunpack.c.h.b16 %v1232
      %v4841 = vunpack.c.l.b16 %v1233
      %v4842 = vunpack.c.h.b16 %v1233
      %v4843 = vunpack.c.l.b16 %v1234
      %v4844 = vunpack.c.h.b16 %v1234
      %v4845 = vunpack.c.l.b16 %v1235
      %v4846 = vunpack.c.h.b16 %v1235
      %v4847 = vunpack.c.l.b16 %v1236
      %v4848 = vunpack.c.h.b16 %v1236
      %v4849 = vunpack.c.l.b16 %v1237
      %v4850 = vunpack.c.h.b16 %v1237
      %v4851 = vunpack.c.l.b16 %v1238
      %v4852 = vunpack.c.h.b16 %v1238
      %v4853 = vunpack.c.l.b16 %v1239
      %v4854 = vunpack.c.h.b16 %v1239
      %v4855 = vunpack.c.l.b16 %v1240
      %v4856 = vunpack.c.h.b16 %v1240
      %v4857 = vunpack.c.l.b16 %v1241
      %v4858 = vunpack.c.h.b16 %v1241
      %v4859 = vunpack.c.l.b16 %v1242
      %v4860 = vunpack.c.h.b16 %v1242
      %v4861 = vunpack.c.l.b16 %v1243
      %v4862 = vunpack.c.h.b16 %v1243
      %v4863 = vunpack.c.l.b16 %v1244
      %v4864 = vunpack.c.h.b16 %v1244
      %v4865 = vunpack.c.l.b16 %v1245
      %v4866 = vunpack.c.h.b16 %v1245
      %v4867 = vunpack.c.l.b16 %v1246
      %v4868 = vunpack.c.h.b16 %v1246
      %v4869 = vunpack.c.l.b16 %v1247
      %v4870 = vunpack.c.h.b16 %v1247
      %v4871 = vunpack.c.l.b16 %v1248
      %v4872 = vunpack.c.h.b16 %v1248
      %v4873 = vunpack.c.l.b16 %v1249
      %v4874 = vunpack.c.h.b16 %v1249
      %v4875 = vunpack.c.l.b16 %v1250
      %v4876 = vunpack.c.h.b16 %v1250
      %v4877 = vunpack.c.l.b16 %v1251
      %v4878 = vunpack.c.h.b16 %v1251
      %v4879 = vunpack.c.l.b16 %v1252
      %v4880 = vunpack.c.h.b16 %v1252
      %v4881 = vunpack.c.l.b16 %v1253
      %v4882 = vunpack.c.h.b16 %v1253
      %v4883 = vunpack.c.l.b16 %v1254
      %v4884 = vunpack.c.h.b16 %v1254
      %v4885 = vunpack.c.l.b16 %v1255
      %v4886 = vunpack.c.h.b16 %v1255
      %v4887 = vunpack.c.l.b16 %v1256
      %v4888 = vunpack.c.h.b16 %v1256
      %v4889 = vunpack.c.l.b16 %v1257
      %v4890 = vunpack.c.h.b16 %v1257
      %v4891 = vunpack.c.l.b16 %v1258
      %v4892 = vunpack.c.h.b16 %v1258
      %v4893 = vunpack.c.l.b16 %v1259
      %v4894 = vunpack.c.h.b16 %v1259
      %v4895 = vunpack.c.l.b16 %v1260
      %v4896 = vunpack.c.h.b16 %v1260
      %v4897 = vunpack.c.l.b16 %v1261
      %v4898 = vunpack.c.h.b16 %v1261
      %v4899 = vunpack.c.l.b16 %v1262
      %v4900 = vunpack.c.h.b16 %v1262
      %v4901 = vunpack.c.l.b16 %v1263
      %v4902 = vunpack.c.h.b16 %v1263
      %v4903 = vunpack.c.l.b16 %v1264
      %v4904 = vunpack.c.h.b16 %v1264
      %v4905 = vunpack.c.l.b16 %v1265
      %v4906 = vunpack.c.h.b16 %v1265
      %v4907 = vunpack.c.l.b16 %v1266
      %v4908 = vunpack.c.h.b16 %v1266
      %v4909 = vunpack.c.l.b16 %v1267
      %v4910 = vunpack.c.h.b16 %v1267
      %v4911 = vunpack.c.l.b16 %v1268
      %v4912 = vunpack.c.h.b16 %v1268
      %v4913 = vunpack.c.l.b16 %v1269
      %v4914 = vunpack.c.h.b16 %v1269
      %v4915 = vunpack.c.l.b16 %v1270
      %v4916 = vunpack.c.h.b16 %v1270
      %v4917 = vunpack.c.l.b16 %v1271
      %v4918 = vunpack.c.h.b16 %v1271
      %v4919 = vunpack.c.l.b16 %v1272
      %v4920 = vunpack.c.h.b16 %v1272
      %v4921 = vunpack.c.l.b16 %v1273
      %v4922 = vunpack.c.h.b16 %v1273
      %v4923 = vunpack.c.l.b16 %v1274
      %v4924 = vunpack.c.h.b16 %v1274
      %v4925 = vunpack.c.l.b16 %v1275
      %v4926 = vunpack.c.h.b16 %v1275
      %v4927 = vunpack.c.l.b16 %v1276
      %v4928 = vunpack.c.h.b16 %v1276
      %v4929 = vpack.c.b16 %v3937, %v3905
      %v4930 = vpack.c.b16 %v3938, %v3906
      %v4931 = vpack.c.b16 %v3939, %v3907
      %v4932 = vpack.c.b16 %v3940, %v3908
      %v4933 = vpack.c.b16 %v3941, %v3909
      %v4934 = vpack.c.b16 %v3942, %v3910
      %v4935 = vpack.c.b16 %v3943, %v3911
      %v4936 = vpack.c.b16 %v3944, %v3912
      %v4937 = vpack.c.b16 %v3945, %v3913
      %v4938 = vpack.c.b16 %v3946, %v3914
      %v4939 = vpack.c.b16 %v3947, %v3915
      %v4940 = vpack.c.b16 %v3948, %v3916
      %v4941 = vpack.c.b16 %v3949, %v3917
      %v4942 = vpack.c.b16 %v3950, %v3918
      %v4943 = vpack.c.b16 %v3951, %v3919
      %v4944 = vpack.c.b16 %v3952, %v3920
      %v4945 = vpack.c.b16 %v3953, %v3921
      %v4946 = vpack.c.b16 %v3954, %v3922
      %v4947 = vpack.c.b16 %v3955, %v3923
      %v4948 = vpack.c.b16 %v3956, %v3924
      %v4949 = vpack.c.b16 %v3957, %v3925
      %v4950 = vpack.c.b16 %v3958, %v3926
      %v4951 = vpack.c.b16 %v3959, %v3927
      %v4952 = vpack.c.b16 %v3960, %v3928
      %v4953 = vpack.c.b16 %v3961, %v3929
      %v4954 = vpack.c.b16 %v3962, %v3930
      %v4955 = vpack.c.b16 %v3963, %v3931
      %v4956 = vpack.c.b16 %v3964, %v3932
      %v4957 = vpack.c.b16 %v3965, %v3933
      %v4958 = vpack.c.b16 %v3966, %v3934
      %v4959 = vpack.c.b16 %v3967, %v3935
      %v4960 = vpack.c.b16 %v3968, %v3936
      %v4961 = vpack.c.b16 %v4001, %v3969
      %v4962 = vpack.c.b16 %v4002, %v3970
      %v4963 = vpack.c.b16 %v4003, %v3971
      %v4964 = vpack.c.b16 %v4004, %v3972
      %v4965 = vpack.c.b16 %v4005, %v3973
      %v4966 = vpack.c.b16 %v4006, %v3974
      %v4967 = vpack.c.b16 %v4007, %v3975
      %v4968 = vpack.c.b16 %v4008, %v3976
      %v4969 = vpack.c.b16 %v4009, %v3977
      %v4970 = vpack.c.b16 %v4010, %v3978
      %v4971 = vpack.c.b16 %v4011, %v3979
      %v4972 = vpack.c.b16 %v4012, %v3980
      %v4973 = vpack.c.b16 %v4013, %v3981
      %v4974 = vpack.c.b16 %v4014, %v3982
      %v4975 = vpack.c.b16 %v4015, %v3983
      %v4976 = vpack.c.b16 %v4016, %v3984
      %v4977 = vpack.c.b16 %v4017, %v3985
      %v4978 = vpack.c.b16 %v4018, %v3986
      %v4979 = vpack.c.b16 %v4019, %v3987
      %v4980 = vpack.c.b16 %v4020, %v3988
      %v4981 = vpack.c.b16 %v4021, %v3989
      %v4982 = vpack.c.b16 %v4022, %v3990
      %v4983 = vpack.c.b16 %v4023, %v3991
      %v4984 = vpack.c.b16 %v4024, %v3992
      %v4985 = vpack.c.b16 %v4025, %v3993
      %v4986 = vpack.c.b16 %v4026, %v3994
      %v4987 = vpack.c.b16 %v4027, %v3995
      %v4988 = vpack.c.b16 %v4028, %v3996
      %v4989 = vpack.c.b16 %v4029, %v3997
      %v4990 = vpack.c.b16 %v4030, %v3998
      %v4991 = vpack.c.b16 %v4031, %v3999
      %v4992 = vpack.c.b16 %v4032, %v4000
      %v4993 = vpack.c.b16 %v4065, %v4033
      %v4994 = vpack.c.b16 %v4066, %v4034
      %v4995 = vpack.c.b16 %v4067, %v4035
      %v4996 = vpack.c.b16 %v4068, %v4036
      %v4997 = vpack.c.b16 %v4069, %v4037
      %v4998 = vpack.c.b16 %v4070, %v4038
      %v4999 = vpack.c.b16 %v4071, %v4039
      %v5000 = vpack.c.b16 %v4072, %v4040
      %v5001 = vpack.c.b16 %v4073, %v4041
      %v5002 = vpack.c.b16 %v4074, %v4042
      %v5003 = vpack.c.b16 %v4075, %v4043
      %v5004 = vpack.c.b16 %v4076, %v4044
      %v5005 = vpack.c.b16 %v4077, %v4045
      %v5006 = vpack.c.b16 %v4078, %v4046
      %v5007 = vpack.c.b16 %v4079, %v4047
      %v5008 = vpack.c.b16 %v4080, %v4048
      %v5009 = vpack.c.b16 %v4081, %v4049
      %v5010 = vpack.c.b16 %v4082, %v4050
      %v5011 = vpack.c.b16 %v4083, %v4051
      %v5012 = vpack.c.b16 %v4084, %v4052
      %v5013 = vpack.c.b16 %v4085, %v4053
      %v5014 = vpack.c.b16 %v4086, %v4054
      %v5015 = vpack.c.b16 %v4087, %v4055
      %v5016 = vpack.c.b16 %v4088, %v4056
      %v5017 = vpack.c.b16 %v4089, %v4057
      %v5018 = vpack.c.b16 %v4090, %v4058
      %v5019 = vpack.c.b16 %v4091, %v4059
      %v5020 = vpack.c.b16 %v4092, %v4060
      %v5021 = vpack.c.b16 %v4093, %v4061
      %v5022 = vpack.c.b16 %v4094, %v4062
      %v5023 = vpack.c.b16 %v4095, %v4063
      %v5024 = vpack.c.b16 %v4096, %v4064
      %v5025 = vpack.c.b16 %v4129, %v4097
      %v5026 = vpack.c.b16 %v4130, %v4098
      %v5027 = vpack.c.b16 %v4131, %v4099
      %v5028 = vpack.c.b16 %v4132, %v4100
      %v5029 = vpack.c.b16 %v4133, %v4101
      %v5030 = vpack.c.b16 %v4134, %v4102
      %v5031 = vpack.c.b16 %v4135, %v4103
      %v5032 = vpack.c.b16 %v4136, %v4104
      %v5033 = vpack.c.b16 %v4137, %v4105
      %v5034 = vpack.c.b16 %v4138, %v4106
      %v5035 = vpack.c.b16 %v4139, %v4107
      %v5036 = vpack.c.b16 %v4140, %v4108
      %v5037 = vpack.c.b16 %v4141, %v4109
      %v5038 = vpack.c.b16 %v4142, %v4110
      %v5039 = vpack.c.b16 %v4143, %v4111
      %v5040 = vpack.c.b16 %v4144, %v4112
      %v5041 = vpack.c.b16 %v4145, %v4113
      %v5042 = vpack.c.b16 %v4146, %v4114
      %v5043 = vpack.c.b16 %v4147, %v4115
      %v5044 = vpack.c.b16 %v4148, %v4116
      %v5045 = vpack.c.b16 %v4149, %v4117
      %v5046 = vpack.c.b16 %v4150, %v4118
      %v5047 = vpack.c.b16 %v4151, %v4119
      %v5048 = vpack.c.b16 %v4152, %v4120
      %v5049 = vpack.c.b16 %v4153, %v4121
      %v5050 = vpack.c.b16 %v4154, %v4122
      %v5051 = vpack.c.b16 %v4155, %v4123
      %v5052 = vpack.c.b16 %v4156, %v4124
      %v5053 = vpack.c.b16 %v4157, %v4125
      %v5054 = vpack.c.b16 %v4158, %v4126
      %v5055 = vpack.c.b16 %v4159, %v4127
      %v5056 = vpack.c.b16 %v4160, %v4128
      %v5057 = vpack.c.b16 %v4193, %v4161
      %v5058 = vpack.c.b16 %v4194, %v4162
      %v5059 = vpack.c.b16 %v4195, %v4163
      %v5060 = vpack.c.b16 %v4196, %v4164
      %v5061 = vpack.c.b16 %v4197, %v4165
      %v5062 = vpack.c.b16 %v4198, %v4166
      %v5063 = vpack.c.b16 %v4199, %v4167
      %v5064 = vpack.c.b16 %v4200, %v4168
      %v5065 = vpack.c.b16 %v4201, %v4169
      %v5066 = vpack.c.b16 %v4202, %v4170
      %v5067 = vpack.c.b16 %v4203, %v4171
      %v5068 = vpack.c.b16 %v4204, %v4172
      %v5069 = vpack.c.b16 %v4205, %v4173
      %v5070 = vpack.c.b16 %v4206, %v4174
      %v5071 = vpack.c.b16 %v4207, %v4175
      %v5072 = vpack.c.b16 %v4208, %v4176
      %v5073 = vpack.c.b16 %v4209, %v4177
      %v5074 = vpack.c.b16 %v4210, %v4178
      %v5075 = vpack.c.b16 %v4211, %v4179
      %v5076 = vpack.c.b16 %v4212, %v4180
      %v5077 = vpack.c.b16 %v4213, %v4181
      %v5078 = vpack.c.b16 %v4214, %v4182
      %v5079 = vpack.c.b16 %v4215, %v4183
      %v5080 = vpack.c.b16 %v4216, %v4184
      %v5081 = vpack.c.b16 %v4217, %v4185
      %v5082 = vpack.c.b16 %v4218, %v4186
      %v5083 = vpack.c.b16 %v4219, %v4187
      %v5084 = vpack.c.b16 %v4220, %v4188
      %v5085 = vpack.c.b16 %v4221, %v4189
      %v5086 = vpack.c.b16 %v4222, %v4190
      %v5087 = vpack.c.b16 %v4223, %v4191
      %v5088 = vpack.c.b16 %v4224, %v4192
      %v5089 = vpack.c.b16 %v4257, %v4225
      %v5090 = vpack.c.b16 %v4258, %v4226
      %v5091 = vpack.c.b16 %v4259, %v4227
      %v5092 = vpack.c.b16 %v4260, %v4228
      %v5093 = vpack.c.b16 %v4261, %v4229
      %v5094 = vpack.c.b16 %v4262, %v4230
      %v5095 = vpack.c.b16 %v4263, %v4231
      %v5096 = vpack.c.b16 %v4264, %v4232
      %v5097 = vpack.c.b16 %v4265, %v4233
      %v5098 = vpack.c.b16 %v4266, %v4234
      %v5099 = vpack.c.b16 %v4267, %v4235
      %v5100 = vpack.c.b16 %v4268, %v4236
      %v5101 = vpack.c.b16 %v4269, %v4237
      %v5102 = vpack.c.b16 %v4270, %v4238
      %v5103 = vpack.c.b16 %v4271, %v4239
      %v5104 = vpack.c.b16 %v4272, %v4240
      %v5105 = vpack.c.b16 %v4273, %v4241
      %v5106 = vpack.c.b16 %v4274, %v4242
      %v5107 = vpack.c.b16 %v4275, %v4243
      %v5108 = vpack.c.b16 %v4276, %v4244
      %v5109 = vpack.c.b16 %v4277, %v4245
      %v5110 = vpack.c.b16 %v4278, %v4246
      %v5111 = vpack.c.b16 %v4279, %v4247
      %v5112 = vpack.c.b16 %v4280, %v4248
      %v5113 = vpack.c.b16 %v4281, %v4249
      %v5114 = vpack.c.b16 %v4282, %v4250
      %v5115 = vpack.c.b16 %v4283, %v4251
      %v5116 = vpack.c.b16 %v4284, %v4252
      %v5117 = vpack.c.b16 %v4285, %v4253
      %v5118 = vpack.c.b16 %v4286, %v4254
      %v5119 = vpack.c.b16 %v4287, %v4255
      %v5120 = vpack.c.b16 %v4288, %v4256
      %v5121 = vpack.c.b16 %v4321, %v4289
      %v5122 = vpack.c.b16 %v4322, %v4290
      %v5123 = vpack.c.b16 %v4323, %v4291
      %v5124 = vpack.c.b16 %v4324, %v4292
      %v5125 = vpack.c.b16 %v4325, %v4293
      %v5126 = vpack.c.b16 %v4326, %v4294
      %v5127 = vpack.c.b16 %v4327, %v4295
      %v5128 = vpack.c.b16 %v4328, %v4296
      %v5129 = vpack.c.b16 %v4329, %v4297
      %v5130 = vpack.c.b16 %v4330, %v4298
      %v5131 = vpack.c.b16 %v4331, %v4299
      %v5132 = vpack.c.b16 %v4332, %v4300
      %v5133 = vpack.c.b16 %v4333, %v4301
      %v5134 = vpack.c.b16 %v4334, %v4302
      %v5135 = vpack.c.b16 %v4335, %v4303
      %v5136 = vpack.c.b16 %v4336, %v4304
      %v5137 = vpack.c.b16 %v4337, %v4305
      %v5138 = vpack.c.b16 %v4338, %v4306
      %v5139 = vpack.c.b16 %v4339, %v4307
      %v5140 = vpack.c.b16 %v4340, %v4308
      %v5141 = vpack.c.b16 %v4341, %v4309
      %v5142 = vpack.c.b16 %v4342, %v4310
      %v5143 = vpack.c.b16 %v4343, %v4311
      %v5144 = vpack.c.b16 %v4344, %v4312
      %v5145 = vpack.c.b16 %v4345, %v4313
      %v5146 = vpack.c.b16 %v4346, %v4314
      %v5147 = vpack.c.b16 %v4347, %v4315
      %v5148 = vpack.c.b16 %v4348, %v4316
      %v5149 = vpack.c.b16 %v4349, %v4317
      %v5150 = vpack.c.b16 %v4350, %v4318
      %v5151 = vpack.c.b16 %v4351, %v4319
      %v5152 = vpack.c.b16 %v4352, %v4320
      %v5153 = vpack.c.b16 %v4385, %v4353
      %v5154 = vpack.c.b16 %v4386, %v4354
      %v5155 = vpack.c.b16 %v4387, %v4355
      %v5156 = vpack.c.b16 %v4388, %v4356
      %v5157 = vpack.c.b16 %v4389, %v4357
      %v5158 = vpack.c.b16 %v4390, %v4358
      %v5159 = vpack.c.b16 %v4391, %v4359
      %v5160 = vpack.c.b16 %v4392, %v4360
      %v5161 = vpack.c.b16 %v4393, %v4361
      %v5162 = vpack.c.b16 %v4394, %v4362
      %v5163 = vpack.c.b16 %v4395, %v4363
      %v5164 = vpack.c.b16 %v4396, %v4364
      %v5165 = vpack.c.b16 %v4397, %v4365
      %v5166 = vpack.c.b16 %v4398, %v4366
      %v5167 = vpack.c.b16 %v4399, %v4367
      %v5168 = vpack.c.b16 %v4400, %v4368
      %v5169 = vpack.c.b16 %v4401, %v4369
      %v5170 = vpack.c.b16 %v4402, %v4370
      %v5171 = vpack.c.b16 %v4403, %v4371
      %v5172 = vpack.c.b16 %v4404, %v4372
      %v5173 = vpack.c.b16 %v4405, %v4373
      %v5174 = vpack.c.b16 %v4406, %v4374
      %v5175 = vpack.c.b16 %v4407, %v4375
      %v5176 = vpack.c.b16 %v4408, %v4376
      %v5177 = vpack.c.b16 %v4409, %v4377
      %v5178 = vpack.c.b16 %v4410, %v4378
      %v5179 = vpack.c.b16 %v4411, %v4379
      %v5180 = vpack.c.b16 %v4412, %v4380
      %v5181 = vpack.c.b16 %v4413, %v4381
      %v5182 = vpack.c.b16 %v4414, %v4382
      %v5183 = vpack.c.b16 %v4415, %v4383
      %v5184 = vpack.c.b16 %v4416, %v4384
      %v5185 = vpack.c.b16 %v4449, %v4417
      %v5186 = vpack.c.b16 %v4450, %v4418
      %v5187 = vpack.c.b16 %v4451, %v4419
      %v5188 = vpack.c.b16 %v4452, %v4420
      %v5189 = vpack.c.b16 %v4453, %v4421
      %v5190 = vpack.c.b16 %v4454, %v4422
      %v5191 = vpack.c.b16 %v4455, %v4423
      %v5192 = vpack.c.b16 %v4456, %v4424
      %v5193 = vpack.c.b16 %v4457, %v4425
      %v5194 = vpack.c.b16 %v4458, %v4426
      %v5195 = vpack.c.b16 %v4459, %v4427
      %v5196 = vpack.c.b16 %v4460, %v4428
      %v5197 = vpack.c.b16 %v4461, %v4429
      %v5198 = vpack.c.b16 %v4462, %v4430
      %v5199 = vpack.c.b16 %v4463, %v4431
      %v5200 = vpack.c.b16 %v4464, %v4432
      %v5201 = vpack.c.b16 %v4465, %v4433
      %v5202 = vpack.c.b16 %v4466, %v4434
      %v5203 = vpack.c.b16 %v4467, %v4435
      %v5204 = vpack.c.b16 %v4468, %v4436
      %v5205 = vpack.c.b16 %v4469, %v4437
      %v5206 = vpack.c.b16 %v4470, %v4438
      %v5207 = vpack.c.b16 %v4471, %v4439
      %v5208 = vpack.c.b16 %v4472, %v4440
      %v5209 = vpack.c.b16 %v4473, %v4441
      %v5210 = vpack.c.b16 %v4474, %v4442
      %v5211 = vpack.c.b16 %v4475, %v4443
      %v5212 = vpack.c.b16 %v4476, %v4444
      %v5213 = vpack.c.b16 %v4477, %v4445
      %v5214 = vpack.c.b16 %v4478, %v4446
      %v5215 = vpack.c.b16 %v4479, %v4447
      %v5216 = vpack.c.b16 %v4480, %v4448
      %v5217 = vpack.c.b16 %v4513, %v4481
      %v5218 = vpack.c.b16 %v4514, %v4482
      %v5219 = vpack.c.b16 %v4515, %v4483
      %v5220 = vpack.c.b16 %v4516, %v4484
      %v5221 = vpack.c.b16 %v4517, %v4485
      %v5222 = vpack.c.b16 %v4518, %v4486
      %v5223 = vpack.c.b16 %v4519, %v4487
      %v5224 = vpack.c.b16 %v4520, %v4488
      %v5225 = vpack.c.b16 %v4521, %v4489
      %v5226 = vpack.c.b16 %v4522, %v4490
      %v5227 = vpack.c.b16 %v4523, %v4491
      %v5228 = vpack.c.b16 %v4524, %v4492
      %v5229 = vpack.c.b16 %v4525, %v4493
      %v5230 = vpack.c.b16 %v4526, %v4494
      %v5231 = vpack.c.b16 %v4527, %v4495
      %v5232 = vpack.c.b16 %v4528, %v4496
      %v5233 = vpack.c.b16 %v4529, %v4497
      %v5234 = vpack.c.b16 %v4530, %v4498
      %v5235 = vpack.c.b16 %v4531, %v4499
      %v5236 = vpack.c.b16 %v4532, %v4500
      %v5237 = vpack.c.b16 %v4533, %v4501
      %v5238 = vpack.c.b16 %v4534, %v4502
      %v5239 = vpack.c.b16 %v4535, %v4503
      %v5240 = vpack.c.b16 %v4536, %v4504
      %v5241 = vpack.c.b16 %v4537, %v4505
      %v5242 = vpack.c.b16 %v4538, %v4506
      %v5243 = vpack.c.b16 %v4539, %v4507
      %v5244 = vpack.c.b16 %v4540, %v4508
      %v5245 = vpack.c.b16 %v4541, %v4509
      %v5246 = vpack.c.b16 %v4542, %v4510
      %v5247 = vpack.c.b16 %v4543, %v4511
      %v5248 = vpack.c.b16 %v4544, %v4512
      %v5249 = vpack.c.b16 %v4577, %v4545
      %v5250 = vpack.c.b16 %v4578, %v4546
      %v5251 = vpack.c.b16 %v4579, %v4547
      %v5252 = vpack.c.b16 %v4580, %v4548
      %v5253 = vpack.c.b16 %v4581, %v4549
      %v5254 = vpack.c.b16 %v4582, %v4550
      %v5255 = vpack.c.b16 %v4583, %v4551
      %v5256 = vpack.c.b16 %v4584, %v4552
      %v5257 = vpack.c.b16 %v4585, %v4553
      %v5258 = vpack.c.b16 %v4586, %v4554
      %v5259 = vpack.c.b16 %v4587, %v4555
      %v5260 = vpack.c.b16 %v4588, %v4556
      %v5261 = vpack.c.b16 %v4589, %v4557
      %v5262 = vpack.c.b16 %v4590, %v4558
      %v5263 = vpack.c.b16 %v4591, %v4559
      %v5264 = vpack.c.b16 %v4592, %v4560
      %v5265 = vpack.c.b16 %v4593, %v4561
      %v5266 = vpack.c.b16 %v4594, %v4562
      %v5267 = vpack.c.b16 %v4595, %v4563
      %v5268 = vpack.c.b16 %v4596, %v4564
      %v5269 = vpack.c.b16 %v4597, %v4565
      %v5270 = vpack.c.b16 %v4598, %v4566
      %v5271 = vpack.c.b16 %v4599, %v4567
      %v5272 = vpack.c.b16 %v4600, %v4568
      %v5273 = vpack.c.b16 %v4601, %v4569
      %v5274 = vpack.c.b16 %v4602, %v4570
      %v5275 = vpack.c.b16 %v4603, %v4571
      %v5276 = vpack.c.b16 %v4604, %v4572
      %v5277 = vpack.c.b16 %v4605, %v4573
      %v5278 = vpack.c.b16 %v4606, %v4574
      %v5279 = vpack.c.b16 %v4607, %v4575
      %v5280 = vpack.c.b16 %v4608, %v4576
      %v5281 = vpack.c.b16 %v4641, %v4609
      %v5282 = vpack.c.b16 %v4642, %v4610
      %v5283 = vpack.c.b16 %v4643, %v4611
      %v5284 = vpack.c.b16 %v4644, %v4612
      %v5285 = vpack.c.b16 %v4645, %v4613
      %v5286 = vpack.c.b16 %v4646, %v4614
      %v5287 = vpack.c.b16 %v4647, %v4615
      %v5288 = vpack.c.b16 %v4648, %v4616
      %v5289 = vpack.c.b16 %v4649, %v4617
      %v5290 = vpack.c.b16 %v4650, %v4618
      %v5291 = vpack.c.b16 %v4651, %v4619
      %v5292 = vpack.c.b16 %v4652, %v4620
      %v5293 = vpack.c.b16 %v4653, %v4621
      %v5294 = vpack.c.b16 %v4654, %v4622
      %v5295 = vpack.c.b16 %v4655, %v4623
      %v5296 = vpack.c.b16 %v4656, %v4624
      %v5297 = vpack.c.b16 %v4657, %v4625
      %v5298 = vpack.c.b16 %v4658, %v4626
      %v5299 = vpack.c.b16 %v4659, %v4627
      %v5300 = vpack.c.b16 %v4660, %v4628
      %v5301 = vpack.c.b16 %v4661, %v4629
      %v5302 = vpack.c.b16 %v4662, %v4630
      %v5303 = vpack.c.b16 %v4663, %v4631
      %v5304 = vpack.c.b16 %v4664, %v4632
      %v5305 = vpack.c.b16 %v4665, %v4633
      %v5306 = vpack.c.b16 %v4666, %v4634
      %v5307 = vpack.c.b16 %v4667, %v4635
      %v5308 = vpack.c.b16 %v4668, %v4636
      %v5309 = vpack.c.b16 %v4669, %v4637
      %v5310 = vpack.c.b16 %v4670, %v4638
      %v5311 = vpack.c.b16 %v4671, %v4639
      %v5312 = vpack.c.b16 %v4672, %v4640
      %v5313 = vpack.c.b16 %v4705, %v4673
      %v5314 = vpack.c.b16 %v4706, %v4674
      %v5315 = vpack.c.b16 %v4707, %v4675
      %v5316 = vpack.c.b16 %v4708, %v4676
      %v5317 = vpack.c.b16 %v4709, %v4677
      %v5318 = vpack.c.b16 %v4710, %v4678
      %v5319 = vpack.c.b16 %v4711, %v4679
      %v5320 = vpack.c.b16 %v4712, %v4680
      %v5321 = vpack.c.b16 %v4713, %v4681
      %v5322 = vpack.c.b16 %v4714, %v4682
      %v5323 = vpack.c.b16 %v4715, %v4683
      %v5324 = vpack.c.b16 %v4716, %v4684
      %v5325 = vpack.c.b16 %v4717, %v4685
      %v5326 = vpack.c.b16 %v4718, %v4686
      %v5327 = vpack.c.b16 %v4719, %v4687
      %v5328 = vpack.c.b16 %v4720, %v4688
      %v5329 = vpack.c.b16 %v4721, %v4689
      %v5330 = vpack.c.b16 %v4722, %v4690
      %v5331 = vpack.c.b16 %v4723, %v4691
      %v5332 = vpack.c.b16 %v4724, %v4692
      %v5333 = vpack.c.b16 %v4725, %v4693
      %v5334 = vpack.c.b16 %v4726, %v4694
      %v5335 = vpack.c.b16 %v4727, %v4695
      %v5336 = vpack.c.b16 %v4728, %v4696
      %v5337 = vpack.c.b16 %v4729, %v4697
      %v5338 = vpack.c.b16 %v4730, %v4698
      %v5339 = vpack.c.b16 %v4731, %v4699
      %v5340 = vpack.c.b16 %v4732, %v4700
      %v5341 = vpack.c.b16 %v4733, %v4701
      %v5342 = vpack.c.b16 %v4734, %v4702
      %v5343 = vpack.c.b16 %v4735, %v4703
      %v5344 = vpack.c.b16 %v4736, %v4704
      %v5345 = vpack.c.b16 %v4769, %v4737
      %v5346 = vpack.c.b16 %v4770, %v4738
      %v5347 = vpack.c.b16 %v4771, %v4739
      %v5348 = vpack.c.b16 %v4772, %v4740
      %v5349 = vpack.c.b16 %v4773, %v4741
      %v5350 = vpack.c.b16 %v4774, %v4742
      %v5351 = vpack.c.b16 %v4775, %v4743
      %v5352 = vpack.c.b16 %v4776, %v4744
      %v5353 = vpack.c.b16 %v4777, %v4745
      %v5354 = vpack.c.b16 %v4778, %v4746
      %v5355 = vpack.c.b16 %v4779, %v4747
      %v5356 = vpack.c.b16 %v4780, %v4748
      %v5357 = vpack.c.b16 %v4781, %v4749
      %v5358 = vpack.c.b16 %v4782, %v4750
      %v5359 = vpack.c.b16 %v4783, %v4751
      %v5360 = vpack.c.b16 %v4784, %v4752
      %v5361 = vpack.c.b16 %v4785, %v4753
      %v5362 = vpack.c.b16 %v4786, %v4754
      %v5363 = vpack.c.b16 %v4787, %v4755
      %v5364 = vpack.c.b16 %v4788, %v4756
      %v5365 = vpack.c.b16 %v4789, %v4757
      %v5366 = vpack.c.b16 %v4790, %v4758
      %v5367 = vpack.c.b16 %v4791, %v4759
      %v5368 = vpack.c.b16 %v4792, %v4760
      %v5369 = vpack.c.b16 %v4793, %v4761
      %v5370 = vpack.c.b16 %v4794, %v4762
      %v5371 = vpack.c.b16 %v4795, %v4763
      %v5372 = vpack.c.b16 %v4796, %v4764
      %v5373 = vpack.c.b16 %v4797, %v4765
      %v5374 = vpack.c.b16 %v4798, %v4766
      %v5375 = vpack.c.b16 %v4799, %v4767
      %v5376 = vpack.c.b16 %v4800, %v4768
      %v5377 = vpack.c.b16 %v4833, %v4801
      %v5378 = vpack.c.b16 %v4834, %v4802
      %v5379 = vpack.c.b16 %v4835, %v4803
      %v5380 = vpack.c.b16 %v4836, %v4804
      %v5381 = vpack.c.b16 %v4837, %v4805
      %v5382 = vpack.c.b16 %v4838, %v4806
      %v5383 = vpack.c.b16 %v4839, %v4807
      %v5384 = vpack.c.b16 %v4840, %v4808
      %v5385 = vpack.c.b16 %v4841, %v4809
      %v5386 = vpack.c.b16 %v4842, %v4810
      %v5387 = vpack.c.b16 %v4843, %v4811
      %v5388 = vpack.c.b16 %v4844, %v4812
      %v5389 = vpack.c.b16 %v4845, %v4813
      %v5390 = vpack.c.b16 %v4846, %v4814
      %v5391 = vpack.c.b16 %v4847, %v4815
      %v5392 = vpack.c.b16 %v4848, %v4816
      %v5393 = vpack.c.b16 %v4849, %v4817
      %v5394 = vpack.c.b16 %v4850, %v4818
      %v5395 = vpack.c.b16 %v4851, %v4819
      %v5396 = vpack.c.b16 %v4852, %v4820
      %v5397 = vpack.c.b16 %v4853, %v4821
      %v5398 = vpack.c.b16 %v4854, %v4822
      %v5399 = vpack.c.b16 %v4855, %v4823
      %v5400 = vpack.c.b16 %v4856, %v4824
      %v5401 = vpack.c.b16 %v4857, %v4825
      %v5402 = vpack.c.b16 %v4858, %v4826
      %v5403 = vpack.c.b16 %v4859, %v4827
      %v5404 = vpack.c.b16 %v4860, %v4828
      %v5405 = vpack.c.b16 %v4861, %v4829
      %v5406 = vpack.c.b16 %v4862, %v4830
      %v5407 = vpack.c.b16 %v4863, %v4831
      %v5408 = vpack.c.b16 %v4864, %v4832
      %v5409 = vpack.c.b16 %v4897, %v4865
      %v5410 = vpack.c.b16 %v4898, %v4866
      %v5411 = vpack.c.b16 %v4899, %v4867
      %v5412 = vpack.c.b16 %v4900, %v4868
      %v5413 = vpack.c.b16 %v4901, %v4869
      %v5414 = vpack.c.b16 %v4902, %v4870
      %v5415 = vpack.c.b16 %v4903, %v4871
      %v5416 = vpack.c.b16 %v4904, %v4872
      %v5417 = vpack.c.b16 %v4905, %v4873
      %v5418 = vpack.c.b16 %v4906, %v4874
      %v5419 = vpack.c.b16 %v4907, %v4875
      %v5420 = vpack.c.b16 %v4908, %v4876
      %v5421 = vpack.c.b16 %v4909, %v4877
      %v5422 = vpack.c.b16 %v4910, %v4878
      %v5423 = vpack.c.b16 %v4911, %v4879
      %v5424 = vpack.c.b16 %v4912, %v4880
      %v5425 = vpack.c.b16 %v4913, %v4881
      %v5426 = vpack.c.b16 %v4914, %v4882
      %v5427 = vpack.c.b16 %v4915, %v4883
      %v5428 = vpack.c.b16 %v4916, %v4884
      %v5429 = vpack.c.b16 %v4917, %v4885
      %v5430 = vpack.c.b16 %v4918, %v4886
      %v5431 = vpack.c.b16 %v4919, %v4887
      %v5432 = vpack.c.b16 %v4920, %v4888
      %v5433 = vpack.c.b16 %v4921, %v4889
      %v5434 = vpack.c.b16 %v4922, %v4890
      %v5435 = vpack.c.b16 %v4923, %v4891
      %v5436 = vpack.c.b16 %v4924, %v4892
      %v5437 = vpack.c.b16 %v4925, %v4893
      %v5438 = vpack.c.b16 %v4926, %v4894
      %v5439 = vpack.c.b16 %v4927, %v4895
      %v5440 = vpack.c.b16 %v4928, %v4896
      %5953 = vmatprep.subr.bf16.mxu0 %v5154
      %5954 = vmatpush1.bf16.msra.mxu0 %v5153
      %5955 = vmatprep.subr.bf16.mxu0 %v5122
      %5956 = vmatpush1.bf16.msra.mxu0 %v5121
      %5957 = vmatprep.subr.bf16.mxu0 %v5090
      %5958 = vmatpush1.bf16.msra.mxu0 %v5089
      %5959 = vmatprep.subr.bf16.mxu0 %v5058
      %5960 = vmatpush1.bf16.msra.mxu0 %v5057
      %5961 = vmatprep.subr.bf16.mxu0 %v5026
      %5962 = vmatpush1.bf16.msra.mxu0 %v5025
      %5963 = vmatprep.subr.bf16.mxu0 %v4994
      %5964 = vmatpush1.bf16.msra.mxu0 %v4993
      %5965 = vmatprep.subr.bf16.mxu0 %v4962
      %5966 = vmatpush1.bf16.msra.mxu0 %v4961
      %5967 = vmatprep.subr.bf16.mxu0 %v4930
      %5968 = vmatpush1.bf16.msra.mxu0 %v4929
      %5969 = vmatprep.subr.bf16.mxu0 %v5410
      %5970 = vmatpush2.bf16.msra.mxu0 %v5409
      %5971 = vmatprep.subr.bf16.mxu0 %v5378
      %5972 = vmatpush2.bf16.msra.mxu0 %v5377
      %5973 = vmatprep.subr.bf16.mxu0 %v5346
      %5974 = vmatpush2.bf16.msra.mxu0 %v5345
      %5975 = vmatprep.subr.bf16.mxu0 %v5314
      %5976 = vmatpush2.bf16.msra.mxu0 %v5313
      %5977 = vmatprep.subr.bf16.mxu0 %v5282
      %5978 = vmatpush2.bf16.msra.mxu0 %v5281
      %5979 = vmatprep.subr.bf16.mxu0 %v5250
      %5980 = vmatpush2.bf16.msra.mxu0 %v5249
      %5981 = vmatprep.subr.bf16.mxu0 %v5218
      %5982 = vmatpush2.bf16.msra.mxu0 %v5217
      %5983 = vmatprep.subr.bf16.mxu0 %v5186
      %5984 = vmatpush2.bf16.msra.mxu0 %v5185
      %5985 = vmatprep.mubr.bf16.mxu0 %v3392
      %5986 = vmatmul.mubr.bf16.gmra.mxu0 %v3391
      %v5987 = vpop.f32.mrf.mxu0
      %v5988 = vadd.f32 0.0, %v5987
      %v5989 = vpop.f32.mrf.mxu0
      %v5990 = vadd.f32 0.0, %v5989
      %v5991 = vpop.f32.mrf.mxu0
      %v5992 = vpop.f32.mrf.mxu0
      %5993 = vdwg.mxu0
      %5994 = vmatprep.subr.bf16.mxu0 %v5156
      %5995 = vmatpush1.bf16.msra.mxu0 %v5155
      %5996 = vmatprep.subr.bf16.mxu0 %v5124
      %5997 = vmatpush1.bf16.msra.mxu0 %v5123
      %5998 = vmatprep.subr.bf16.mxu0 %v5092
      %5999 = vmatpush1.bf16.msra.mxu0 %v5091
      %6000 = vmatprep.subr.bf16.mxu0 %v5060
      %6001 = vmatpush1.bf16.msra.mxu0 %v5059
      %6002 = vmatprep.subr.bf16.mxu0 %v5028
      %6003 = vmatpush1.bf16.msra.mxu0 %v5027
      %6004 = vmatprep.subr.bf16.mxu0 %v4996
      %6005 = vmatpush1.bf16.msra.mxu0 %v4995
      %6006 = vmatprep.subr.bf16.mxu0 %v4964
      %6007 = vmatpush1.bf16.msra.mxu0 %v4963
      %6008 = vmatprep.subr.bf16.mxu0 %v4932
      %6009 = vmatpush1.bf16.msra.mxu0 %v4931
      %6010 = vmatprep.subr.bf16.mxu0 %v5412
      %6011 = vmatpush2.bf16.msra.mxu0 %v5411
      %6012 = vmatprep.subr.bf16.mxu0 %v5380
      %6013 = vmatpush2.bf16.msra.mxu0 %v5379
      %6014 = vmatprep.subr.bf16.mxu0 %v5348
      %6015 = vmatpush2.bf16.msra.mxu0 %v5347
      %6016 = vmatprep.subr.bf16.mxu0 %v5316
      %6017 = vmatpush2.bf16.msra.mxu0 %v5315
      %6018 = vmatprep.subr.bf16.mxu0 %v5284
      %6019 = vmatpush2.bf16.msra.mxu0 %v5283
      %6020 = vmatprep.subr.bf16.mxu0 %v5252
      %6021 = vmatpush2.bf16.msra.mxu0 %v5251
      %6022 = vmatprep.subr.bf16.mxu0 %v5220
      %6023 = vmatpush2.bf16.msra.mxu0 %v5219
      %6024 = vmatprep.subr.bf16.mxu0 %v5188
      %6025 = vmatpush2.bf16.msra.mxu0 %v5187
      %6026 = vmatprep.mubr.bf16.mxu0 %v3392
      %6027 = vmatmul.mubr.bf16.gmra.mxu0 %v3391
      %v6028 = vpop.f32.mrf.mxu0
      %v6029 = vadd.f32 0.0, %v6028
      %v6030 = vpop.f32.mrf.mxu0
      %v6031 = vadd.f32 0.0, %v6030
      %v6032 = vpop.f32.mrf.mxu0
      %v6033 = vpop.f32.mrf.mxu0
      %6034 = vdwg.mxu0
      %6035 = vmatprep.subr.bf16.mxu0 %v5158
      %6036 = vmatpush1.bf16.msra.mxu0 %v5157
      %6037 = vmatprep.subr.bf16.mxu0 %v5126
      %6038 = vmatpush1.bf16.msra.mxu0 %v5125
      %6039 = vmatprep.subr.bf16.mxu0 %v5094
      %6040 = vmatpush1.bf16.msra.mxu0 %v5093
      %6041 = vmatprep.subr.bf16.mxu0 %v5062
      %6042 = vmatpush1.bf16.msra.mxu0 %v5061
      %6043 = vmatprep.subr.bf16.mxu0 %v5030
      %6044 = vmatpush1.bf16.msra.mxu0 %v5029
      %6045 = vmatprep.subr.bf16.mxu0 %v4998
      %6046 = vmatpush1.bf16.msra.mxu0 %v4997
      %6047 = vmatprep.subr.bf16.mxu0 %v4966
      %6048 = vmatpush1.bf16.msra.mxu0 %v4965
      %6049 = vmatprep.subr.bf16.mxu0 %v4934
      %6050 = vmatpush1.bf16.msra.mxu0 %v4933
      %6051 = vmatprep.subr.bf16.mxu0 %v5414
      %6052 = vmatpush2.bf16.msra.mxu0 %v5413
      %6053 = vmatprep.subr.bf16.mxu0 %v5382
      %6054 = vmatpush2.bf16.msra.mxu0 %v5381
      %6055 = vmatprep.subr.bf16.mxu0 %v5350
      %6056 = vmatpush2.bf16.msra.mxu0 %v5349
      %6057 = vmatprep.subr.bf16.mxu0 %v5318
      %6058 = vmatpush2.bf16.msra.mxu0 %v5317
      %6059 = vmatprep.subr.bf16.mxu0 %v5286
      %6060 = vmatpush2.bf16.msra.mxu0 %v5285
      %6061 = vmatprep.subr.bf16.mxu0 %v5254
      %6062 = vmatpush2.bf16.msra.mxu0 %v5253
      %6063 = vmatprep.subr.bf16.mxu0 %v5222
      %6064 = vmatpush2.bf16.msra.mxu0 %v5221
      %6065 = vmatprep.subr.bf16.mxu0 %v5190
      %6066 = vmatpush2.bf16.msra.mxu0 %v5189
      %6067 = vmatprep.mubr.bf16.mxu0 %v3392
      %6068 = vmatmul.mubr.bf16.gmra.mxu0 %v3391
      %v6069 = vpop.f32.mrf.mxu0
      %v6070 = vadd.f32 0.0, %v6069
      %v6071 = vpop.f32.mrf.mxu0
      %v6072 = vadd.f32 0.0, %v6071
      %v6073 = vpop.f32.mrf.mxu0
      %v6074 = vpop.f32.mrf.mxu0
      %6075 = vdwg.mxu0
      %6076 = vmatprep.subr.bf16.mxu0 %v5160
      %6077 = vmatpush1.bf16.msra.mxu0 %v5159
      %6078 = vmatprep.subr.bf16.mxu0 %v5128
      %6079 = vmatpush1.bf16.msra.mxu0 %v5127
      %6080 = vmatprep.subr.bf16.mxu0 %v5096
      %6081 = vmatpush1.bf16.msra.mxu0 %v5095
      %6082 = vmatprep.subr.bf16.mxu0 %v5064
      %6083 = vmatpush1.bf16.msra.mxu0 %v5063
      %6084 = vmatprep.subr.bf16.mxu0 %v5032
      %6085 = vmatpush1.bf16.msra.mxu0 %v5031
      %6086 = vmatprep.subr.bf16.mxu0 %v5000
      %6087 = vmatpush1.bf16.msra.mxu0 %v4999
      %6088 = vmatprep.subr.bf16.mxu0 %v4968
      %6089 = vmatpush1.bf16.msra.mxu0 %v4967
      %6090 = vmatprep.subr.bf16.mxu0 %v4936
      %6091 = vmatpush1.bf16.msra.mxu0 %v4935
      %6092 = vmatprep.subr.bf16.mxu0 %v5416
      %6093 = vmatpush2.bf16.msra.mxu0 %v5415
      %6094 = vmatprep.subr.bf16.mxu0 %v5384
      %6095 = vmatpush2.bf16.msra.mxu0 %v5383
      %6096 = vmatprep.subr.bf16.mxu0 %v5352
      %6097 = vmatpush2.bf16.msra.mxu0 %v5351
      %6098 = vmatprep.subr.bf16.mxu0 %v5320
      %6099 = vmatpush2.bf16.msra.mxu0 %v5319
      %6100 = vmatprep.subr.bf16.mxu0 %v5288
      %6101 = vmatpush2.bf16.msra.mxu0 %v5287
      %6102 = vmatprep.subr.bf16.mxu0 %v5256
      %6103 = vmatpush2.bf16.msra.mxu0 %v5255
      %6104 = vmatprep.subr.bf16.mxu0 %v5224
      %6105 = vmatpush2.bf16.msra.mxu0 %v5223
      %6106 = vmatprep.subr.bf16.mxu0 %v5192
      %6107 = vmatpush2.bf16.msra.mxu0 %v5191
      %6108 = vmatprep.mubr.bf16.mxu0 %v3392
      %6109 = vmatmul.mubr.bf16.gmra.mxu0 %v3391
      %v6110 = vpop.f32.mrf.mxu0
      %v6111 = vadd.f32 0.0, %v6110
      %v6112 = vpop.f32.mrf.mxu0
      %v6113 = vadd.f32 0.0, %v6112
      %v6114 = vpop.f32.mrf.mxu0
      %v6115 = vpop.f32.mrf.mxu0
      %6116 = vdwg.mxu0
      %6117 = vmatprep.subr.bf16.mxu0 %v5162
      %6118 = vmatpush1.bf16.msra.mxu0 %v5161
      %6119 = vmatprep.subr.bf16.mxu0 %v5130
      %6120 = vmatpush1.bf16.msra.mxu0 %v5129
      %6121 = vmatprep.subr.bf16.mxu0 %v5098
      %6122 = vmatpush1.bf16.msra.mxu0 %v5097
      %6123 = vmatprep.subr.bf16.mxu0 %v5066
      %6124 = vmatpush1.bf16.msra.mxu0 %v5065
      %6125 = vmatprep.subr.bf16.mxu0 %v5034
      %6126 = vmatpush1.bf16.msra.mxu0 %v5033
      %6127 = vmatprep.subr.bf16.mxu0 %v5002
      %6128 = vmatpush1.bf16.msra.mxu0 %v5001
      %6129 = vmatprep.subr.bf16.mxu0 %v4970
      %6130 = vmatpush1.bf16.msra.mxu0 %v4969
      %6131 = vmatprep.subr.bf16.mxu0 %v4938
      %6132 = vmatpush1.bf16.msra.mxu0 %v4937
      %6133 = vmatprep.subr.bf16.mxu0 %v5418
      %6134 = vmatpush2.bf16.msra.mxu0 %v5417
      %6135 = vmatprep.subr.bf16.mxu0 %v5386
      %6136 = vmatpush2.bf16.msra.mxu0 %v5385
      %6137 = vmatprep.subr.bf16.mxu0 %v5354
      %6138 = vmatpush2.bf16.msra.mxu0 %v5353
      %6139 = vmatprep.subr.bf16.mxu0 %v5322
      %6140 = vmatpush2.bf16.msra.mxu0 %v5321
      %6141 = vmatprep.subr.bf16.mxu0 %v5290
      %6142 = vmatpush2.bf16.msra.mxu0 %v5289
      %6143 = vmatprep.subr.bf16.mxu0 %v5258
      %6144 = vmatpush2.bf16.msra.mxu0 %v5257
      %6145 = vmatprep.subr.bf16.mxu0 %v5226
      %6146 = vmatpush2.bf16.msra.mxu0 %v5225
      %6147 = vmatprep.subr.bf16.mxu0 %v5194
      %6148 = vmatpush2.bf16.msra.mxu0 %v5193
      %6149 = vmatprep.mubr.bf16.mxu0 %v3392
      %6150 = vmatmul.mubr.bf16.gmra.mxu0 %v3391
      %v6151 = vpop.f32.mrf.mxu0
      %v6152 = vadd.f32 0.0, %v6151
      %v6153 = vpop.f32.mrf.mxu0
      %v6154 = vadd.f32 0.0, %v6153
      %v6155 = vpop.f32.mrf.mxu0
      %v6156 = vpop.f32.mrf.mxu0
      %6157 = vdwg.mxu0
      %6158 = vmatprep.subr.bf16.mxu0 %v5164
      %6159 = vmatpush1.bf16.msra.mxu0 %v5163
      %6160 = vmatprep.subr.bf16.mxu0 %v5132
      %6161 = vmatpush1.bf16.msra.mxu0 %v5131
      %6162 = vmatprep.subr.bf16.mxu0 %v5100
      %6163 = vmatpush1.bf16.msra.mxu0 %v5099
      %6164 = vmatprep.subr.bf16.mxu0 %v5068
      %6165 = vmatpush1.bf16.msra.mxu0 %v5067
      %6166 = vmatprep.subr.bf16.mxu0 %v5036
      %6167 = vmatpush1.bf16.msra.mxu0 %v5035
      %6168 = vmatprep.subr.bf16.mxu0 %v5004
      %6169 = vmatpush1.bf16.msra.mxu0 %v5003
      %6170 = vmatprep.subr.bf16.mxu0 %v4972
      %6171 = vmatpush1.bf16.msra.mxu0 %v4971
      %6172 = vmatprep.subr.bf16.mxu0 %v4940
      %6173 = vmatpush1.bf16.msra.mxu0 %v4939
      %6174 = vmatprep.subr.bf16.mxu0 %v5420
      %6175 = vmatpush2.bf16.msra.mxu0 %v5419
      %6176 = vmatprep.subr.bf16.mxu0 %v5388
      %6177 = vmatpush2.bf16.msra.mxu0 %v5387
      %6178 = vmatprep.subr.bf16.mxu0 %v5356
      %6179 = vmatpush2.bf16.msra.mxu0 %v5355
      %6180 = vmatprep.subr.bf16.mxu0 %v5324
      %6181 = vmatpush2.bf16.msra.mxu0 %v5323
      %6182 = vmatprep.subr.bf16.mxu0 %v5292
      %6183 = vmatpush2.bf16.msra.mxu0 %v5291
      %6184 = vmatprep.subr.bf16.mxu0 %v5260
      %6185 = vmatpush2.bf16.msra.mxu0 %v5259
      %6186 = vmatprep.subr.bf16.mxu0 %v5228
      %6187 = vmatpush2.bf16.msra.mxu0 %v5227
      %6188 = vmatprep.subr.bf16.mxu0 %v5196
      %6189 = vmatpush2.bf16.msra.mxu0 %v5195
      %6190 = vmatprep.mubr.bf16.mxu0 %v3392
      %6191 = vmatmul.mubr.bf16.gmra.mxu0 %v3391
      %v6192 = vpop.f32.mrf.mxu0
      %v6193 = vadd.f32 0.0, %v6192
      %v6194 = vpop.f32.mrf.mxu0
      %v6195 = vadd.f32 0.0, %v6194
      %v6196 = vpop.f32.mrf.mxu0
      %v6197 = vpop.f32.mrf.mxu0
      %6198 = vdwg.mxu0
      %6199 = vmatprep.subr.bf16.mxu0 %v5166
      %6200 = vmatpush1.bf16.msra.mxu0 %v5165
      %6201 = vmatprep.subr.bf16.mxu0 %v5134
      %6202 = vmatpush1.bf16.msra.mxu0 %v5133
      %6203 = vmatprep.subr.bf16.mxu0 %v5102
      %6204 = vmatpush1.bf16.msra.mxu0 %v5101
      %6205 = vmatprep.subr.bf16.mxu0 %v5070
      %6206 = vmatpush1.bf16.msra.mxu0 %v5069
      %6207 = vmatprep.subr.bf16.mxu0 %v5038
      %6208 = vmatpush1.bf16.msra.mxu0 %v5037
      %6209 = vmatprep.subr.bf16.mxu0 %v5006
      %6210 = vmatpush1.bf16.msra.mxu0 %v5005
      %6211 = vmatprep.subr.bf16.mxu0 %v4974
      %6212 = vmatpush1.bf16.msra.mxu0 %v4973
      %6213 = vmatprep.subr.bf16.mxu0 %v4942
      %6214 = vmatpush1.bf16.msra.mxu0 %v4941
      %6215 = vmatprep.subr.bf16.mxu0 %v5422
      %6216 = vmatpush2.bf16.msra.mxu0 %v5421
      %6217 = vmatprep.subr.bf16.mxu0 %v5390
      %6218 = vmatpush2.bf16.msra.mxu0 %v5389
      %6219 = vmatprep.subr.bf16.mxu0 %v5358
      %6220 = vmatpush2.bf16.msra.mxu0 %v5357
      %6221 = vmatprep.subr.bf16.mxu0 %v5326
      %6222 = vmatpush2.bf16.msra.mxu0 %v5325
      %6223 = vmatprep.subr.bf16.mxu0 %v5294
      %6224 = vmatpush2.bf16.msra.mxu0 %v5293
      %6225 = vmatprep.subr.bf16.mxu0 %v5262
      %6226 = vmatpush2.bf16.msra.mxu0 %v5261
      %6227 = vmatprep.subr.bf16.mxu0 %v5230
      %6228 = vmatpush2.bf16.msra.mxu0 %v5229
      %6229 = vmatprep.subr.bf16.mxu0 %v5198
      %6230 = vmatpush2.bf16.msra.mxu0 %v5197
      %6231 = vmatprep.mubr.bf16.mxu0 %v3392
      %6232 = vmatmul.mubr.bf16.gmra.mxu0 %v3391
      %v6233 = vpop.f32.mrf.mxu0
      %v6234 = vadd.f32 0.0, %v6233
      %v6235 = vpop.f32.mrf.mxu0
      %v6236 = vadd.f32 0.0, %v6235
      %v6237 = vpop.f32.mrf.mxu0
      %v6238 = vpop.f32.mrf.mxu0
      %6239 = vdwg.mxu0
      %6240 = vmatprep.subr.bf16.mxu0 %v5168
      %6241 = vmatpush1.bf16.msra.mxu0 %v5167
      %6242 = vmatprep.subr.bf16.mxu0 %v5136
      %6243 = vmatpush1.bf16.msra.mxu0 %v5135
      %6244 = vmatprep.subr.bf16.mxu0 %v5104
      %6245 = vmatpush1.bf16.msra.mxu0 %v5103
      %6246 = vmatprep.subr.bf16.mxu0 %v5072
      %6247 = vmatpush1.bf16.msra.mxu0 %v5071
      %6248 = vmatprep.subr.bf16.mxu0 %v5040
      %6249 = vmatpush1.bf16.msra.mxu0 %v5039
      %6250 = vmatprep.subr.bf16.mxu0 %v5008
      %6251 = vmatpush1.bf16.msra.mxu0 %v5007
      %6252 = vmatprep.subr.bf16.mxu0 %v4976
      %6253 = vmatpush1.bf16.msra.mxu0 %v4975
      %6254 = vmatprep.subr.bf16.mxu0 %v4944
      %6255 = vmatpush1.bf16.msra.mxu0 %v4943
      %6256 = vmatprep.subr.bf16.mxu0 %v5424
      %6257 = vmatpush2.bf16.msra.mxu0 %v5423
      %6258 = vmatprep.subr.bf16.mxu0 %v5392
      %6259 = vmatpush2.bf16.msra.mxu0 %v5391
      %6260 = vmatprep.subr.bf16.mxu0 %v5360
      %6261 = vmatpush2.bf16.msra.mxu0 %v5359
      %6262 = vmatprep.subr.bf16.mxu0 %v5328
      %6263 = vmatpush2.bf16.msra.mxu0 %v5327
      %6264 = vmatprep.subr.bf16.mxu0 %v5296
      %6265 = vmatpush2.bf16.msra.mxu0 %v5295
      %6266 = vmatprep.subr.bf16.mxu0 %v5264
      %6267 = vmatpush2.bf16.msra.mxu0 %v5263
      %6268 = vmatprep.subr.bf16.mxu0 %v5232
      %6269 = vmatpush2.bf16.msra.mxu0 %v5231
      %6270 = vmatprep.subr.bf16.mxu0 %v5200
      %6271 = vmatpush2.bf16.msra.mxu0 %v5199
      %6272 = vmatprep.mubr.bf16.mxu0 %v3392
      %6273 = vmatmul.mubr.bf16.gmra.mxu0 %v3391
      %v6274 = vpop.f32.mrf.mxu0
      %v6275 = vadd.f32 0.0, %v6274
      %v6276 = vpop.f32.mrf.mxu0
      %v6277 = vadd.f32 0.0, %v6276
      %v6278 = vpop.f32.mrf.mxu0
      %v6279 = vpop.f32.mrf.mxu0
      %6280 = vdwg.mxu0
      %6281 = vmatprep.subr.bf16.mxu0 %v5170
      %6282 = vmatpush1.bf16.msra.mxu0 %v5169
      %6283 = vmatprep.subr.bf16.mxu0 %v5138
      %6284 = vmatpush1.bf16.msra.mxu0 %v5137
      %6285 = vmatprep.subr.bf16.mxu0 %v5106
      %6286 = vmatpush1.bf16.msra.mxu0 %v5105
      %6287 = vmatprep.subr.bf16.mxu0 %v5074
      %6288 = vmatpush1.bf16.msra.mxu0 %v5073
      %6289 = vmatprep.subr.bf16.mxu0 %v5042
      %6290 = vmatpush1.bf16.msra.mxu0 %v5041
      %6291 = vmatprep.subr.bf16.mxu0 %v5010
      %6292 = vmatpush1.bf16.msra.mxu0 %v5009
      %6293 = vmatprep.subr.bf16.mxu0 %v4978
      %6294 = vmatpush1.bf16.msra.mxu0 %v4977
      %6295 = vmatprep.subr.bf16.mxu0 %v4946
      %6296 = vmatpush1.bf16.msra.mxu0 %v4945
      %6297 = vmatprep.subr.bf16.mxu0 %v5426
      %6298 = vmatpush2.bf16.msra.mxu0 %v5425
      %6299 = vmatprep.subr.bf16.mxu0 %v5394
      %6300 = vmatpush2.bf16.msra.mxu0 %v5393
      %6301 = vmatprep.subr.bf16.mxu0 %v5362
      %6302 = vmatpush2.bf16.msra.mxu0 %v5361
      %6303 = vmatprep.subr.bf16.mxu0 %v5330
      %6304 = vmatpush2.bf16.msra.mxu0 %v5329
      %6305 = vmatprep.subr.bf16.mxu0 %v5298
      %6306 = vmatpush2.bf16.msra.mxu0 %v5297
      %6307 = vmatprep.subr.bf16.mxu0 %v5266
      %6308 = vmatpush2.bf16.msra.mxu0 %v5265
      %6309 = vmatprep.subr.bf16.mxu0 %v5234
      %6310 = vmatpush2.bf16.msra.mxu0 %v5233
      %6311 = vmatprep.subr.bf16.mxu0 %v5202
      %6312 = vmatpush2.bf16.msra.mxu0 %v5201
      %6313 = vmatprep.mubr.bf16.mxu0 %v3392
      %6314 = vmatmul.mubr.bf16.gmra.mxu0 %v3391
      %v6315 = vpop.f32.mrf.mxu0
      %v6316 = vadd.f32 0.0, %v6315
      %v6317 = vpop.f32.mrf.mxu0
      %v6318 = vadd.f32 0.0, %v6317
      %v6319 = vpop.f32.mrf.mxu0
      %v6320 = vpop.f32.mrf.mxu0
      %6321 = vdwg.mxu0
      %6322 = vmatprep.subr.bf16.mxu0 %v5172
      %6323 = vmatpush1.bf16.msra.mxu0 %v5171
      %6324 = vmatprep.subr.bf16.mxu0 %v5140
      %6325 = vmatpush1.bf16.msra.mxu0 %v5139
      %6326 = vmatprep.subr.bf16.mxu0 %v5108
      %6327 = vmatpush1.bf16.msra.mxu0 %v5107
      %6328 = vmatprep.subr.bf16.mxu0 %v5076
      %6329 = vmatpush1.bf16.msra.mxu0 %v5075
      %6330 = vmatprep.subr.bf16.mxu0 %v5044
      %6331 = vmatpush1.bf16.msra.mxu0 %v5043
      %6332 = vmatprep.subr.bf16.mxu0 %v5012
      %6333 = vmatpush1.bf16.msra.mxu0 %v5011
      %6334 = vmatprep.subr.bf16.mxu0 %v4980
      %6335 = vmatpush1.bf16.msra.mxu0 %v4979
      %6336 = vmatprep.subr.bf16.mxu0 %v4948
      %6337 = vmatpush1.bf16.msra.mxu0 %v4947
      %6338 = vmatprep.subr.bf16.mxu0 %v5428
      %6339 = vmatpush2.bf16.msra.mxu0 %v5427
      %6340 = vmatprep.subr.bf16.mxu0 %v5396
      %6341 = vmatpush2.bf16.msra.mxu0 %v5395
      %6342 = vmatprep.subr.bf16.mxu0 %v5364
      %6343 = vmatpush2.bf16.msra.mxu0 %v5363
      %6344 = vmatprep.subr.bf16.mxu0 %v5332
      %6345 = vmatpush2.bf16.msra.mxu0 %v5331
      %6346 = vmatprep.subr.bf16.mxu0 %v5300
      %6347 = vmatpush2.bf16.msra.mxu0 %v5299
      %6348 = vmatprep.subr.bf16.mxu0 %v5268
      %6349 = vmatpush2.bf16.msra.mxu0 %v5267
      %6350 = vmatprep.subr.bf16.mxu0 %v5236
      %6351 = vmatpush2.bf16.msra.mxu0 %v5235
      %6352 = vmatprep.subr.bf16.mxu0 %v5204
      %6353 = vmatpush2.bf16.msra.mxu0 %v5203
      %6354 = vmatprep.mubr.bf16.mxu0 %v3392
      %6355 = vmatmul.mubr.bf16.gmra.mxu0 %v3391
      %v6356 = vpop.f32.mrf.mxu0
      %v6357 = vadd.f32 0.0, %v6356
      %v6358 = vpop.f32.mrf.mxu0
      %v6359 = vadd.f32 0.0, %v6358
      %v6360 = vpop.f32.mrf.mxu0
      %v6361 = vpop.f32.mrf.mxu0
      %6362 = vdwg.mxu0
      %6363 = vmatprep.subr.bf16.mxu0 %v5174
      %6364 = vmatpush1.bf16.msra.mxu0 %v5173
      %6365 = vmatprep.subr.bf16.mxu0 %v5142
      %6366 = vmatpush1.bf16.msra.mxu0 %v5141
      %6367 = vmatprep.subr.bf16.mxu0 %v5110
      %6368 = vmatpush1.bf16.msra.mxu0 %v5109
      %6369 = vmatprep.subr.bf16.mxu0 %v5078
      %6370 = vmatpush1.bf16.msra.mxu0 %v5077
      %6371 = vmatprep.subr.bf16.mxu0 %v5046
      %6372 = vmatpush1.bf16.msra.mxu0 %v5045
      %6373 = vmatprep.subr.bf16.mxu0 %v5014
      %6374 = vmatpush1.bf16.msra.mxu0 %v5013
      %6375 = vmatprep.subr.bf16.mxu0 %v4982
      %6376 = vmatpush1.bf16.msra.mxu0 %v4981
      %6377 = vmatprep.subr.bf16.mxu0 %v4950
      %6378 = vmatpush1.bf16.msra.mxu0 %v4949
      %6379 = vmatprep.subr.bf16.mxu0 %v5430
      %6380 = vmatpush2.bf16.msra.mxu0 %v5429
      %6381 = vmatprep.subr.bf16.mxu0 %v5398
      %6382 = vmatpush2.bf16.msra.mxu0 %v5397
      %6383 = vmatprep.subr.bf16.mxu0 %v5366
      %6384 = vmatpush2.bf16.msra.mxu0 %v5365
      %6385 = vmatprep.subr.bf16.mxu0 %v5334
      %6386 = vmatpush2.bf16.msra.mxu0 %v5333
      %6387 = vmatprep.subr.bf16.mxu0 %v5302
      %6388 = vmatpush2.bf16.msra.mxu0 %v5301
      %6389 = vmatprep.subr.bf16.mxu0 %v5270
      %6390 = vmatpush2.bf16.msra.mxu0 %v5269
      %6391 = vmatprep.subr.bf16.mxu0 %v5238
      %6392 = vmatpush2.bf16.msra.mxu0 %v5237
      %6393 = vmatprep.subr.bf16.mxu0 %v5206
      %6394 = vmatpush2.bf16.msra.mxu0 %v5205
      %6395 = vmatprep.mubr.bf16.mxu0 %v3392
      %6396 = vmatmul.mubr.bf16.gmra.mxu0 %v3391
      %v6397 = vpop.f32.mrf.mxu0
      %v6398 = vadd.f32 0.0, %v6397
      %v6399 = vpop.f32.mrf.mxu0
      %v6400 = vadd.f32 0.0, %v6399
      %v6401 = vpop.f32.mrf.mxu0
      %v6402 = vpop.f32.mrf.mxu0
      %6403 = vdwg.mxu0
      %6404 = vmatprep.subr.bf16.mxu0 %v5176
      %6405 = vmatpush1.bf16.msra.mxu0 %v5175
      %6406 = vmatprep.subr.bf16.mxu0 %v5144
      %6407 = vmatpush1.bf16.msra.mxu0 %v5143
      %6408 = vmatprep.subr.bf16.mxu0 %v5112
      %6409 = vmatpush1.bf16.msra.mxu0 %v5111
      %6410 = vmatprep.subr.bf16.mxu0 %v5080
      %6411 = vmatpush1.bf16.msra.mxu0 %v5079
      %6412 = vmatprep.subr.bf16.mxu0 %v5048
      %6413 = vmatpush1.bf16.msra.mxu0 %v5047
      %6414 = vmatprep.subr.bf16.mxu0 %v5016
      %6415 = vmatpush1.bf16.msra.mxu0 %v5015
      %6416 = vmatprep.subr.bf16.mxu0 %v4984
      %6417 = vmatpush1.bf16.msra.mxu0 %v4983
      %6418 = vmatprep.subr.bf16.mxu0 %v4952
      %6419 = vmatpush1.bf16.msra.mxu0 %v4951
      %6420 = vmatprep.subr.bf16.mxu0 %v5432
      %6421 = vmatpush2.bf16.msra.mxu0 %v5431
      %6422 = vmatprep.subr.bf16.mxu0 %v5400
      %6423 = vmatpush2.bf16.msra.mxu0 %v5399
      %6424 = vmatprep.subr.bf16.mxu0 %v5368
      %6425 = vmatpush2.bf16.msra.mxu0 %v5367
      %6426 = vmatprep.subr.bf16.mxu0 %v5336
      %6427 = vmatpush2.bf16.msra.mxu0 %v5335
      %6428 = vmatprep.subr.bf16.mxu0 %v5304
      %6429 = vmatpush2.bf16.msra.mxu0 %v5303
      %6430 = vmatprep.subr.bf16.mxu0 %v5272
      %6431 = vmatpush2.bf16.msra.mxu0 %v5271
      %6432 = vmatprep.subr.bf16.mxu0 %v5240
      %6433 = vmatpush2.bf16.msra.mxu0 %v5239
      %6434 = vmatprep.subr.bf16.mxu0 %v5208
      %6435 = vmatpush2.bf16.msra.mxu0 %v5207
      %6436 = vmatprep.mubr.bf16.mxu0 %v3392
      %6437 = vmatmul.mubr.bf16.gmra.mxu0 %v3391
      %v6438 = vpop.f32.mrf.mxu0
      %v6439 = vadd.f32 0.0, %v6438
      %v6440 = vpop.f32.mrf.mxu0
      %v6441 = vadd.f32 0.0, %v6440
      %v6442 = vpop.f32.mrf.mxu0
      %v6443 = vpop.f32.mrf.mxu0
      %6444 = vdwg.mxu0
      %6445 = vmatprep.subr.bf16.mxu0 %v5178
      %6446 = vmatpush1.bf16.msra.mxu0 %v5177
      %6447 = vmatprep.subr.bf16.mxu0 %v5146
      %6448 = vmatpush1.bf16.msra.mxu0 %v5145
      %6449 = vmatprep.subr.bf16.mxu0 %v5114
      %6450 = vmatpush1.bf16.msra.mxu0 %v5113
      %6451 = vmatprep.subr.bf16.mxu0 %v5082
      %6452 = vmatpush1.bf16.msra.mxu0 %v5081
      %6453 = vmatprep.subr.bf16.mxu0 %v5050
      %6454 = vmatpush1.bf16.msra.mxu0 %v5049
      %6455 = vmatprep.subr.bf16.mxu0 %v5018
      %6456 = vmatpush1.bf16.msra.mxu0 %v5017
      %6457 = vmatprep.subr.bf16.mxu0 %v4986
      %6458 = vmatpush1.bf16.msra.mxu0 %v4985
      %6459 = vmatprep.subr.bf16.mxu0 %v4954
      %6460 = vmatpush1.bf16.msra.mxu0 %v4953
      %6461 = vmatprep.subr.bf16.mxu0 %v5434
      %6462 = vmatpush2.bf16.msra.mxu0 %v5433
      %6463 = vmatprep.subr.bf16.mxu0 %v5402
      %6464 = vmatpush2.bf16.msra.mxu0 %v5401
      %6465 = vmatprep.subr.bf16.mxu0 %v5370
      %6466 = vmatpush2.bf16.msra.mxu0 %v5369
      %6467 = vmatprep.subr.bf16.mxu0 %v5338
      %6468 = vmatpush2.bf16.msra.mxu0 %v5337
      %6469 = vmatprep.subr.bf16.mxu0 %v5306
      %6470 = vmatpush2.bf16.msra.mxu0 %v5305
      %6471 = vmatprep.subr.bf16.mxu0 %v5274
      %6472 = vmatpush2.bf16.msra.mxu0 %v5273
      %6473 = vmatprep.subr.bf16.mxu0 %v5242
      %6474 = vmatpush2.bf16.msra.mxu0 %v5241
      %6475 = vmatprep.subr.bf16.mxu0 %v5210
      %6476 = vmatpush2.bf16.msra.mxu0 %v5209
      %6477 = vmatprep.mubr.bf16.mxu0 %v3392
      %6478 = vmatmul.mubr.bf16.gmra.mxu0 %v3391
      %v6479 = vpop.f32.mrf.mxu0
      %v6480 = vadd.f32 0.0, %v6479
      %v6481 = vpop.f32.mrf.mxu0
      %v6482 = vadd.f32 0.0, %v6481
      %v6483 = vpop.f32.mrf.mxu0
      %v6484 = vpop.f32.mrf.mxu0
      %6485 = vdwg.mxu0
      %6486 = vmatprep.subr.bf16.mxu0 %v5180
      %6487 = vmatpush1.bf16.msra.mxu0 %v5179
      %6488 = vmatprep.subr.bf16.mxu0 %v5148
      %6489 = vmatpush1.bf16.msra.mxu0 %v5147
      %6490 = vmatprep.subr.bf16.mxu0 %v5116
      %6491 = vmatpush1.bf16.msra.mxu0 %v5115
      %6492 = vmatprep.subr.bf16.mxu0 %v5084
      %6493 = vmatpush1.bf16.msra.mxu0 %v5083
      %6494 = vmatprep.subr.bf16.mxu0 %v5052
      %6495 = vmatpush1.bf16.msra.mxu0 %v5051
      %6496 = vmatprep.subr.bf16.mxu0 %v5020
      %6497 = vmatpush1.bf16.msra.mxu0 %v5019
      %6498 = vmatprep.subr.bf16.mxu0 %v4988
      %6499 = vmatpush1.bf16.msra.mxu0 %v4987
      %6500 = vmatprep.subr.bf16.mxu0 %v4956
      %6501 = vmatpush1.bf16.msra.mxu0 %v4955
      %6502 = vmatprep.subr.bf16.mxu0 %v5436
      %6503 = vmatpush2.bf16.msra.mxu0 %v5435
      %6504 = vmatprep.subr.bf16.mxu0 %v5404
      %6505 = vmatpush2.bf16.msra.mxu0 %v5403
      %6506 = vmatprep.subr.bf16.mxu0 %v5372
      %6507 = vmatpush2.bf16.msra.mxu0 %v5371
      %6508 = vmatprep.subr.bf16.mxu0 %v5340
      %6509 = vmatpush2.bf16.msra.mxu0 %v5339
      %6510 = vmatprep.subr.bf16.mxu0 %v5308
      %6511 = vmatpush2.bf16.msra.mxu0 %v5307
      %6512 = vmatprep.subr.bf16.mxu0 %v5276
      %6513 = vmatpush2.bf16.msra.mxu0 %v5275
      %6514 = vmatprep.subr.bf16.mxu0 %v5244
      %6515 = vmatpush2.bf16.msra.mxu0 %v5243
      %6516 = vmatprep.subr.bf16.mxu0 %v5212
      %6517 = vmatpush2.bf16.msra.mxu0 %v5211
      %6518 = vmatprep.mubr.bf16.mxu0 %v3392
      %6519 = vmatmul.mubr.bf16.gmra.mxu0 %v3391
      %v6520 = vpop.f32.mrf.mxu0
      %v6521 = vadd.f32 0.0, %v6520
      %v6522 = vpop.f32.mrf.mxu0
      %v6523 = vadd.f32 0.0, %v6522
      %v6524 = vpop.f32.mrf.mxu0
      %v6525 = vpop.f32.mrf.mxu0
      %6526 = vdwg.mxu0
      %6527 = vmatprep.subr.bf16.mxu0 %v5182
      %6528 = vmatpush1.bf16.msra.mxu0 %v5181
      %6529 = vmatprep.subr.bf16.mxu0 %v5150
      %6530 = vmatpush1.bf16.msra.mxu0 %v5149
      %6531 = vmatprep.subr.bf16.mxu0 %v5118
      %6532 = vmatpush1.bf16.msra.mxu0 %v5117
      %6533 = vmatprep.subr.bf16.mxu0 %v5086
      %6534 = vmatpush1.bf16.msra.mxu0 %v5085
      %6535 = vmatprep.subr.bf16.mxu0 %v5054
      %6536 = vmatpush1.bf16.msra.mxu0 %v5053
      %6537 = vmatprep.subr.bf16.mxu0 %v5022
      %6538 = vmatpush1.bf16.msra.mxu0 %v5021
      %6539 = vmatprep.subr.bf16.mxu0 %v4990
      %6540 = vmatpush1.bf16.msra.mxu0 %v4989
      %6541 = vmatprep.subr.bf16.mxu0 %v4958
      %6542 = vmatpush1.bf16.msra.mxu0 %v4957
      %6543 = vmatprep.subr.bf16.mxu0 %v5438
      %6544 = vmatpush2.bf16.msra.mxu0 %v5437
      %6545 = vmatprep.subr.bf16.mxu0 %v5406
      %6546 = vmatpush2.bf16.msra.mxu0 %v5405
      %6547 = vmatprep.subr.bf16.mxu0 %v5374
      %6548 = vmatpush2.bf16.msra.mxu0 %v5373
      %6549 = vmatprep.subr.bf16.mxu0 %v5342
      %6550 = vmatpush2.bf16.msra.mxu0 %v5341
      %6551 = vmatprep.subr.bf16.mxu0 %v5310
      %6552 = vmatpush2.bf16.msra.mxu0 %v5309
      %6553 = vmatprep.subr.bf16.mxu0 %v5278
      %6554 = vmatpush2.bf16.msra.mxu0 %v5277
      %6555 = vmatprep.subr.bf16.mxu0 %v5246
      %6556 = vmatpush2.bf16.msra.mxu0 %v5245
      %6557 = vmatprep.subr.bf16.mxu0 %v5214
      %6558 = vmatpush2.bf16.msra.mxu0 %v5213
      %6559 = vmatprep.mubr.bf16.mxu0 %v3392
      %6560 = vmatmul.mubr.bf16.gmra.mxu0 %v3391
      %v6561 = vpop.f32.mrf.mxu0
      %v6562 = vadd.f32 0.0, %v6561
      %v6563 = vpop.f32.mrf.mxu0
      %v6564 = vadd.f32 0.0, %v6563
      %v6565 = vpop.f32.mrf.mxu0
      %v6566 = vpop.f32.mrf.mxu0
      %6567 = vdwg.mxu0
      %6568 = vmatprep.subr.bf16.mxu0 %v5184
      %6569 = vmatpush1.bf16.msra.mxu0 %v5183
      %6570 = vmatprep.subr.bf16.mxu0 %v5152
      %6571 = vmatpush1.bf16.msra.mxu0 %v5151
      %6572 = vmatprep.subr.bf16.mxu0 %v5120
      %6573 = vmatpush1.bf16.msra.mxu0 %v5119
      %6574 = vmatprep.subr.bf16.mxu0 %v5088
      %6575 = vmatpush1.bf16.msra.mxu0 %v5087
      %6576 = vmatprep.subr.bf16.mxu0 %v5056
      %6577 = vmatpush1.bf16.msra.mxu0 %v5055
      %6578 = vmatprep.subr.bf16.mxu0 %v5024
      %6579 = vmatpush1.bf16.msra.mxu0 %v5023
      %6580 = vmatprep.subr.bf16.mxu0 %v4992
      %6581 = vmatpush1.bf16.msra.mxu0 %v4991
      %6582 = vmatprep.subr.bf16.mxu0 %v4960
      %6583 = vmatpush1.bf16.msra.mxu0 %v4959
      %6584 = vmatprep.subr.bf16.mxu0 %v5440
      %6585 = vmatpush2.bf16.msra.mxu0 %v5439
      %6586 = vmatprep.subr.bf16.mxu0 %v5408
      %6587 = vmatpush2.bf16.msra.mxu0 %v5407
      %6588 = vmatprep.subr.bf16.mxu0 %v5376
      %6589 = vmatpush2.bf16.msra.mxu0 %v5375
      %6590 = vmatprep.subr.bf16.mxu0 %v5344
      %6591 = vmatpush2.bf16.msra.mxu0 %v5343
      %6592 = vmatprep.subr.bf16.mxu0 %v5312
      %6593 = vmatpush2.bf16.msra.mxu0 %v5311
      %6594 = vmatprep.subr.bf16.mxu0 %v5280
      %6595 = vmatpush2.bf16.msra.mxu0 %v5279
      %6596 = vmatprep.subr.bf16.mxu0 %v5248
      %6597 = vmatpush2.bf16.msra.mxu0 %v5247
      %6598 = vmatprep.subr.bf16.mxu0 %v5216
      %6599 = vmatpush2.bf16.msra.mxu0 %v5215
      %6600 = vmatprep.mubr.bf16.mxu0 %v3392
      %6601 = vmatmul.mubr.bf16.gmra.mxu0 %v3391
      %v6602 = vpop.f32.mrf.mxu0
      %v6603 = vadd.f32 0.0, %v6602
      %v6604 = vpop.f32.mrf.mxu0
      %v6605 = vadd.f32 0.0, %v6604
      %v6606 = vpop.f32.mrf.mxu0
      %v6607 = vpop.f32.mrf.mxu0
      %6608 = vdwg.mxu0
      %6609 = vst [vmem:[%s736] sm:$0xff] %v5988
      %6610 = vst [vmem:[%s736 + $0x8] sm:$0xff] %v5990
      %6611 = vst [vmem:[%s736 + $0x10] sm:$0xff] %v6029
      %6612 = vst [vmem:[%s736 + $0x18] sm:$0xff] %v6031
      %6613 = vst [vmem:[%s736 + $0x20] sm:$0xff] %v6070
      %6614 = vst [vmem:[%s736 + $0x28] sm:$0xff] %v6072
      %6615 = vst [vmem:[%s736 + $0x30] sm:$0xff] %v6111
      %6616 = vst [vmem:[%s736 + $0x38] sm:$0xff] %v6113
      %6617 = vst [vmem:[%s736 + $0x40] sm:$0xff] %v6152
      %6618 = vst [vmem:[%s736 + $0x48] sm:$0xff] %v6154
      %6619 = vst [vmem:[%s736 + $0x50] sm:$0xff] %v6193
      %6620 = vst [vmem:[%s736 + $0x58] sm:$0xff] %v6195
      %6621 = vst [vmem:[%s736 + $0x60] sm:$0xff] %v6234
      %6622 = vst [vmem:[%s736 + $0x68] sm:$0xff] %v6236
      %6623 = vst [vmem:[%s736 + $0x70] sm:$0xff] %v6275
      %6624 = vst [vmem:[%s736 + $0x78] sm:$0xff] %v6277
      %6625 = vst [vmem:[%s736 + $0x80] sm:$0xff] %v6316
      %6626 = vst [vmem:[%s736 + $0x88] sm:$0xff] %v6318
      %6627 = vst [vmem:[%s736 + $0x90] sm:$0xff] %v6357
      %6628 = vst [vmem:[%s736 + $0x98] sm:$0xff] %v6359
      %6629 = vst [vmem:[%s736 + $0xa0] sm:$0xff] %v6398
      %6630 = vst [vmem:[%s736 + $0xa8] sm:$0xff] %v6400
      %6631 = vst [vmem:[%s736 + $0xb0] sm:$0xff] %v6439
      %6632 = vst [vmem:[%s736 + $0xb8] sm:$0xff] %v6441
      %6633 = vst [vmem:[%s736 + $0xc0] sm:$0xff] %v6480
      %6634 = vst [vmem:[%s736 + $0xc8] sm:$0xff] %v6482
      %6635 = vst [vmem:[%s736 + $0xd0] sm:$0xff] %v6521
      %6636 = vst [vmem:[%s736 + $0xd8] sm:$0xff] %v6523
      %6637 = vst [vmem:[%s736 + $0xe0] sm:$0xff] %v6562
      %6638 = vst [vmem:[%s736 + $0xe8] sm:$0xff] %v6564
      %6639 = vst [vmem:[%s736 + $0xf0] sm:$0xff] %v6603
      %6640 = vst [vmem:[%s736 + $0xf8] sm:$0xff] %v6605
      %p6641 = scmp.lt.s32.totalorder %s32, 1
      %s6642 = scalar_select %p6641, %s32, 1
      %s6643 = smul.addr %s6642, 32
      %s6644 = smul.addr %s6643, 8
      %s6645 = scalar_lea.vmem %s21, %s6644
      // Predicated region
      $region105: #{dfa_decoder_forward.1} parent=103 // pred_check
        %p6646 = pneg %p516
      $region106: #{dfa_decoder_forward.1} parent=103 // pred_check_branch
        %6648 = sbr.rel (%p6646) target = $region108
      $region107: #{dfa_decoder_forward.1} parent=103 // pred_region
        _
      $region108: #{dfa_decoder_forward.1} parent=103 // pred_fallthru
        _
    $region104: #{dfa_decoder_forward.1} parent=5 // pred_fallthru
      _
    %p6649 = scmp.le.s32.totalorder 2, %s27
    // Predicated region
    $region109: #{dfa_decoder_forward.1} parent=5 // pred_check
      %p6650 = pneg %p6649
    $region110: #{dfa_decoder_forward.1} parent=5 // pred_check_branch
      %6652 = sbr.rel (%p6650) target = $region112
    $region111: #{dfa_decoder_forward.1} parent=5 // pred_region
      %s6653 = ssub.s32 %s27, 2
      // Predicated region
      $region113: #{dfa_decoder_forward.1} parent=111 // pred_check
        %p6654 = pneg %p522
      $region114: #{dfa_decoder_forward.1} parent=111 // pred_check_branch
        %6656 = sbr.rel (%p6654) target = $region116
      $region115: #{dfa_decoder_forward.1} parent=111 // pred_region
        %p6657 = scmp.lt.s32.totalorder %s33, 1
        %s6658 = scalar_select %p6657, %s33, 1
        %s6659 = smul.addr %s6658, 32
        %s6660 = smul.addr %s6659, 8
        %s6661 = scalar_lea.vmem %s21, %s6660
      $region116: #{dfa_decoder_forward.1} parent=111 // pred_fallthru
        _
    $region112: #{dfa_decoder_forward.1} parent=5 // pred_fallthru
      _
  $region6: #{dfa_decoder_forward.1} parent=0 // loop_footer
    %s31 = sadd.s32 1, %s27
  $region7: #{dfa_decoder_forward.1} parent=0 // loop_footer_branch
    %26 = sbr.rel target = $region3
  $region8: #{dfa_decoder_forward.1} parent=0 // loop_exit
    _

</llo_original>
